<compile_context>
chip_gen: v7x
topology: tpu7x:2x2x1
jax: 0.10.0
libtpu: 0.0.40
codegen_flags: <defaults>
</compile_context>

<pallas_src>
import functools
import math

import jax
import jax.numpy as jnp
from jax.experimental import pallas as pl
from jax.experimental.pallas import tpu as pltpu

# ---- tiny synthetic BERT config (bert-base structure, scaled down) ----
VOCAB = 64
MAX_POS = 16
TYPE_VOCAB = 2
HIDDEN = 128
N_HEADS = 4
HEAD_DIM = HIDDEN // N_HEADS
INTERMEDIATE = 256
N_LAYERS = 2
LN_EPS = 1e-12
HEAD_SIZES = (7, 7, 5, 5, 5)      # experience, activity, audience, time, season
N_OUT = sum(HEAD_SIZES)           # 29
N_OUT_PAD = 128                   # lane-aligned classifier output width


# --------------------------------------------------------------- helpers ----
def _full_spec(shape):
    """BlockSpec covering the whole array, constant over the grid."""
    nd = len(shape)
    return pl.BlockSpec(shape, lambda *_, _nd=nd: (0,) * _nd)


def _layer_spec(shape):
    """Per-layer slice of a weight stacked as (N_LAYERS, a, b)."""
    return pl.BlockSpec((1,) + tuple(shape[1:]), lambda l: (l, 0, 0))


def _ln(x, g, b, eps):
    """LayerNorm over the last axis, all math in f32."""
    mu = jnp.mean(x, axis=-1, keepdims=True)
    var = jnp.mean(jnp.square(x - mu), axis=-1, keepdims=True)
    return (x - mu) * jax.lax.rsqrt(var + eps) * g + b


# ---------------------------------------------------------------- kernel ----
def _bert_fused_kernel(x_emb_ref, mask_ref, emb_g_ref, emb_b_ref,
                       wqkv_ref, bqkv_ref, wo_ref, bo_ref,
                       ln1g_ref, ln1b_ref, w1_ref, b1_ref,
                       w2_ref, b2_ref, ln2g_ref, ln2b_ref,
                       pw_ref, pb_ref, hw_ref, hb_ref,
                       out_ref, x_sc,
                       *, batch, seq, n_heads, head_dim, eps):
    l = pl.program_id(0)
    hidden = n_heads * head_dim

    # Layer 0: embedding LayerNorm (no residual) into the resident bf16 scratch.
    @pl.when(l == 0)
    def _():
        x0 = x_emb_ref[...].astype(jnp.float32)
        x_sc[...] = _ln(x0, emb_g_ref[...], emb_b_ref[...], eps).astype(jnp.bfloat16)

    x_bf = x_sc[...]                                  # (B*S, H) bf16, resident
    x = x_bf.astype(jnp.float32)                      # f32 copy for residual/LN

    # ---- fused QKV projection: one bf16 MXU matmul, N = 3*H lane-dense.
    #      (1/sqrt(head_dim) is already folded into the Q columns of w_qkv.)
    qkv = jnp.dot(x_bf, wqkv_ref[0],
                  preferred_element_type=jnp.float32) + bqkv_ref[0]
    qkv_bf = qkv.astype(jnp.bfloat16)                 # bf16 operands for MXU
    # Lane-aligned 128-wide slices (offsets 0 / H / 2H), hoisted out of loops.
    q_all = qkv_bf[:, 0:hidden]
    k_all = qkv_bf[:, hidden:2 * hidden]
    v_all = qkv_bf[:, 2 * hidden:3 * hidden]

    # ---- attention, fully in VMEM; context assembled once, then a single
    #      (B*S,128)@(128,128) output-projection matmul.
    ctx_rows = []
    for b in range(batch):                            # toy sizes: full unroll
        r0 = b * seq
        bias_b = mask_ref[b:b + 1, :]                 # (1, S) additive mask bias
        q_b = q_all[r0:r0 + seq, :]
        k_b = k_all[r0:r0 + seq, :]
        v_b = v_all[r0:r0 + seq, :]
        ctx_heads = []
        for h in range(n_heads):
            c0 = h * head_dim
            qb = q_b[:, c0:c0 + head_dim]             # (S, D) bf16
            kb = k_b[:, c0:c0 + head_dim]
            vb = v_b[:, c0:c0 + head_dim]
            # bf16 MXU matmul, f32 accumulation; softmax math stays f32 so the
            # -10000 mask bias remains exact.
            s = jnp.einsum('qd,kd->qk', qb, kb,
                           preferred_element_type=jnp.float32)
            s = s + bias_b
            m = jnp.max(s, axis=-1, keepdims=True)
            p = jnp.exp(s - m)
            p = p * pl.reciprocal(jnp.sum(p, axis=-1, keepdims=True), approx=True)
            ctx = jnp.dot(p.astype(jnp.bfloat16), vb,
                          preferred_element_type=jnp.float32)        # (S, D)
            ctx_heads.append(ctx)
        ctx_rows.append(jnp.concatenate(ctx_heads, axis=-1))          # (S, H)
    ctx_all = jnp.concatenate(ctx_rows, axis=0).astype(jnp.bfloat16)  # (B*S, H)
    attn = jnp.dot(ctx_all, wo_ref[0],
                   preferred_element_type=jnp.float32) + bo_ref[0]

    # ---- residual + LayerNorm epilogue ----
    x = _ln(attn + x, ln1g_ref[0], ln1b_ref[0], eps)

    # ---- FFN: w1 + bias + GELU fused, then w2 + residual + LayerNorm ----
    h1 = jnp.dot(x.astype(jnp.bfloat16), w1_ref[0],
                 preferred_element_type=jnp.float32) + b1_ref[0]
    h1 = jax.nn.gelu(h1, approximate=True)
    # TODO(synk): HF BERT uses exact erf-GELU; tanh approximation used here.
    ffn = jnp.dot(h1.astype(jnp.bfloat16), w2_ref[0],
                  preferred_element_type=jnp.float32) + b2_ref[0]
    x = _ln(ffn + x, ln2g_ref[0], ln2b_ref[0], eps)

    x_sc[...] = x.astype(jnp.bfloat16)                # carry to next layer

    # Last layer: fused BERT pooler (CLS -> Linear -> tanh) + all 5 classifier
    # heads as one padded (H, 128) matmul; single lane-dense store.
    @pl.when(l == pl.num_programs(0) - 1)
    def _():
        cls = jnp.concatenate(
            [x[b * seq:b * seq + 1, :] for b in range(batch)], axis=0)   # (B, H)
        pooled = jnp.dot(cls.astype(jnp.bfloat16), pw_ref[...],
                         preferred_element_type=jnp.float32) + pb_ref[...]
        pooled = jnp.tanh(pooled)
        logits = jnp.dot(pooled.astype(jnp.bfloat16), hw_ref[...],
                         preferred_element_type=jnp.float32) + hb_ref[...]
        out_ref[...] = logits


# ------------------------------------------------------------- parameters ----
def init_params(key):
    def nrm(k, shape, dtype=jnp.float32):
        return (jax.random.normal(k, shape, jnp.float32) * 0.02).astype(dtype)

    ks = jax.random.split(key, 10)

    # Fold 1/sqrt(head_dim) into the Q third of w_qkv (and its bias) offline.
    scale = 1.0 / math.sqrt(HEAD_DIM)
    w_qkv = nrm(ks[3], (N_LAYERS, HIDDEN, 3 * HIDDEN), jnp.float32)
    w_qkv = w_qkv.at[:, :, :HIDDEN].multiply(scale).astype(jnp.bfloat16)
    b_qkv = jnp.zeros((N_LAYERS, 1, 3 * HIDDEN), jnp.float32)
    b_qkv = b_qkv.at[:, :, :HIDDEN].multiply(scale)   # no-op (zeros), kept for clarity

    head_w = nrm(ks[8], (HIDDEN, N_OUT))
    head_w = jnp.pad(head_w, ((0, 0), (0, N_OUT_PAD - N_OUT))).astype(jnp.bfloat16)

    return {
        'word_emb': nrm(ks[0], (VOCAB, HIDDEN)),
        'pos_emb':  nrm(ks[1], (MAX_POS, HIDDEN)),
        'type_emb': nrm(ks[2], (TYPE_VOCAB, HIDDEN)),
        'emb_ln_g': jnp.ones((1, HIDDEN), jnp.float32),
        'emb_ln_b': jnp.zeros((1, HIDDEN), jnp.float32),
        # per-layer weights stacked on a leading layer axis, bf16 matmul inputs
        'w_qkv': w_qkv,
        'b_qkv': b_qkv,
        'w_o':   nrm(ks[4], (N_LAYERS, HIDDEN, HIDDEN), jnp.bfloat16),
        'b_o':   jnp.zeros((N_LAYERS, 1, HIDDEN), jnp.float32),
        'ln1_g': jnp.ones((N_LAYERS, 1, HIDDEN), jnp.float32),
        'ln1_b': jnp.zeros((N_LAYERS, 1, HIDDEN), jnp.float32),
        'w1':    nrm(ks[5], (N_LAYERS, HIDDEN, INTERMEDIATE), jnp.bfloat16),
        'b1':    jnp.zeros((N_LAYERS, 1, INTERMEDIATE), jnp.float32),
        'w2':    nrm(ks[6], (N_LAYERS, INTERMEDIATE, HIDDEN), jnp.bfloat16),
        'b2':    jnp.zeros((N_LAYERS, 1, HIDDEN), jnp.float32),
        'ln2_g': jnp.ones((N_LAYERS, 1, HIDDEN), jnp.float32),
        'ln2_b': jnp.zeros((N_LAYERS, 1, HIDDEN), jnp.float32),
        'pool_w': nrm(ks[7], (HIDDEN, HIDDEN), jnp.bfloat16),
        'pool_b': jnp.zeros((1, HIDDEN), jnp.float32),
        'head_w': head_w,                              # (H, 128) zero-padded
        'head_b': jnp.zeros((1, N_OUT_PAD), jnp.float32),
    }


# ----------------------------------------------------------- pallas wrapper -
def bert_encoder_pooler(params, x_emb, mask_bias):
    """Single fused pallas_call: encoder layers + pooler + classifier heads."""
    BS, H = x_emb.shape
    B, S = mask_bias.shape
    L = N_LAYERS

    kernel = functools.partial(_bert_fused_kernel, batch=B, seq=S,
                               n_heads=N_HEADS, head_dim=HEAD_DIM, eps=LN_EPS)

    layer_args = (params['w_qkv'], params['b_qkv'], params['w_o'], params['b_o'],
                  params['ln1_g'], params['ln1_b'], params['w1'], params['b1'],
                  params['w2'], params['b2'], params['ln2_g'], params['ln2_b'])
    tail_args = (params['pool_w'], params['pool_b'],
                 params['head_w'], params['head_b'])
    inputs = ((x_emb, mask_bias, params['emb_ln_g'], params['emb_ln_b'])
              + layer_args + tail_args)

    in_specs = ([_full_spec(x_emb.shape), _full_spec(mask_bias.shape),
                 _full_spec((1, H)), _full_spec((1, H))] +
                [_layer_spec(a.shape) for a in layer_args] +
                [_full_spec(a.shape) for a in tail_args])

    flops = (2 * L * BS * H * (4 * H + 2 * INTERMEDIATE)
             + 4 * L * B * N_HEADS * S * S * HEAD_DIM
             + 2 * B * H * (H + N_OUT_PAD))
    transcendentals = (L * (B * N_HEADS * S * S + BS * INTERMEDIATE + 2 * BS)
                       + B * H)
    bytes_accessed = (sum(int(a.size) * a.dtype.itemsize for a in inputs)
                      + B * N_OUT_PAD * 4)

    return pl.pallas_call(
        kernel,
        grid=(L,),                                    # sequential over layers
        in_specs=in_specs,
        out_specs=pl.BlockSpec((B, N_OUT_PAD), lambda l: (0, 0)),
        out_shape=jax.ShapeDtypeStruct((B, N_OUT_PAD), jnp.float32),  # logits
        scratch_shapes=[pltpu.VMEM((BS, H), jnp.bfloat16)],   # resident acts
        compiler_params=pltpu.CompilerParams(dimension_semantics=("arbitrary",)),
        cost_estimate=pl.CostEstimate(flops=flops,
                                      transcendentals=transcendentals,
                                      bytes_accessed=bytes_accessed),
    )(*inputs)


# ----------------------------------------------------------------- forward ---
@jax.jit
def bert_classifier_forward(params, input_ids, attention_mask):
    B, S = input_ids.shape
    assert S <= MAX_POS, "sequence length exceeds max position embeddings"

    # Embedding gathers (word + position + token-type) stay in XLA; the
    # embedding LayerNorm is fused into layer 0 of the encoder kernel.
    # token_type_ids default to zeros (matches HF when they are not passed).
    emb = (params['word_emb'][input_ids]
           + params['pos_emb'][:S][None, :, :]
           + params['type_emb'][0][None, None, :])
    x_emb = emb.reshape(B * S, HIDDEN).astype(jnp.bfloat16)

    # Additive attention-mask bias computed once per forward: (B, S) f32.
    mask_bias = (1.0 - attention_mask.astype(jnp.float32)) * -10000.0

    logits_all = bert_encoder_pooler(params, x_emb, mask_bias)  # (B, 128) f32

    outs, off = [], 0
    for sz in HEAD_SIZES:
        outs.append(logits_all[:, off:off + sz])
        off += sz
    # (logits_experience, logits_activity, logits_audience, logits_time, logits_season)
    return tuple(outs)


# -------------------------------------------------------------------- main ---
if __name__ == "__main__":
    key = jax.random.PRNGKey(0)
    pkey, ikey = jax.random.split(key)
    params = init_params(pkey)

    B, S = 2, 8
    input_ids = jax.random.randint(ikey, (B, S), 0, VOCAB, dtype=jnp.int32)
    attention_mask = jnp.array([[1, 1, 1, 1, 1, 1, 1, 1],
                                [1, 1, 1, 1, 1, 1, 0, 0]], dtype=jnp.int32)

    outs = jax.block_until_ready(
        bert_classifier_forward(params, input_ids, attention_mask))

    expected = [(B, 7), (B, 7), (B, 5), (B, 5), (B, 5)]
    assert [tuple(o.shape) for o in outs] == expected, [o.shape for o in outs]
    assert all(bool(jnp.all(jnp.isfinite(o))) for o in outs)
    print("KERNEL_OK")
</pallas_src>

<mosaic_0001>
module attributes {stable_mosaic.version = 11 : i64} {
  func.func @_bert_fused_kernel(%arg0: i32, %arg1: memref<16x128xbf16, #tpu.memory_space<vmem>>, %arg2: memref<2x8xf32, #tpu.memory_space<vmem>>, %arg3: memref<1x128xf32, #tpu.memory_space<vmem>>, %arg4: memref<1x128xf32, #tpu.memory_space<vmem>>, %arg5: memref<1x128x384xbf16, #tpu.memory_space<vmem>>, %arg6: memref<1x1x384xf32, #tpu.memory_space<vmem>>, %arg7: memref<1x128x128xbf16, #tpu.memory_space<vmem>>, %arg8: memref<1x1x128xf32, #tpu.memory_space<vmem>>, %arg9: memref<1x1x128xf32, #tpu.memory_space<vmem>>, %arg10: memref<1x1x128xf32, #tpu.memory_space<vmem>>, %arg11: memref<1x128x256xbf16, #tpu.memory_space<vmem>>, %arg12: memref<1x1x256xf32, #tpu.memory_space<vmem>>, %arg13: memref<1x256x128xbf16, #tpu.memory_space<vmem>>, %arg14: memref<1x1x128xf32, #tpu.memory_space<vmem>>, %arg15: memref<1x1x128xf32, #tpu.memory_space<vmem>>, %arg16: memref<1x1x128xf32, #tpu.memory_space<vmem>>, %arg17: memref<128x128xbf16, #tpu.memory_space<vmem>>, %arg18: memref<1x128xf32, #tpu.memory_space<vmem>>, %arg19: memref<128x128xbf16, #tpu.memory_space<vmem>>, %arg20: memref<1x128xf32, #tpu.memory_space<vmem>>, %arg21: memref<2x128xf32, #tpu.memory_space<vmem>>, %arg22: memref<16x128xbf16, #tpu.memory_space<vmem>>) attributes {dimension_semantics = [#tpu.dimension_semantics<arbitrary>], iteration_bounds = array<i64: 2>, scalar_prefetch = 0 : i64, scratch_operands = 1 : i64, tpu.core_type = #tpu.core_type<tc>, window_params = [{pipeline_mode = #tpu.pipeline_mode<synchronous>, transform_indices = @transform_0, window_bounds = array<i64: 16, 128>}, {pipeline_mode = #tpu.pipeline_mode<synchronous>, transform_indices = @transform_1, window_bounds = array<i64: 2, 8>}, {pipeline_mode = #tpu.pipeline_mode<synchronous>, transform_indices = @transform_2, window_bounds = array<i64: 1, 128>}, {pipeline_mode = #tpu.pipeline_mode<synchronous>, transform_indices = @transform_3, window_bounds = array<i64: 1, 128>}, {transform_indices = @transform_4, window_bounds = array<i64: 1, 128, 384>}, {transform_indices = @transform_5, window_bounds = array<i64: 1, 1, 384>}, {transform_indices = @transform_6, window_bounds = array<i64: 1, 128, 128>}, {transform_indices = @transform_7, window_bounds = array<i64: 1, 1, 128>}, {transform_indices = @transform_8, window_bounds = array<i64: 1, 1, 128>}, {transform_indices = @transform_9, window_bounds = array<i64: 1, 1, 128>}, {transform_indices = @transform_10, window_bounds = array<i64: 1, 128, 256>}, {transform_indices = @transform_11, window_bounds = array<i64: 1, 1, 256>}, {transform_indices = @transform_12, window_bounds = array<i64: 1, 256, 128>}, {transform_indices = @transform_13, window_bounds = array<i64: 1, 1, 128>}, {transform_indices = @transform_14, window_bounds = array<i64: 1, 1, 128>}, {transform_indices = @transform_15, window_bounds = array<i64: 1, 1, 128>}, {pipeline_mode = #tpu.pipeline_mode<synchronous>, transform_indices = @transform_16, window_bounds = array<i64: 128, 128>}, {pipeline_mode = #tpu.pipeline_mode<synchronous>, transform_indices = @transform_17, window_bounds = array<i64: 1, 128>}, {pipeline_mode = #tpu.pipeline_mode<synchronous>, transform_indices = @transform_18, window_bounds = array<i64: 128, 128>}, {pipeline_mode = #tpu.pipeline_mode<synchronous>, transform_indices = @transform_19, window_bounds = array<i64: 1, 128>}, {pipeline_mode = #tpu.pipeline_mode<synchronous>, transform_indices = @transform_20, window_bounds = array<i64: 2, 128>}]} {
    %c0_i32 = arith.constant 0 : i32
    %0 = arith.cmpi eq, %arg0, %c0_i32 : i32
    %1 = arith.extui %0 : i1 to i32
    %c0_i32_0 = arith.constant 0 : i32
    %2 = arith.cmpi ne, %1, %c0_i32_0 : i32
    scf.if %2 {
      %c0_93 = arith.constant 0 : index
      %c0_94 = arith.constant 0 : index
      %267 = vector.load %arg1[%c0_93, %c0_94] : memref<16x128xbf16, #tpu.memory_space<vmem>>, vector<16x128xbf16>
      %268 = arith.extf %267 : vector<16x128xbf16> to vector<16x128xf32>
      %c0_95 = arith.constant 0 : index
      %c0_96 = arith.constant 0 : index
      %269 = vector.load %arg3[%c0_95, %c0_96] : memref<1x128xf32, #tpu.memory_space<vmem>>, vector<1x128xf32>
      %c0_97 = arith.constant 0 : index
      %c0_98 = arith.constant 0 : index
      %270 = vector.load %arg4[%c0_97, %c0_98] : memref<1x128xf32, #tpu.memory_space<vmem>>, vector<1x128xf32>
      %cst_99 = arith.constant dense<0.000000e+00> : vector<16xf32>
      %271 = vector.multi_reduction <add>, %268, %cst_99 [1] : vector<16x128xf32> to vector<16xf32>
      %272 = vector.shape_cast %271 : vector<16xf32> to vector<16x1xf32>
      %cst_100 = arith.constant 1.280000e+02 : f32
      %273 = vector.broadcast %cst_100 : f32 to vector<16x1xf32>
      %274 = arith.divf %272, %273 : vector<16x1xf32>
      %275 = vector.broadcast %274 : vector<16x1xf32> to vector<16x128xf32>
      %276 = arith.subf %268, %275 : vector<16x128xf32>
      %277 = arith.mulf %276, %276 : vector<16x128xf32>
      %cst_101 = arith.constant dense<0.000000e+00> : vector<16xf32>
      %278 = vector.multi_reduction <add>, %277, %cst_101 [1] : vector<16x128xf32> to vector<16xf32>
      %279 = vector.shape_cast %278 : vector<16xf32> to vector<16x1xf32>
      %cst_102 = arith.constant 1.280000e+02 : f32
      %280 = vector.broadcast %cst_102 : f32 to vector<16x1xf32>
      %281 = arith.divf %279, %280 : vector<16x1xf32>
      %282 = vector.broadcast %274 : vector<16x1xf32> to vector<16x128xf32>
      %283 = arith.subf %268, %282 : vector<16x128xf32>
      %cst_103 = arith.constant 9.99999996E-13 : f32
      %284 = vector.broadcast %cst_103 : f32 to vector<16x1xf32>
      %285 = arith.addf %281, %284 : vector<16x1xf32>
      %286 = math.rsqrt %285 : vector<16x1xf32>
      %287 = vector.broadcast %286 : vector<16x1xf32> to vector<16x128xf32>
      %288 = arith.mulf %283, %287 : vector<16x128xf32>
      %289 = vector.broadcast %269 : vector<1x128xf32> to vector<16x128xf32>
      %290 = arith.mulf %288, %289 : vector<16x128xf32>
      %291 = vector.broadcast %270 : vector<1x128xf32> to vector<16x128xf32>
      %292 = arith.addf %290, %291 : vector<16x128xf32>
      %293 = arith.truncf %292 : vector<16x128xf32> to vector<16x128xbf16>
      %c0_104 = arith.constant 0 : index
      %c0_105 = arith.constant 0 : index
      %294 = vector.load %arg22[%c0_104, %c0_105] : memref<16x128xbf16, #tpu.memory_space<vmem>>, vector<16x128xbf16>
      tpu.vector_store %arg22[%c0_104, %c0_105], %293 {strides = array<i32>} : memref<16x128xbf16, #tpu.memory_space<vmem>>, vector<16x128xbf16>,
    } else {
    }
    %c0 = arith.constant 0 : index
    %c0_1 = arith.constant 0 : index
    %3 = vector.load %arg22[%c0, %c0_1] : memref<16x128xbf16, #tpu.memory_space<vmem>>, vector<16x128xbf16>
    %4 = arith.extf %3 : vector<16x128xbf16> to vector<16x128xf32>
    %c0_2 = arith.constant 0 : index
    %c0_3 = arith.constant 0 : index
    %c0_4 = arith.constant 0 : index
    %5 = vector.load %arg5[%c0_2, %c0_3, %c0_4] : memref<1x128x384xbf16, #tpu.memory_space<vmem>>, vector<1x128x384xbf16>
    %6 = vector.shape_cast %5 : vector<1x128x384xbf16> to vector<128x384xbf16>
    %cst = arith.constant dense<0.000000e+00> : vector<16x384xf32>
    %7 = tpu.matmul %3, %6, %cst {dimension_numbers = #tpu.dot_dimension_numbers<[1], [0], [0], [1], [0, 0, 1, 1], [], []>} : vector<16x128xbf16>, vector<128x384xbf16>, vector<16x384xf32> -> vector<16x384xf32>
    %c0_5 = arith.constant 0 : index
    %c0_6 = arith.constant 0 : index
    %c0_7 = arith.constant 0 : index
    %8 = vector.load %arg6[%c0_5, %c0_6, %c0_7] : memref<1x1x384xf32, #tpu.memory_space<vmem>>, vector<1x1x384xf32>
    %9 = vector.shape_cast %8 : vector<1x1x384xf32> to vector<1x384xf32>
    %10 = vector.broadcast %9 : vector<1x384xf32> to vector<16x384xf32>
    %11 = arith.addf %7, %10 : vector<16x384xf32>
    %12 = arith.truncf %11 : vector<16x384xf32> to vector<16x384xbf16>
    %13 = vector.extract_strided_slice %12 {offsets = [0, 0], sizes = [16, 128], strides = [1, 1]} : vector<16x384xbf16> to vector<16x128xbf16>
    %14 = vector.extract_strided_slice %12 {offsets = [0, 128], sizes = [16, 128], strides = [1, 1]} : vector<16x384xbf16> to vector<16x128xbf16>
    %15 = vector.extract_strided_slice %12 {offsets = [0, 256], sizes = [16, 128], strides = [1, 1]} : vector<16x384xbf16> to vector<16x128xbf16>
    %c0_8 = arith.constant 0 : index
    %c0_9 = arith.constant 0 : index
    %16 = vector.load %arg2[%c0_8, %c0_9] : memref<2x8xf32, #tpu.memory_space<vmem>>, vector<1x8xf32>
    %17 = vector.extract_strided_slice %13 {offsets = [0, 0], sizes = [8, 128], strides = [1, 1]} : vector<16x128xbf16> to vector<8x128xbf16>
    %18 = vector.extract_strided_slice %14 {offsets = [0, 0], sizes = [8, 128], strides = [1, 1]} : vector<16x128xbf16> to vector<8x128xbf16>
    %19 = vector.extract_strided_slice %15 {offsets = [0, 0], sizes = [8, 128], strides = [1, 1]} : vector<16x128xbf16> to vector<8x128xbf16>
    %20 = vector.extract_strided_slice %17 {offsets = [0, 0], sizes = [8, 32], strides = [1, 1]} : vector<8x128xbf16> to vector<8x32xbf16>
    %21 = vector.extract_strided_slice %18 {offsets = [0, 0], sizes = [8, 32], strides = [1, 1]} : vector<8x128xbf16> to vector<8x32xbf16>
    %22 = vector.extract_strided_slice %19 {offsets = [0, 0], sizes = [8, 32], strides = [1, 1]} : vector<8x128xbf16> to vector<8x32xbf16>
    "tpu.trace_start"() <{level = 10 : i32, message = "qd,kd->qk"}> : () -> ()
    %cst_10 = arith.constant dense<0.000000e+00> : vector<8x8xf32>
    %23 = tpu.matmul %20, %21, %cst_10 {dimension_numbers = #tpu.dot_dimension_numbers<[1], [1], [0], [0], [0, 0, 1, 0], [], []>} : vector<8x32xbf16>, vector<8x32xbf16>, vector<8x8xf32> -> vector<8x8xf32>
    "tpu.trace_stop"() : () -> ()
    %24 = vector.broadcast %16 : vector<1x8xf32> to vector<8x8xf32>
    %25 = arith.addf %23, %24 : vector<8x8xf32>
    %cst_11 = arith.constant dense<0xFF800000> : vector<8xf32>
    %26 = vector.multi_reduction <maximumf>, %25, %cst_11 [1] : vector<8x8xf32> to vector<8xf32>
    %27 = vector.shape_cast %26 : vector<8xf32> to vector<8x1xf32>
    %28 = vector.broadcast %27 : vector<8x1xf32> to vector<8x8xf32>
    %29 = arith.subf %25, %28 : vector<8x8xf32>
    %30 = math.exp %29 : vector<8x8xf32>
    %cst_12 = arith.constant dense<0.000000e+00> : vector<8xf32>
    %31 = vector.multi_reduction <add>, %30, %cst_12 [1] : vector<8x8xf32> to vector<8xf32>
    %32 = vector.shape_cast %31 : vector<8xf32> to vector<8x1xf32>
    %33 = tpu.reciprocal %32 {approx = true} : vector<8x1xf32> -> vector<8x1xf32>
    %34 = vector.broadcast %33 : vector<8x1xf32> to vector<8x8xf32>
    %35 = arith.mulf %30, %34 : vector<8x8xf32>
    %36 = arith.truncf %35 : vector<8x8xf32> to vector<8x8xbf16>
    %cst_13 = arith.constant dense<0.000000e+00> : vector<8x32xf32>
    %37 = tpu.matmul %36, %22, %cst_13 {dimension_numbers = #tpu.dot_dimension_numbers<[1], [0], [0], [1], [0, 0, 1, 1], [], []>} : vector<8x8xbf16>, vector<8x32xbf16>, vector<8x32xf32> -> vector<8x32xf32>
    %38 = vector.extract_strided_slice %17 {offsets = [0, 32], sizes = [8, 32], strides = [1, 1]} : vector<8x128xbf16> to vector<8x32xbf16>
    %39 = vector.extract_strided_slice %18 {offsets = [0, 32], sizes = [8, 32], strides = [1, 1]} : vector<8x128xbf16> to vector<8x32xbf16>
    %40 = vector.extract_strided_slice %19 {offsets = [0, 32], sizes = [8, 32], strides = [1, 1]} : vector<8x128xbf16> to vector<8x32xbf16>
    "tpu.trace_start"() <{level = 10 : i32, message = "qd,kd->qk"}> : () -> ()
    %cst_14 = arith.constant dense<0.000000e+00> : vector<8x8xf32>
    %41 = tpu.matmul %38, %39, %cst_14 {dimension_numbers = #tpu.dot_dimension_numbers<[1], [1], [0], [0], [0, 0, 1, 0], [], []>} : vector<8x32xbf16>, vector<8x32xbf16>, vector<8x8xf32> -> vector<8x8xf32>
    "tpu.trace_stop"() : () -> ()
    %42 = vector.broadcast %16 : vector<1x8xf32> to vector<8x8xf32>
    %43 = arith.addf %41, %42 : vector<8x8xf32>
    %cst_15 = arith.constant dense<0xFF800000> : vector<8xf32>
    %44 = vector.multi_reduction <maximumf>, %43, %cst_15 [1] : vector<8x8xf32> to vector<8xf32>
    %45 = vector.shape_cast %44 : vector<8xf32> to vector<8x1xf32>
    %46 = vector.broadcast %45 : vector<8x1xf32> to vector<8x8xf32>
    %47 = arith.subf %43, %46 : vector<8x8xf32>
    %48 = math.exp %47 : vector<8x8xf32>
    %cst_16 = arith.constant dense<0.000000e+00> : vector<8xf32>
    %49 = vector.multi_reduction <add>, %48, %cst_16 [1] : vector<8x8xf32> to vector<8xf32>
    %50 = vector.shape_cast %49 : vector<8xf32> to vector<8x1xf32>
    %51 = tpu.reciprocal %50 {approx = true} : vector<8x1xf32> -> vector<8x1xf32>
    %52 = vector.broadcast %51 : vector<8x1xf32> to vector<8x8xf32>
    %53 = arith.mulf %48, %52 : vector<8x8xf32>
    %54 = arith.truncf %53 : vector<8x8xf32> to vector<8x8xbf16>
    %cst_17 = arith.constant dense<0.000000e+00> : vector<8x32xf32>
    %55 = tpu.matmul %54, %40, %cst_17 {dimension_numbers = #tpu.dot_dimension_numbers<[1], [0], [0], [1], [0, 0, 1, 1], [], []>} : vector<8x8xbf16>, vector<8x32xbf16>, vector<8x32xf32> -> vector<8x32xf32>
    %56 = vector.extract_strided_slice %17 {offsets = [0, 64], sizes = [8, 32], strides = [1, 1]} : vector<8x128xbf16> to vector<8x32xbf16>
    %57 = vector.extract_strided_slice %18 {offsets = [0, 64], sizes = [8, 32], strides = [1, 1]} : vector<8x128xbf16> to vector<8x32xbf16>
    %58 = vector.extract_strided_slice %19 {offsets = [0, 64], sizes = [8, 32], strides = [1, 1]} : vector<8x128xbf16> to vector<8x32xbf16>
    "tpu.trace_start"() <{level = 10 : i32, message = "qd,kd->qk"}> : () -> ()
    %cst_18 = arith.constant dense<0.000000e+00> : vector<8x8xf32>
    %59 = tpu.matmul %56, %57, %cst_18 {dimension_numbers = #tpu.dot_dimension_numbers<[1], [1], [0], [0], [0, 0, 1, 0], [], []>} : vector<8x32xbf16>, vector<8x32xbf16>, vector<8x8xf32> -> vector<8x8xf32>
    "tpu.trace_stop"() : () -> ()
    %60 = vector.broadcast %16 : vector<1x8xf32> to vector<8x8xf32>
    %61 = arith.addf %59, %60 : vector<8x8xf32>
    %cst_19 = arith.constant dense<0xFF800000> : vector<8xf32>
    %62 = vector.multi_reduction <maximumf>, %61, %cst_19 [1] : vector<8x8xf32> to vector<8xf32>
    %63 = vector.shape_cast %62 : vector<8xf32> to vector<8x1xf32>
    %64 = vector.broadcast %63 : vector<8x1xf32> to vector<8x8xf32>
    %65 = arith.subf %61, %64 : vector<8x8xf32>
    %66 = math.exp %65 : vector<8x8xf32>
    %cst_20 = arith.constant dense<0.000000e+00> : vector<8xf32>
    %67 = vector.multi_reduction <add>, %66, %cst_20 [1] : vector<8x8xf32> to vector<8xf32>
    %68 = vector.shape_cast %67 : vector<8xf32> to vector<8x1xf32>
    %69 = tpu.reciprocal %68 {approx = true} : vector<8x1xf32> -> vector<8x1xf32>
    %70 = vector.broadcast %69 : vector<8x1xf32> to vector<8x8xf32>
    %71 = arith.mulf %66, %70 : vector<8x8xf32>
    %72 = arith.truncf %71 : vector<8x8xf32> to vector<8x8xbf16>
    %cst_21 = arith.constant dense<0.000000e+00> : vector<8x32xf32>
    %73 = tpu.matmul %72, %58, %cst_21 {dimension_numbers = #tpu.dot_dimension_numbers<[1], [0], [0], [1], [0, 0, 1, 1], [], []>} : vector<8x8xbf16>, vector<8x32xbf16>, vector<8x32xf32> -> vector<8x32xf32>
    %74 = vector.extract_strided_slice %17 {offsets = [0, 96], sizes = [8, 32], strides = [1, 1]} : vector<8x128xbf16> to vector<8x32xbf16>
    %75 = vector.extract_strided_slice %18 {offsets = [0, 96], sizes = [8, 32], strides = [1, 1]} : vector<8x128xbf16> to vector<8x32xbf16>
    %76 = vector.extract_strided_slice %19 {offsets = [0, 96], sizes = [8, 32], strides = [1, 1]} : vector<8x128xbf16> to vector<8x32xbf16>
    "tpu.trace_start"() <{level = 10 : i32, message = "qd,kd->qk"}> : () -> ()
    %cst_22 = arith.constant dense<0.000000e+00> : vector<8x8xf32>
    %77 = tpu.matmul %74, %75, %cst_22 {dimension_numbers = #tpu.dot_dimension_numbers<[1], [1], [0], [0], [0, 0, 1, 0], [], []>} : vector<8x32xbf16>, vector<8x32xbf16>, vector<8x8xf32> -> vector<8x8xf32>
    "tpu.trace_stop"() : () -> ()
    %78 = vector.broadcast %16 : vector<1x8xf32> to vector<8x8xf32>
    %79 = arith.addf %77, %78 : vector<8x8xf32>
    %cst_23 = arith.constant dense<0xFF800000> : vector<8xf32>
    %80 = vector.multi_reduction <maximumf>, %79, %cst_23 [1] : vector<8x8xf32> to vector<8xf32>
    %81 = vector.shape_cast %80 : vector<8xf32> to vector<8x1xf32>
    %82 = vector.broadcast %81 : vector<8x1xf32> to vector<8x8xf32>
    %83 = arith.subf %79, %82 : vector<8x8xf32>
    %84 = math.exp %83 : vector<8x8xf32>
    %cst_24 = arith.constant dense<0.000000e+00> : vector<8xf32>
    %85 = vector.multi_reduction <add>, %84, %cst_24 [1] : vector<8x8xf32> to vector<8xf32>
    %86 = vector.shape_cast %85 : vector<8xf32> to vector<8x1xf32>
    %87 = tpu.reciprocal %86 {approx = true} : vector<8x1xf32> -> vector<8x1xf32>
    %88 = vector.broadcast %87 : vector<8x1xf32> to vector<8x8xf32>
    %89 = arith.mulf %84, %88 : vector<8x8xf32>
    %90 = arith.truncf %89 : vector<8x8xf32> to vector<8x8xbf16>
    %cst_25 = arith.constant dense<0.000000e+00> : vector<8x32xf32>
    %91 = tpu.matmul %90, %76, %cst_25 {dimension_numbers = #tpu.dot_dimension_numbers<[1], [0], [0], [1], [0, 0, 1, 1], [], []>} : vector<8x8xbf16>, vector<8x32xbf16>, vector<8x32xf32> -> vector<8x32xf32>
    %92 = tpu.concatenate %37, %55, %73, %91 in 1 : vector<8x32xf32>, vector<8x32xf32>, vector<8x32xf32>, vector<8x32xf32> -> vector<8x128xf32>
    %c1 = arith.constant 1 : index
    %c0_26 = arith.constant 0 : index
    %93 = vector.load %arg2[%c1, %c0_26] : memref<2x8xf32, #tpu.memory_space<vmem>>, vector<1x8xf32>
    %94 = vector.extract_strided_slice %13 {offsets = [8, 0], sizes = [8, 128], strides = [1, 1]} : vector<16x128xbf16> to vector<8x128xbf16>
    %95 = vector.extract_strided_slice %14 {offsets = [8, 0], sizes = [8, 128], strides = [1, 1]} : vector<16x128xbf16> to vector<8x128xbf16>
    %96 = vector.extract_strided_slice %15 {offsets = [8, 0], sizes = [8, 128], strides = [1, 1]} : vector<16x128xbf16> to vector<8x128xbf16>
    %97 = vector.extract_strided_slice %94 {offsets = [0, 0], sizes = [8, 32], strides = [1, 1]} : vector<8x128xbf16> to vector<8x32xbf16>
    %98 = vector.extract_strided_slice %95 {offsets = [0, 0], sizes = [8, 32], strides = [1, 1]} : vector<8x128xbf16> to vector<8x32xbf16>
    %99 = vector.extract_strided_slice %96 {offsets = [0, 0], sizes = [8, 32], strides = [1, 1]} : vector<8x128xbf16> to vector<8x32xbf16>
    "tpu.trace_start"() <{level = 10 : i32, message = "qd,kd->qk"}> : () -> ()
    %cst_27 = arith.constant dense<0.000000e+00> : vector<8x8xf32>
    %100 = tpu.matmul %97, %98, %cst_27 {dimension_numbers = #tpu.dot_dimension_numbers<[1], [1], [0], [0], [0, 0, 1, 0], [], []>} : vector<8x32xbf16>, vector<8x32xbf16>, vector<8x8xf32> -> vector<8x8xf32>
    "tpu.trace_stop"() : () -> ()
    %101 = vector.broadcast %93 : vector<1x8xf32> to vector<8x8xf32>
    %102 = arith.addf %100, %101 : vector<8x8xf32>
    %cst_28 = arith.constant dense<0xFF800000> : vector<8xf32>
    %103 = vector.multi_reduction <maximumf>, %102, %cst_28 [1] : vector<8x8xf32> to vector<8xf32>
    %104 = vector.shape_cast %103 : vector<8xf32> to vector<8x1xf32>
    %105 = vector.broadcast %104 : vector<8x1xf32> to vector<8x8xf32>
    %106 = arith.subf %102, %105 : vector<8x8xf32>
    %107 = math.exp %106 : vector<8x8xf32>
    %cst_29 = arith.constant dense<0.000000e+00> : vector<8xf32>
    %108 = vector.multi_reduction <add>, %107, %cst_29 [1] : vector<8x8xf32> to vector<8xf32>
    %109 = vector.shape_cast %108 : vector<8xf32> to vector<8x1xf32>
    %110 = tpu.reciprocal %109 {approx = true} : vector<8x1xf32> -> vector<8x1xf32>
    %111 = vector.broadcast %110 : vector<8x1xf32> to vector<8x8xf32>
    %112 = arith.mulf %107, %111 : vector<8x8xf32>
    %113 = arith.truncf %112 : vector<8x8xf32> to vector<8x8xbf16>
    %cst_30 = arith.constant dense<0.000000e+00> : vector<8x32xf32>
    %114 = tpu.matmul %113, %99, %cst_30 {dimension_numbers = #tpu.dot_dimension_numbers<[1], [0], [0], [1], [0, 0, 1, 1], [], []>} : vector<8x8xbf16>, vector<8x32xbf16>, vector<8x32xf32> -> vector<8x32xf32>
    %115 = vector.extract_strided_slice %94 {offsets = [0, 32], sizes = [8, 32], strides = [1, 1]} : vector<8x128xbf16> to vector<8x32xbf16>
    %116 = vector.extract_strided_slice %95 {offsets = [0, 32], sizes = [8, 32], strides = [1, 1]} : vector<8x128xbf16> to vector<8x32xbf16>
    %117 = vector.extract_strided_slice %96 {offsets = [0, 32], sizes = [8, 32], strides = [1, 1]} : vector<8x128xbf16> to vector<8x32xbf16>
    "tpu.trace_start"() <{level = 10 : i32, message = "qd,kd->qk"}> : () -> ()
    %cst_31 = arith.constant dense<0.000000e+00> : vector<8x8xf32>
    %118 = tpu.matmul %115, %116, %cst_31 {dimension_numbers = #tpu.dot_dimension_numbers<[1], [1], [0], [0], [0, 0, 1, 0], [], []>} : vector<8x32xbf16>, vector<8x32xbf16>, vector<8x8xf32> -> vector<8x8xf32>
    "tpu.trace_stop"() : () -> ()
    %119 = vector.broadcast %93 : vector<1x8xf32> to vector<8x8xf32>
    %120 = arith.addf %118, %119 : vector<8x8xf32>
    %cst_32 = arith.constant dense<0xFF800000> : vector<8xf32>
    %121 = vector.multi_reduction <maximumf>, %120, %cst_32 [1] : vector<8x8xf32> to vector<8xf32>
    %122 = vector.shape_cast %121 : vector<8xf32> to vector<8x1xf32>
    %123 = vector.broadcast %122 : vector<8x1xf32> to vector<8x8xf32>
    %124 = arith.subf %120, %123 : vector<8x8xf32>
    %125 = math.exp %124 : vector<8x8xf32>
    %cst_33 = arith.constant dense<0.000000e+00> : vector<8xf32>
    %126 = vector.multi_reduction <add>, %125, %cst_33 [1] : vector<8x8xf32> to vector<8xf32>
    %127 = vector.shape_cast %126 : vector<8xf32> to vector<8x1xf32>
    %128 = tpu.reciprocal %127 {approx = true} : vector<8x1xf32> -> vector<8x1xf32>
    %129 = vector.broadcast %128 : vector<8x1xf32> to vector<8x8xf32>
    %130 = arith.mulf %125, %129 : vector<8x8xf32>
    %131 = arith.truncf %130 : vector<8x8xf32> to vector<8x8xbf16>
    %cst_34 = arith.constant dense<0.000000e+00> : vector<8x32xf32>
    %132 = tpu.matmul %131, %117, %cst_34 {dimension_numbers = #tpu.dot_dimension_numbers<[1], [0], [0], [1], [0, 0, 1, 1], [], []>} : vector<8x8xbf16>, vector<8x32xbf16>, vector<8x32xf32> -> vector<8x32xf32>
    %133 = vector.extract_strided_slice %94 {offsets = [0, 64], sizes = [8, 32], strides = [1, 1]} : vector<8x128xbf16> to vector<8x32xbf16>
    %134 = vector.extract_strided_slice %95 {offsets = [0, 64], sizes = [8, 32], strides = [1, 1]} : vector<8x128xbf16> to vector<8x32xbf16>
    %135 = vector.extract_strided_slice %96 {offsets = [0, 64], sizes = [8, 32], strides = [1, 1]} : vector<8x128xbf16> to vector<8x32xbf16>
    "tpu.trace_start"() <{level = 10 : i32, message = "qd,kd->qk"}> : () -> ()
    %cst_35 = arith.constant dense<0.000000e+00> : vector<8x8xf32>
    %136 = tpu.matmul %133, %134, %cst_35 {dimension_numbers = #tpu.dot_dimension_numbers<[1], [1], [0], [0], [0, 0, 1, 0], [], []>} : vector<8x32xbf16>, vector<8x32xbf16>, vector<8x8xf32> -> vector<8x8xf32>
    "tpu.trace_stop"() : () -> ()
    %137 = vector.broadcast %93 : vector<1x8xf32> to vector<8x8xf32>
    %138 = arith.addf %136, %137 : vector<8x8xf32>
    %cst_36 = arith.constant dense<0xFF800000> : vector<8xf32>
    %139 = vector.multi_reduction <maximumf>, %138, %cst_36 [1] : vector<8x8xf32> to vector<8xf32>
    %140 = vector.shape_cast %139 : vector<8xf32> to vector<8x1xf32>
    %141 = vector.broadcast %140 : vector<8x1xf32> to vector<8x8xf32>
    %142 = arith.subf %138, %141 : vector<8x8xf32>
    %143 = math.exp %142 : vector<8x8xf32>
    %cst_37 = arith.constant dense<0.000000e+00> : vector<8xf32>
    %144 = vector.multi_reduction <add>, %143, %cst_37 [1] : vector<8x8xf32> to vector<8xf32>
    %145 = vector.shape_cast %144 : vector<8xf32> to vector<8x1xf32>
    %146 = tpu.reciprocal %145 {approx = true} : vector<8x1xf32> -> vector<8x1xf32>
    %147 = vector.broadcast %146 : vector<8x1xf32> to vector<8x8xf32>
    %148 = arith.mulf %143, %147 : vector<8x8xf32>
    %149 = arith.truncf %148 : vector<8x8xf32> to vector<8x8xbf16>
    %cst_38 = arith.constant dense<0.000000e+00> : vector<8x32xf32>
    %150 = tpu.matmul %149, %135, %cst_38 {dimension_numbers = #tpu.dot_dimension_numbers<[1], [0], [0], [1], [0, 0, 1, 1], [], []>} : vector<8x8xbf16>, vector<8x32xbf16>, vector<8x32xf32> -> vector<8x32xf32>
    %151 = vector.extract_strided_slice %94 {offsets = [0, 96], sizes = [8, 32], strides = [1, 1]} : vector<8x128xbf16> to vector<8x32xbf16>
    %152 = vector.extract_strided_slice %95 {offsets = [0, 96], sizes = [8, 32], strides = [1, 1]} : vector<8x128xbf16> to vector<8x32xbf16>
    %153 = vector.extract_strided_slice %96 {offsets = [0, 96], sizes = [8, 32], strides = [1, 1]} : vector<8x128xbf16> to vector<8x32xbf16>
    "tpu.trace_start"() <{level = 10 : i32, message = "qd,kd->qk"}> : () -> ()
    %cst_39 = arith.constant dense<0.000000e+00> : vector<8x8xf32>
    %154 = tpu.matmul %151, %152, %cst_39 {dimension_numbers = #tpu.dot_dimension_numbers<[1], [1], [0], [0], [0, 0, 1, 0], [], []>} : vector<8x32xbf16>, vector<8x32xbf16>, vector<8x8xf32> -> vector<8x8xf32>
    "tpu.trace_stop"() : () -> ()
    %155 = vector.broadcast %93 : vector<1x8xf32> to vector<8x8xf32>
    %156 = arith.addf %154, %155 : vector<8x8xf32>
    %cst_40 = arith.constant dense<0xFF800000> : vector<8xf32>
    %157 = vector.multi_reduction <maximumf>, %156, %cst_40 [1] : vector<8x8xf32> to vector<8xf32>
    %158 = vector.shape_cast %157 : vector<8xf32> to vector<8x1xf32>
    %159 = vector.broadcast %158 : vector<8x1xf32> to vector<8x8xf32>
    %160 = arith.subf %156, %159 : vector<8x8xf32>
    %161 = math.exp %160 : vector<8x8xf32>
    %cst_41 = arith.constant dense<0.000000e+00> : vector<8xf32>
    %162 = vector.multi_reduction <add>, %161, %cst_41 [1] : vector<8x8xf32> to vector<8xf32>
    %163 = vector.shape_cast %162 : vector<8xf32> to vector<8x1xf32>
    %164 = tpu.reciprocal %163 {approx = true} : vector<8x1xf32> -> vector<8x1xf32>
    %165 = vector.broadcast %164 : vector<8x1xf32> to vector<8x8xf32>
    %166 = arith.mulf %161, %165 : vector<8x8xf32>
    %167 = arith.truncf %166 : vector<8x8xf32> to vector<8x8xbf16>
    %cst_42 = arith.constant dense<0.000000e+00> : vector<8x32xf32>
    %168 = tpu.matmul %167, %153, %cst_42 {dimension_numbers = #tpu.dot_dimension_numbers<[1], [0], [0], [1], [0, 0, 1, 1], [], []>} : vector<8x8xbf16>, vector<8x32xbf16>, vector<8x32xf32> -> vector<8x32xf32>
    %169 = tpu.concatenate %114, %132, %150, %168 in 1 : vector<8x32xf32>, vector<8x32xf32>, vector<8x32xf32>, vector<8x32xf32> -> vector<8x128xf32>
    %170 = tpu.concatenate %92, %169 in 0 : vector<8x128xf32>, vector<8x128xf32> -> vector<16x128xf32>
    %171 = arith.truncf %170 : vector<16x128xf32> to vector<16x128xbf16>
    %c0_43 = arith.constant 0 : index
    %c0_44 = arith.constant 0 : index
    %c0_45 = arith.constant 0 : index
    %172 = vector.load %arg7[%c0_43, %c0_44, %c0_45] : memref<1x128x128xbf16, #tpu.memory_space<vmem>>, vector<1x128x128xbf16>
    %173 = vector.shape_cast %172 : vector<1x128x128xbf16> to vector<128x128xbf16>
    %cst_46 = arith.constant dense<0.000000e+00> : vector<16x128xf32>
    %174 = tpu.matmul %171, %173, %cst_46 {dimension_numbers = #tpu.dot_dimension_numbers<[1], [0], [0], [1], [0, 0, 1, 1], [], []>} : vector<16x128xbf16>, vector<128x128xbf16>, vector<16x128xf32> -> vector<16x128xf32>
    %c0_47 = arith.constant 0 : index
    %c0_48 = arith.constant 0 : index
    %c0_49 = arith.constant 0 : index
    %175 = vector.load %arg8[%c0_47, %c0_48, %c0_49] : memref<1x1x128xf32, #tpu.memory_space<vmem>>, vector<1x1x128xf32>
    %176 = vector.shape_cast %175 : vector<1x1x128xf32> to vector<1x128xf32>
    %177 = vector.broadcast %176 : vector<1x128xf32> to vector<16x128xf32>
    %178 = arith.addf %174, %177 : vector<16x128xf32>
    %179 = arith.addf %178, %4 : vector<16x128xf32>
    %c0_50 = arith.constant 0 : index
    %c0_51 = arith.constant 0 : index
    %c0_52 = arith.constant 0 : index
    %180 = vector.load %arg9[%c0_50, %c0_51, %c0_52] : memref<1x1x128xf32, #tpu.memory_space<vmem>>, vector<1x1x128xf32>
    %181 = vector.shape_cast %180 : vector<1x1x128xf32> to vector<1x128xf32>
    %c0_53 = arith.constant 0 : index
    %c0_54 = arith.constant 0 : index
    %c0_55 = arith.constant 0 : index
    %182 = vector.load %arg10[%c0_53, %c0_54, %c0_55] : memref<1x1x128xf32, #tpu.memory_space<vmem>>, vector<1x1x128xf32>
    %183 = vector.shape_cast %182 : vector<1x1x128xf32> to vector<1x128xf32>
    %cst_56 = arith.constant dense<0.000000e+00> : vector<16xf32>
    %184 = vector.multi_reduction <add>, %179, %cst_56 [1] : vector<16x128xf32> to vector<16xf32>
    %185 = vector.shape_cast %184 : vector<16xf32> to vector<16x1xf32>
    %cst_57 = arith.constant 1.280000e+02 : f32
    %186 = vector.broadcast %cst_57 : f32 to vector<16x1xf32>
    %187 = arith.divf %185, %186 : vector<16x1xf32>
    %188 = vector.broadcast %187 : vector<16x1xf32> to vector<16x128xf32>
    %189 = arith.subf %179, %188 : vector<16x128xf32>
    %190 = arith.mulf %189, %189 : vector<16x128xf32>
    %cst_58 = arith.constant dense<0.000000e+00> : vector<16xf32>
    %191 = vector.multi_reduction <add>, %190, %cst_58 [1] : vector<16x128xf32> to vector<16xf32>
    %192 = vector.shape_cast %191 : vector<16xf32> to vector<16x1xf32>
    %cst_59 = arith.constant 1.280000e+02 : f32
    %193 = vector.broadcast %cst_59 : f32 to vector<16x1xf32>
    %194 = arith.divf %192, %193 : vector<16x1xf32>
    %195 = vector.broadcast %187 : vector<16x1xf32> to vector<16x128xf32>
    %196 = arith.subf %179, %195 : vector<16x128xf32>
    %cst_60 = arith.constant 9.99999996E-13 : f32
    %197 = vector.broadcast %cst_60 : f32 to vector<16x1xf32>
    %198 = arith.addf %194, %197 : vector<16x1xf32>
    %199 = math.rsqrt %198 : vector<16x1xf32>
    %200 = vector.broadcast %199 : vector<16x1xf32> to vector<16x128xf32>
    %201 = arith.mulf %196, %200 : vector<16x128xf32>
    %202 = vector.broadcast %181 : vector<1x128xf32> to vector<16x128xf32>
    %203 = arith.mulf %201, %202 : vector<16x128xf32>
    %204 = vector.broadcast %183 : vector<1x128xf32> to vector<16x128xf32>
    %205 = arith.addf %203, %204 : vector<16x128xf32>
    %206 = arith.truncf %205 : vector<16x128xf32> to vector<16x128xbf16>
    %c0_61 = arith.constant 0 : index
    %c0_62 = arith.constant 0 : index
    %c0_63 = arith.constant 0 : index
    %207 = vector.load %arg11[%c0_61, %c0_62, %c0_63] : memref<1x128x256xbf16, #tpu.memory_space<vmem>>, vector<1x128x256xbf16>
    %208 = vector.shape_cast %207 : vector<1x128x256xbf16> to vector<128x256xbf16>
    %cst_64 = arith.constant dense<0.000000e+00> : vector<16x256xf32>
    %209 = tpu.matmul %206, %208, %cst_64 {dimension_numbers = #tpu.dot_dimension_numbers<[1], [0], [0], [1], [0, 0, 1, 1], [], []>} : vector<16x128xbf16>, vector<128x256xbf16>, vector<16x256xf32> -> vector<16x256xf32>
    %c0_65 = arith.constant 0 : index
    %c0_66 = arith.constant 0 : index
    %c0_67 = arith.constant 0 : index
    %210 = vector.load %arg12[%c0_65, %c0_66, %c0_67] : memref<1x1x256xf32, #tpu.memory_space<vmem>>, vector<1x1x256xf32>
    %211 = vector.shape_cast %210 : vector<1x1x256xf32> to vector<1x256xf32>
    %212 = vector.broadcast %211 : vector<1x256xf32> to vector<16x256xf32>
    %213 = arith.addf %209, %212 : vector<16x256xf32>
    %214 = arith.mulf %213, %213 : vector<16x256xf32>
    %215 = arith.mulf %213, %214 : vector<16x256xf32>
    %cst_68 = arith.constant 4.471500e-02 : f32
    %216 = vector.broadcast %cst_68 : f32 to vector<16x256xf32>
    %217 = arith.mulf %216, %215 : vector<16x256xf32>
    %218 = arith.addf %213, %217 : vector<16x256xf32>
    %cst_69 = arith.constant 0.797884583 : f32
    %219 = vector.broadcast %cst_69 : f32 to vector<16x256xf32>
    %220 = arith.mulf %219, %218 : vector<16x256xf32>
    %221 = math.tanh %220 : vector<16x256xf32>
    %cst_70 = arith.constant 1.000000e+00 : f32
    %222 = vector.broadcast %cst_70 : f32 to vector<16x256xf32>
    %223 = arith.addf %222, %221 : vector<16x256xf32>
    %cst_71 = arith.constant 5.000000e-01 : f32
    %224 = vector.broadcast %cst_71 : f32 to vector<16x256xf32>
    %225 = arith.mulf %224, %223 : vector<16x256xf32>
    %226 = arith.mulf %213, %225 : vector<16x256xf32>
    %227 = arith.truncf %226 : vector<16x256xf32> to vector<16x256xbf16>
    %c0_72 = arith.constant 0 : index
    %c0_73 = arith.constant 0 : index
    %c0_74 = arith.constant 0 : index
    %228 = vector.load %arg13[%c0_72, %c0_73, %c0_74] : memref<1x256x128xbf16, #tpu.memory_space<vmem>>, vector<1x256x128xbf16>
    %229 = vector.shape_cast %228 : vector<1x256x128xbf16> to vector<256x128xbf16>
    %cst_75 = arith.constant dense<0.000000e+00> : vector<16x128xf32>
    %230 = tpu.matmul %227, %229, %cst_75 {dimension_numbers = #tpu.dot_dimension_numbers<[1], [0], [0], [1], [0, 0, 1, 1], [], []>} : vector<16x256xbf16>, vector<256x128xbf16>, vector<16x128xf32> -> vector<16x128xf32>
    %c0_76 = arith.constant 0 : index
    %c0_77 = arith.constant 0 : index
    %c0_78 = arith.constant 0 : index
    %231 = vector.load %arg14[%c0_76, %c0_77, %c0_78] : memref<1x1x128xf32, #tpu.memory_space<vmem>>, vector<1x1x128xf32>
    %232 = vector.shape_cast %231 : vector<1x1x128xf32> to vector<1x128xf32>
    %233 = vector.broadcast %232 : vector<1x128xf32> to vector<16x128xf32>
    %234 = arith.addf %230, %233 : vector<16x128xf32>
    %235 = arith.addf %234, %205 : vector<16x128xf32>
    %c0_79 = arith.constant 0 : index
    %c0_80 = arith.constant 0 : index
    %c0_81 = arith.constant 0 : index
    %236 = vector.load %arg15[%c0_79, %c0_80, %c0_81] : memref<1x1x128xf32, #tpu.memory_space<vmem>>, vector<1x1x128xf32>
    %237 = vector.shape_cast %236 : vector<1x1x128xf32> to vector<1x128xf32>
    %c0_82 = arith.constant 0 : index
    %c0_83 = arith.constant 0 : index
    %c0_84 = arith.constant 0 : index
    %238 = vector.load %arg16[%c0_82, %c0_83, %c0_84] : memref<1x1x128xf32, #tpu.memory_space<vmem>>, vector<1x1x128xf32>
    %239 = vector.shape_cast %238 : vector<1x1x128xf32> to vector<1x128xf32>
    %cst_85 = arith.constant dense<0.000000e+00> : vector<16xf32>
    %240 = vector.multi_reduction <add>, %235, %cst_85 [1] : vector<16x128xf32> to vector<16xf32>
    %241 = vector.shape_cast %240 : vector<16xf32> to vector<16x1xf32>
    %cst_86 = arith.constant 1.280000e+02 : f32
    %242 = vector.broadcast %cst_86 : f32 to vector<16x1xf32>
    %243 = arith.divf %241, %242 : vector<16x1xf32>
    %244 = vector.broadcast %243 : vector<16x1xf32> to vector<16x128xf32>
    %245 = arith.subf %235, %244 : vector<16x128xf32>
    %246 = arith.mulf %245, %245 : vector<16x128xf32>
    %cst_87 = arith.constant dense<0.000000e+00> : vector<16xf32>
    %247 = vector.multi_reduction <add>, %246, %cst_87 [1] : vector<16x128xf32> to vector<16xf32>
    %248 = vector.shape_cast %247 : vector<16xf32> to vector<16x1xf32>
    %cst_88 = arith.constant 1.280000e+02 : f32
    %249 = vector.broadcast %cst_88 : f32 to vector<16x1xf32>
    %250 = arith.divf %248, %249 : vector<16x1xf32>
    %251 = vector.broadcast %243 : vector<16x1xf32> to vector<16x128xf32>
    %252 = arith.subf %235, %251 : vector<16x128xf32>
    %cst_89 = arith.constant 9.99999996E-13 : f32
    %253 = vector.broadcast %cst_89 : f32 to vector<16x1xf32>
    %254 = arith.addf %250, %253 : vector<16x1xf32>
    %255 = math.rsqrt %254 : vector<16x1xf32>
    %256 = vector.broadcast %255 : vector<16x1xf32> to vector<16x128xf32>
    %257 = arith.mulf %252, %256 : vector<16x128xf32>
    %258 = vector.broadcast %237 : vector<1x128xf32> to vector<16x128xf32>
    %259 = arith.mulf %257, %258 : vector<16x128xf32>
    %260 = vector.broadcast %239 : vector<1x128xf32> to vector<16x128xf32>
    %261 = arith.addf %259, %260 : vector<16x128xf32>
    %262 = arith.truncf %261 : vector<16x128xf32> to vector<16x128xbf16>
    %c0_90 = arith.constant 0 : index
    %c0_91 = arith.constant 0 : index
    %263 = vector.load %arg22[%c0_90, %c0_91] : memref<16x128xbf16, #tpu.memory_space<vmem>>, vector<16x128xbf16>
    tpu.vector_store %arg22[%c0_90, %c0_91], %262 {strides = array<i32>} : memref<16x128xbf16, #tpu.memory_space<vmem>>, vector<16x128xbf16>,
    %c1_i32 = arith.constant 1 : i32
    %264 = arith.cmpi eq, %arg0, %c1_i32 : i32
    %265 = arith.extui %264 : i1 to i32
    %c0_i32_92 = arith.constant 0 : i32
    %266 = arith.cmpi ne, %265, %c0_i32_92 : i32
    scf.if %266 {
      %267 = vector.extract_strided_slice %261 {offsets = [0, 0], sizes = [1, 128], strides = [1, 1]} : vector<16x128xf32> to vector<1x128xf32>
      %268 = vector.extract_strided_slice %261 {offsets = [8, 0], sizes = [1, 128], strides = [1, 1]} : vector<16x128xf32> to vector<1x128xf32>
      %269 = tpu.concatenate %267, %268 in 0 : vector<1x128xf32>, vector<1x128xf32> -> vector<2x128xf32>
      %270 = arith.truncf %269 : vector<2x128xf32> to vector<2x128xbf16>
      %c0_93 = arith.constant 0 : index
      %c0_94 = arith.constant 0 : index
      %271 = vector.load %arg17[%c0_93, %c0_94] : memref<128x128xbf16, #tpu.memory_space<vmem>>, vector<128x128xbf16>
      %cst_95 = arith.constant dense<0.000000e+00> : vector<2x128xf32>
      %272 = tpu.matmul %270, %271, %cst_95 {dimension_numbers = #tpu.dot_dimension_numbers<[1], [0], [0], [1], [0, 0, 1, 1], [], []>} : vector<2x128xbf16>, vector<128x128xbf16>, vector<2x128xf32> -> vector<2x128xf32>
      %c0_96 = arith.constant 0 : index
      %c0_97 = arith.constant 0 : index
      %273 = vector.load %arg18[%c0_96, %c0_97] : memref<1x128xf32, #tpu.memory_space<vmem>>, vector<1x128xf32>
      %274 = vector.broadcast %273 : vector<1x128xf32> to vector<2x128xf32>
      %275 = arith.addf %272, %274 : vector<2x128xf32>
      %276 = math.tanh %275 : vector<2x128xf32>
      %277 = arith.truncf %276 : vector<2x128xf32> to vector<2x128xbf16>
      %c0_98 = arith.constant 0 : index
      %c0_99 = arith.constant 0 : index
      %278 = vector.load %arg19[%c0_98, %c0_99] : memref<128x128xbf16, #tpu.memory_space<vmem>>, vector<128x128xbf16>
      %cst_100 = arith.constant dense<0.000000e+00> : vector<2x128xf32>
      %279 = tpu.matmul %277, %278, %cst_100 {dimension_numbers = #tpu.dot_dimension_numbers<[1], [0], [0], [1], [0, 0, 1, 1], [], []>} : vector<2x128xbf16>, vector<128x128xbf16>, vector<2x128xf32> -> vector<2x128xf32>
      %c0_101 = arith.constant 0 : index
      %c0_102 = arith.constant 0 : index
      %280 = vector.load %arg20[%c0_101, %c0_102] : memref<1x128xf32, #tpu.memory_space<vmem>>, vector<1x128xf32>
      %281 = vector.broadcast %280 : vector<1x128xf32> to vector<2x128xf32>
      %282 = arith.addf %279, %281 : vector<2x128xf32>
      %c0_103 = arith.constant 0 : index
      %c0_104 = arith.constant 0 : index
      %283 = vector.load %arg21[%c0_103, %c0_104] : memref<2x128xf32, #tpu.memory_space<vmem>>, vector<2x128xf32>
      tpu.vector_store %arg21[%c0_103, %c0_104], %282 {strides = array<i32>} : memref<2x128xf32, #tpu.memory_space<vmem>>, vector<2x128xf32>,
    } else {
    }
    return
  }
  func.func @transform_0(%arg0: i32) -> (i32, i32) {
    %c0_i32 = arith.constant 0 : i32
    %c0_i32_0 = arith.constant 0 : i32
    %c0_i32_1 = arith.constant 0 : i32
    return %c0_i32, %c0_i32_0 : i32, i32
  }
  func.func @transform_1(%arg0: i32) -> (i32, i32) {
    %c0_i32 = arith.constant 0 : i32
    %c0_i32_0 = arith.constant 0 : i32
    %c0_i32_1 = arith.constant 0 : i32
    return %c0_i32, %c0_i32_0 : i32, i32
  }
  func.func @transform_2(%arg0: i32) -> (i32, i32) {
    %c0_i32 = arith.constant 0 : i32
    %c0_i32_0 = arith.constant 0 : i32
    %c0_i32_1 = arith.constant 0 : i32
    return %c0_i32, %c0_i32_0 : i32, i32
  }
  func.func @transform_3(%arg0: i32) -> (i32, i32) {
    %c0_i32 = arith.constant 0 : i32
    %c0_i32_0 = arith.constant 0 : i32
    %c0_i32_1 = arith.constant 0 : i32
    return %c0_i32, %c0_i32_0 : i32, i32
  }
  func.func @transform_4(%arg0: i32) -> (i32, i32, i32) {
    %c0_i32 = arith.constant 0 : i32
    %c0_i32_0 = arith.constant 0 : i32
    %c0_i32_1 = arith.constant 0 : i32
    return %arg0, %c0_i32, %c0_i32_0 : i32, i32, i32
  }
  func.func @transform_5(%arg0: i32) -> (i32, i32, i32) {
    %c0_i32 = arith.constant 0 : i32
    %c0_i32_0 = arith.constant 0 : i32
    %c0_i32_1 = arith.constant 0 : i32
    return %arg0, %c0_i32, %c0_i32_0 : i32, i32, i32
  }
  func.func @transform_6(%arg0: i32) -> (i32, i32, i32) {
    %c0_i32 = arith.constant 0 : i32
    %c0_i32_0 = arith.constant 0 : i32
    %c0_i32_1 = arith.constant 0 : i32
    return %arg0, %c0_i32, %c0_i32_0 : i32, i32, i32
  }
  func.func @transform_7(%arg0: i32) -> (i32, i32, i32) {
    %c0_i32 = arith.constant 0 : i32
    %c0_i32_0 = arith.constant 0 : i32
    %c0_i32_1 = arith.constant 0 : i32
    return %arg0, %c0_i32, %c0_i32_0 : i32, i32, i32
  }
  func.func @transform_8(%arg0: i32) -> (i32, i32, i32) {
    %c0_i32 = arith.constant 0 : i32
    %c0_i32_0 = arith.constant 0 : i32
    %c0_i32_1 = arith.constant 0 : i32
    return %arg0, %c0_i32, %c0_i32_0 : i32, i32, i32
  }
  func.func @transform_9(%arg0: i32) -> (i32, i32, i32) {
    %c0_i32 = arith.constant 0 : i32
    %c0_i32_0 = arith.constant 0 : i32
    %c0_i32_1 = arith.constant 0 : i32
    return %arg0, %c0_i32, %c0_i32_0 : i32, i32, i32
  }
  func.func @transform_10(%arg0: i32) -> (i32, i32, i32) {
    %c0_i32 = arith.constant 0 : i32
    %c0_i32_0 = arith.constant 0 : i32
    %c0_i32_1 = arith.constant 0 : i32
    return %arg0, %c0_i32, %c0_i32_0 : i32, i32, i32
  }
  func.func @transform_11(%arg0: i32) -> (i32, i32, i32) {
    %c0_i32 = arith.constant 0 : i32
    %c0_i32_0 = arith.constant 0 : i32
    %c0_i32_1 = arith.constant 0 : i32
    return %arg0, %c0_i32, %c0_i32_0 : i32, i32, i32
  }
  func.func @transform_12(%arg0: i32) -> (i32, i32, i32) {
    %c0_i32 = arith.constant 0 : i32
    %c0_i32_0 = arith.constant 0 : i32
    %c0_i32_1 = arith.constant 0 : i32
    return %arg0, %c0_i32, %c0_i32_0 : i32, i32, i32
  }
  func.func @transform_13(%arg0: i32) -> (i32, i32, i32) {
    %c0_i32 = arith.constant 0 : i32
    %c0_i32_0 = arith.constant 0 : i32
    %c0_i32_1 = arith.constant 0 : i32
    return %arg0, %c0_i32, %c0_i32_0 : i32, i32, i32
  }
  func.func @transform_14(%arg0: i32) -> (i32, i32, i32) {
    %c0_i32 = arith.constant 0 : i32
    %c0_i32_0 = arith.constant 0 : i32
    %c0_i32_1 = arith.constant 0 : i32
    return %arg0, %c0_i32, %c0_i32_0 : i32, i32, i32
  }
  func.func @transform_15(%arg0: i32) -> (i32, i32, i32) {
    %c0_i32 = arith.constant 0 : i32
    %c0_i32_0 = arith.constant 0 : i32
    %c0_i32_1 = arith.constant 0 : i32
    return %arg0, %c0_i32, %c0_i32_0 : i32, i32, i32
  }
  func.func @transform_16(%arg0: i32) -> (i32, i32) {
    %c0_i32 = arith.constant 0 : i32
    %c0_i32_0 = arith.constant 0 : i32
    %c0_i32_1 = arith.constant 0 : i32
    return %c0_i32, %c0_i32_0 : i32, i32
  }
  func.func @transform_17(%arg0: i32) -> (i32, i32) {
    %c0_i32 = arith.constant 0 : i32
    %c0_i32_0 = arith.constant 0 : i32
    %c0_i32_1 = arith.constant 0 : i32
    return %c0_i32, %c0_i32_0 : i32, i32
  }
  func.func @transform_18(%arg0: i32) -> (i32, i32) {
    %c0_i32 = arith.constant 0 : i32
    %c0_i32_0 = arith.constant 0 : i32
    %c0_i32_1 = arith.constant 0 : i32
    return %c0_i32, %c0_i32_0 : i32, i32
  }
  func.func @transform_19(%arg0: i32) -> (i32, i32) {
    %c0_i32 = arith.constant 0 : i32
    %c0_i32_0 = arith.constant 0 : i32
    %c0_i32_1 = arith.constant 0 : i32
    return %c0_i32, %c0_i32_0 : i32, i32
  }
  func.func @transform_20(%arg0: i32) -> (i32, i32) {
    %c0_i32 = arith.constant 0 : i32
    %c0_i32_0 = arith.constant 0 : i32
    %c0_i32_1 = arith.constant 0 : i32
    return %c0_i32, %c0_i32_0 : i32, i32
  }
}

</mosaic_0001>

<llo_original>
// kernel: bert_classifier_forward.1
$region0: #{bert_classifier_forward.1}
  #allocation0 [shape = 'u32[]', space=smem, size = 0x4, offset = 0x4, fixed_abs, tag = 'smem constant byte address 0x4 - core index']
  #allocation1 [shape = 'u32[144,128]{1,0:T(1,128)}', space=vmem, size = 0x12000, scoped, tag = 'internal scratch']
  #allocation2 [shape = 'bf16[16,128]{1,0:T(16,128)(2,1)}', space=vmem, size = 0x1000, scoped, tag = 'scratch operand']
  %s0 = inlined_call_operand.vmem [shape: bf16[16,128], index: 0, kind: input, shape index: {}]
  %s1 = inlined_call_operand.vmem [shape: f32[2,8], index: 1, kind: input, shape index: {}]
  %s2 = inlined_call_operand.hbm [shape: f32[1,128], index: 2, kind: input, shape index: {}]
  %s3 = inlined_call_operand.hbm [shape: f32[1,128], index: 3, kind: input, shape index: {}]
  %s4 = inlined_call_operand.hbm [shape: bf16[2,128,384], index: 4, kind: input, shape index: {}]
  %s5 = inlined_call_operand.vmem [shape: f32[2,1,384], index: 5, kind: input, shape index: {}]
  %s6 = inlined_call_operand.vmem [shape: bf16[2,128,128], index: 6, kind: input, shape index: {}]
  %s7 = inlined_call_operand.vmem [shape: f32[2,1,128], index: 7, kind: input, shape index: {}]
  %s8 = inlined_call_operand.hbm [shape: f32[2,1,128], index: 8, kind: input, shape index: {}]
  %s9 = inlined_call_operand.hbm [shape: f32[2,1,128], index: 9, kind: input, shape index: {}]
  %s10 = inlined_call_operand.hbm [shape: bf16[2,128,256], index: 10, kind: input, shape index: {}]
  %s11 = inlined_call_operand.vmem [shape: f32[2,1,256], index: 11, kind: input, shape index: {}]
  %s12 = inlined_call_operand.hbm [shape: bf16[2,256,128], index: 12, kind: input, shape index: {}]
  %s13 = inlined_call_operand.vmem [shape: f32[2,1,128], index: 13, kind: input, shape index: {}]
  %s14 = inlined_call_operand.hbm [shape: f32[2,1,128], index: 14, kind: input, shape index: {}]
  %s15 = inlined_call_operand.hbm [shape: f32[2,1,128], index: 15, kind: input, shape index: {}]
  %s16 = inlined_call_operand.vmem [shape: bf16[128,128], index: 16, kind: input, shape index: {}]
  %s17 = inlined_call_operand.hbm [shape: f32[1,128], index: 17, kind: input, shape index: {}]
  %s18 = inlined_call_operand.vmem [shape: bf16[128,128], index: 18, kind: input, shape index: {}]
  %s19 = inlined_call_operand.hbm [shape: f32[1,128], index: 19, kind: input, shape index: {}]
  %s20 = inlined_call_operand.vmem [shape: f32[2,128], index: 20, kind: output, shape index: {}]
  %s21 = sld [smem:[#allocation0]]
  $region165: #{bert_classifier_forward.1} parent=0
    _
  %s23 = ssub.s32 1, %s21
  %s24 = scalar_select 0, %s23, %s21
  $region1: #{bert_classifier_forward.1} parent=0
    #allocation3 [shape = 'u8[512]{0}', space=vmem, size = 0x400, scoped, tag = 'input window, operand 2, single buffered']
    #allocation4 [shape = 's32[2]{0}', space=sflag, size = 0x8, scoped, tag = 'scoped memory for bert_classifier_forward.1']
    #allocation5 [shape = 'u8[512]{0}', space=vmem, size = 0x400, scoped, tag = 'input window, operand 3, single buffered']
    #allocation6 [shape = 's32[1]{0}', space=sflag, size = 0x4, scoped, tag = 'scoped memory for bert_classifier_forward.1']
    #allocation7 [shape = 'u8[196608]{0}', space=vmem, size = 0x30000, scoped, tag = 'input window, operand 4']
    #allocation8 [shape = 'u8[1024]{0}', space=vmem, size = 0x400, scoped, tag = 'input window, operand 8']
    #allocation9 [shape = 'u8[1024]{0}', space=vmem, size = 0x400, scoped, tag = 'input window, operand 9']
    #allocation10 [shape = 'u8[131072]{0}', space=vmem, size = 0x20000, scoped, tag = 'input window, operand 10']
    #allocation11 [shape = 'u8[131072]{0}', space=vmem, size = 0x20000, scoped, tag = 'input window, operand 12']
    #allocation12 [shape = 'u8[1024]{0}', space=vmem, size = 0x400, scoped, tag = 'input window, operand 14']
    #allocation13 [shape = 'u8[1024]{0}', space=vmem, size = 0x400, scoped, tag = 'input window, operand 15']
    #allocation14 [shape = 'u8[512]{0}', space=vmem, size = 0x400, scoped, tag = 'input window, operand 17, single buffered']
    #allocation15 [shape = 'u8[512]{0}', space=vmem, size = 0x400, scoped, tag = 'input window, operand 19, single buffered']
    #allocation16 [shape = 's32[1]{0}', space=sflag, size = 0x4, scoped, tag = 'scoped memory for bert_classifier_forward.1']
    %25 = vsyncpa [#allocation4], 0
    %26 = vsyncpa [#allocation6], 0
    %27 = vsyncpa [#allocation16], 0
    loop: start=0, step=1, limit=4
    $region2: #{bert_classifier_forward.1} parent=1 // loop_pre_header
      _
    $region3: #{bert_classifier_forward.1} parent=1 // loop_header
      %s29 = sphi 0, %s33
      %p30 = scmp.ge.s32.totalorder %s29, 4
      %s37 = sphi 0, %s37
      %s39 = sphi 0, %s37
      %s40 = sphi 0, %s39
      %s54 = sphi 0, %s40
      %s58 = sphi 0, %s58
      %s60 = sphi 0, %s58
      %s61 = sphi 0, %s60
      %s75 = sphi 0, %s61
      %s79 = sphi 0, %s79
      %s81 = sphi 0, %s79
      %s82 = sphi 0, %s81
      %s96 = sphi 0, %s82
      %s100 = sphi 0, %s100
      %s102 = sphi 0, %s100
      %s103 = sphi 0, %s102
      %s117 = sphi 0, %s103
      %s123 = sphi 0, %s125
      %s126 = sphi 0, %s123
      %s127 = sphi 0, %s126
      %s143 = sphi 0, %s127
      %s149 = sphi 0, %s151
      %s152 = sphi 0, %s149
      %s153 = sphi 0, %s152
      %s169 = sphi 0, %s153
      %s175 = sphi 0, %s177
      %s178 = sphi 0, %s175
      %s179 = sphi 0, %s178
      %s195 = sphi 0, %s179
      %s201 = sphi 0, %s203
      %s204 = sphi 0, %s201
      %s205 = sphi 0, %s204
      %s221 = sphi 0, %s205
      %s227 = sphi 0, %s229
      %s230 = sphi 0, %s227
      %s231 = sphi 0, %s230
      %s247 = sphi 0, %s231
      %s253 = sphi 0, %s255
      %s256 = sphi 0, %s253
      %s257 = sphi 0, %s256
      %s273 = sphi 0, %s257
      %s279 = sphi 0, %s281
      %s282 = sphi 0, %s279
      %s283 = sphi 0, %s282
      %s299 = sphi 0, %s283
      %s305 = sphi 0, %s307
      %s308 = sphi 0, %s305
      %s309 = sphi 0, %s308
      %s325 = sphi 0, %s309
      %s331 = sphi 0, %s333
      %s334 = sphi 0, %s331
      %s335 = sphi 0, %s334
      %s351 = sphi 0, %s335
      %s357 = sphi 0, %s359
      %s360 = sphi 0, %s357
      %s361 = sphi 0, %s360
      %s377 = sphi 0, %s361
      %s383 = sphi 0, %s385
      %s386 = sphi 0, %s383
      %s387 = sphi 0, %s386
      %s403 = sphi 0, %s387
      %s409 = sphi 0, %s411
      %s412 = sphi 0, %s409
      %s413 = sphi 0, %s412
      %s429 = sphi 0, %s413
      %s433 = sphi 0, %s433
      %s435 = sphi 0, %s433
      %s436 = sphi 0, %s435
      %s450 = sphi 0, %s436
      %s454 = sphi 0, %s454
      %s456 = sphi 0, %s454
      %s457 = sphi 0, %s456
      %s471 = sphi 0, %s457
      %s475 = sphi 0, %s475
      %s477 = sphi 0, %s475
      %s478 = sphi 0, %s477
      %s492 = sphi 0, %s478
      %s496 = sphi 0, %s496
      %s498 = sphi 0, %s496
      %s499 = sphi 0, %s498
      %s513 = sphi 0, %s499
      %s517 = sphi 0, %s517
      %s519 = sphi 0, %s517
      %s520 = sphi 0, %s519
      %s534 = sphi 0, %s520
    $region4: #{bert_classifier_forward.1} parent=1 // loop_header_branch
      %32 = sbr.rel (%p30) target = $region8
    $region5: #{bert_classifier_forward.1} parent=1 // loop_body
      %s34 = ssub.s32 %s29, 1
      %s35 = ssub.s32 %s29, 2
      %s36 = sadd.s32 %s29, 1
      %s38 = sadd.s32 %s37, 1
      %p41 = scmp.eq.s32.totalorder %s29, 1
      %p42 = scmp.ne.s32.totalorder %s37, %s39
      %p43 = scmp.eq.s32.totalorder %s29, 0
      %p44 = por %p42, %p43
      %p45 = scmp.ne.s32.totalorder %s37, %s39
      %p46 = scmp.eq.s32.totalorder %s34, 1
      %p47 = por %p45, %p46
      %p48 = scmp.ne.s32.totalorder %s39, %s40
      %p49 = scmp.eq.s32.totalorder %s34, 0
      %p50 = por %p48, %p49
      %p51 = scmp.ne.s32.totalorder %s39, %s40
      %p52 = scmp.eq.s32.totalorder %s35, 1
      %p53 = por %p51, %p52
      %p55 = scmp.ne.s32.totalorder %s40, %s54
      %p56 = scmp.eq.s32.totalorder %s35, 0
      %p57 = por %p55, %p56
      %s59 = sadd.s32 %s58, 1
      %p62 = scmp.eq.s32.totalorder %s29, 1
      %p63 = scmp.ne.s32.totalorder %s58, %s60
      %p64 = scmp.eq.s32.totalorder %s29, 0
      %p65 = por %p63, %p64
      %p66 = scmp.ne.s32.totalorder %s58, %s60
      %p67 = scmp.eq.s32.totalorder %s34, 1
      %p68 = por %p66, %p67
      %p69 = scmp.ne.s32.totalorder %s60, %s61
      %p70 = scmp.eq.s32.totalorder %s34, 0
      %p71 = por %p69, %p70
      %p72 = scmp.ne.s32.totalorder %s60, %s61
      %p73 = scmp.eq.s32.totalorder %s35, 1
      %p74 = por %p72, %p73
      %p76 = scmp.ne.s32.totalorder %s61, %s75
      %p77 = scmp.eq.s32.totalorder %s35, 0
      %p78 = por %p76, %p77
      %s80 = sadd.s32 %s79, 1
      %p83 = scmp.eq.s32.totalorder %s29, 1
      %p84 = scmp.ne.s32.totalorder %s79, %s81
      %p85 = scmp.eq.s32.totalorder %s29, 0
      %p86 = por %p84, %p85
      %p87 = scmp.ne.s32.totalorder %s79, %s81
      %p88 = scmp.eq.s32.totalorder %s34, 1
      %p89 = por %p87, %p88
      %p90 = scmp.ne.s32.totalorder %s81, %s82
      %p91 = scmp.eq.s32.totalorder %s34, 0
      %p92 = por %p90, %p91
      %p93 = scmp.ne.s32.totalorder %s81, %s82
      %p94 = scmp.eq.s32.totalorder %s35, 1
      %p95 = por %p93, %p94
      %p97 = scmp.ne.s32.totalorder %s82, %s96
      %p98 = scmp.eq.s32.totalorder %s35, 0
      %p99 = por %p97, %p98
      %s101 = sadd.s32 %s100, 1
      %p104 = scmp.eq.s32.totalorder %s29, 1
      %p105 = scmp.ne.s32.totalorder %s100, %s102
      %p106 = scmp.eq.s32.totalorder %s29, 0
      %p107 = por %p105, %p106
      %p108 = scmp.ne.s32.totalorder %s100, %s102
      %p109 = scmp.eq.s32.totalorder %s34, 1
      %p110 = por %p108, %p109
      %p111 = scmp.ne.s32.totalorder %s102, %s103
      %p112 = scmp.eq.s32.totalorder %s34, 0
      %p113 = por %p111, %p112
      %p114 = scmp.ne.s32.totalorder %s102, %s103
      %p115 = scmp.eq.s32.totalorder %s35, 1
      %p116 = por %p114, %p115
      %p118 = scmp.ne.s32.totalorder %s103, %s117
      %p119 = scmp.eq.s32.totalorder %s35, 0
      %p120 = por %p118, %p119
      %s121 = ssub.s32 %s29, %s36
      %p122 = scmp.eq.s32.totalorder %s121, 0
      %s124 = sadd.s32 %s123, 1
      %s125 = scalar_select %p122, %s123, %s124
      %p128 = pneg %p122
      %p129 = scmp.eq.s32.totalorder %s29, 1
      %p130 = por %p128, %p129
      %p131 = scmp.ne.s32.totalorder %s123, %s126
      %p132 = scmp.eq.s32.totalorder %s29, 0
      %p133 = por %p131, %p132
      %p134 = scmp.ne.s32.totalorder %s123, %s126
      %p135 = scmp.eq.s32.totalorder %s34, 1
      %p136 = por %p134, %p135
      %p137 = scmp.ne.s32.totalorder %s126, %s127
      %p138 = scmp.eq.s32.totalorder %s34, 0
      %p139 = por %p137, %p138
      %p140 = scmp.ne.s32.totalorder %s126, %s127
      %p141 = scmp.eq.s32.totalorder %s35, 1
      %p142 = por %p140, %p141
      %p144 = scmp.ne.s32.totalorder %s127, %s143
      %p145 = scmp.eq.s32.totalorder %s35, 0
      %p146 = por %p144, %p145
      %s147 = ssub.s32 %s29, %s36
      %p148 = scmp.eq.s32.totalorder %s147, 0
      %s150 = sadd.s32 %s149, 1
      %s151 = scalar_select %p148, %s149, %s150
      %p154 = pneg %p148
      %p155 = scmp.eq.s32.totalorder %s29, 1
      %p156 = por %p154, %p155
      %p157 = scmp.ne.s32.totalorder %s149, %s152
      %p158 = scmp.eq.s32.totalorder %s29, 0
      %p159 = por %p157, %p158
      %p160 = scmp.ne.s32.totalorder %s149, %s152
      %p161 = scmp.eq.s32.totalorder %s34, 1
      %p162 = por %p160, %p161
      %p163 = scmp.ne.s32.totalorder %s152, %s153
      %p164 = scmp.eq.s32.totalorder %s34, 0
      %p165 = por %p163, %p164
      %p166 = scmp.ne.s32.totalorder %s152, %s153
      %p167 = scmp.eq.s32.totalorder %s35, 1
      %p168 = por %p166, %p167
      %p170 = scmp.ne.s32.totalorder %s153, %s169
      %p171 = scmp.eq.s32.totalorder %s35, 0
      %p172 = por %p170, %p171
      %s173 = ssub.s32 %s29, %s36
      %p174 = scmp.eq.s32.totalorder %s173, 0
      %s176 = sadd.s32 %s175, 1
      %s177 = scalar_select %p174, %s175, %s176
      %p180 = pneg %p174
      %p181 = scmp.eq.s32.totalorder %s29, 1
      %p182 = por %p180, %p181
      %p183 = scmp.ne.s32.totalorder %s175, %s178
      %p184 = scmp.eq.s32.totalorder %s29, 0
      %p185 = por %p183, %p184
      %p186 = scmp.ne.s32.totalorder %s175, %s178
      %p187 = scmp.eq.s32.totalorder %s34, 1
      %p188 = por %p186, %p187
      %p189 = scmp.ne.s32.totalorder %s178, %s179
      %p190 = scmp.eq.s32.totalorder %s34, 0
      %p191 = por %p189, %p190
      %p192 = scmp.ne.s32.totalorder %s178, %s179
      %p193 = scmp.eq.s32.totalorder %s35, 1
      %p194 = por %p192, %p193
      %p196 = scmp.ne.s32.totalorder %s179, %s195
      %p197 = scmp.eq.s32.totalorder %s35, 0
      %p198 = por %p196, %p197
      %s199 = ssub.s32 %s29, %s36
      %p200 = scmp.eq.s32.totalorder %s199, 0
      %s202 = sadd.s32 %s201, 1
      %s203 = scalar_select %p200, %s201, %s202
      %p206 = pneg %p200
      %p207 = scmp.eq.s32.totalorder %s29, 1
      %p208 = por %p206, %p207
      %p209 = scmp.ne.s32.totalorder %s201, %s204
      %p210 = scmp.eq.s32.totalorder %s29, 0
      %p211 = por %p209, %p210
      %p212 = scmp.ne.s32.totalorder %s201, %s204
      %p213 = scmp.eq.s32.totalorder %s34, 1
      %p214 = por %p212, %p213
      %p215 = scmp.ne.s32.totalorder %s204, %s205
      %p216 = scmp.eq.s32.totalorder %s34, 0
      %p217 = por %p215, %p216
      %p218 = scmp.ne.s32.totalorder %s204, %s205
      %p219 = scmp.eq.s32.totalorder %s35, 1
      %p220 = por %p218, %p219
      %p222 = scmp.ne.s32.totalorder %s205, %s221
      %p223 = scmp.eq.s32.totalorder %s35, 0
      %p224 = por %p222, %p223
      %s225 = ssub.s32 %s29, %s36
      %p226 = scmp.eq.s32.totalorder %s225, 0
      %s228 = sadd.s32 %s227, 1
      %s229 = scalar_select %p226, %s227, %s228
      %p232 = pneg %p226
      %p233 = scmp.eq.s32.totalorder %s29, 1
      %p234 = por %p232, %p233
      %p235 = scmp.ne.s32.totalorder %s227, %s230
      %p236 = scmp.eq.s32.totalorder %s29, 0
      %p237 = por %p235, %p236
      %p238 = scmp.ne.s32.totalorder %s227, %s230
      %p239 = scmp.eq.s32.totalorder %s34, 1
      %p240 = por %p238, %p239
      %p241 = scmp.ne.s32.totalorder %s230, %s231
      %p242 = scmp.eq.s32.totalorder %s34, 0
      %p243 = por %p241, %p242
      %p244 = scmp.ne.s32.totalorder %s230, %s231
      %p245 = scmp.eq.s32.totalorder %s35, 1
      %p246 = por %p244, %p245
      %p248 = scmp.ne.s32.totalorder %s231, %s247
      %p249 = scmp.eq.s32.totalorder %s35, 0
      %p250 = por %p248, %p249
      %s251 = ssub.s32 %s29, %s36
      %p252 = scmp.eq.s32.totalorder %s251, 0
      %s254 = sadd.s32 %s253, 1
      %s255 = scalar_select %p252, %s253, %s254
      %p258 = pneg %p252
      %p259 = scmp.eq.s32.totalorder %s29, 1
      %p260 = por %p258, %p259
      %p261 = scmp.ne.s32.totalorder %s253, %s256
      %p262 = scmp.eq.s32.totalorder %s29, 0
      %p263 = por %p261, %p262
      %p264 = scmp.ne.s32.totalorder %s253, %s256
      %p265 = scmp.eq.s32.totalorder %s34, 1
      %p266 = por %p264, %p265
      %p267 = scmp.ne.s32.totalorder %s256, %s257
      %p268 = scmp.eq.s32.totalorder %s34, 0
      %p269 = por %p267, %p268
      %p270 = scmp.ne.s32.totalorder %s256, %s257
      %p271 = scmp.eq.s32.totalorder %s35, 1
      %p272 = por %p270, %p271
      %p274 = scmp.ne.s32.totalorder %s257, %s273
      %p275 = scmp.eq.s32.totalorder %s35, 0
      %p276 = por %p274, %p275
      %s277 = ssub.s32 %s29, %s36
      %p278 = scmp.eq.s32.totalorder %s277, 0
      %s280 = sadd.s32 %s279, 1
      %s281 = scalar_select %p278, %s279, %s280
      %p284 = pneg %p278
      %p285 = scmp.eq.s32.totalorder %s29, 1
      %p286 = por %p284, %p285
      %p287 = scmp.ne.s32.totalorder %s279, %s282
      %p288 = scmp.eq.s32.totalorder %s29, 0
      %p289 = por %p287, %p288
      %p290 = scmp.ne.s32.totalorder %s279, %s282
      %p291 = scmp.eq.s32.totalorder %s34, 1
      %p292 = por %p290, %p291
      %p293 = scmp.ne.s32.totalorder %s282, %s283
      %p294 = scmp.eq.s32.totalorder %s34, 0
      %p295 = por %p293, %p294
      %p296 = scmp.ne.s32.totalorder %s282, %s283
      %p297 = scmp.eq.s32.totalorder %s35, 1
      %p298 = por %p296, %p297
      %p300 = scmp.ne.s32.totalorder %s283, %s299
      %p301 = scmp.eq.s32.totalorder %s35, 0
      %p302 = por %p300, %p301
      %s303 = ssub.s32 %s29, %s36
      %p304 = scmp.eq.s32.totalorder %s303, 0
      %s306 = sadd.s32 %s305, 1
      %s307 = scalar_select %p304, %s305, %s306
      %p310 = pneg %p304
      %p311 = scmp.eq.s32.totalorder %s29, 1
      %p312 = por %p310, %p311
      %p313 = scmp.ne.s32.totalorder %s305, %s308
      %p314 = scmp.eq.s32.totalorder %s29, 0
      %p315 = por %p313, %p314
      %p316 = scmp.ne.s32.totalorder %s305, %s308
      %p317 = scmp.eq.s32.totalorder %s34, 1
      %p318 = por %p316, %p317
      %p319 = scmp.ne.s32.totalorder %s308, %s309
      %p320 = scmp.eq.s32.totalorder %s34, 0
      %p321 = por %p319, %p320
      %p322 = scmp.ne.s32.totalorder %s308, %s309
      %p323 = scmp.eq.s32.totalorder %s35, 1
      %p324 = por %p322, %p323
      %p326 = scmp.ne.s32.totalorder %s309, %s325
      %p327 = scmp.eq.s32.totalorder %s35, 0
      %p328 = por %p326, %p327
      %s329 = ssub.s32 %s29, %s36
      %p330 = scmp.eq.s32.totalorder %s329, 0
      %s332 = sadd.s32 %s331, 1
      %s333 = scalar_select %p330, %s331, %s332
      %p336 = pneg %p330
      %p337 = scmp.eq.s32.totalorder %s29, 1
      %p338 = por %p336, %p337
      %p339 = scmp.ne.s32.totalorder %s331, %s334
      %p340 = scmp.eq.s32.totalorder %s29, 0
      %p341 = por %p339, %p340
      %p342 = scmp.ne.s32.totalorder %s331, %s334
      %p343 = scmp.eq.s32.totalorder %s34, 1
      %p344 = por %p342, %p343
      %p345 = scmp.ne.s32.totalorder %s334, %s335
      %p346 = scmp.eq.s32.totalorder %s34, 0
      %p347 = por %p345, %p346
      %p348 = scmp.ne.s32.totalorder %s334, %s335
      %p349 = scmp.eq.s32.totalorder %s35, 1
      %p350 = por %p348, %p349
      %p352 = scmp.ne.s32.totalorder %s335, %s351
      %p353 = scmp.eq.s32.totalorder %s35, 0
      %p354 = por %p352, %p353
      %s355 = ssub.s32 %s29, %s36
      %p356 = scmp.eq.s32.totalorder %s355, 0
      %s358 = sadd.s32 %s357, 1
      %s359 = scalar_select %p356, %s357, %s358
      %p362 = pneg %p356
      %p363 = scmp.eq.s32.totalorder %s29, 1
      %p364 = por %p362, %p363
      %p365 = scmp.ne.s32.totalorder %s357, %s360
      %p366 = scmp.eq.s32.totalorder %s29, 0
      %p367 = por %p365, %p366
      %p368 = scmp.ne.s32.totalorder %s357, %s360
      %p369 = scmp.eq.s32.totalorder %s34, 1
      %p370 = por %p368, %p369
      %p371 = scmp.ne.s32.totalorder %s360, %s361
      %p372 = scmp.eq.s32.totalorder %s34, 0
      %p373 = por %p371, %p372
      %p374 = scmp.ne.s32.totalorder %s360, %s361
      %p375 = scmp.eq.s32.totalorder %s35, 1
      %p376 = por %p374, %p375
      %p378 = scmp.ne.s32.totalorder %s361, %s377
      %p379 = scmp.eq.s32.totalorder %s35, 0
      %p380 = por %p378, %p379
      %s381 = ssub.s32 %s29, %s36
      %p382 = scmp.eq.s32.totalorder %s381, 0
      %s384 = sadd.s32 %s383, 1
      %s385 = scalar_select %p382, %s383, %s384
      %p388 = pneg %p382
      %p389 = scmp.eq.s32.totalorder %s29, 1
      %p390 = por %p388, %p389
      %p391 = scmp.ne.s32.totalorder %s383, %s386
      %p392 = scmp.eq.s32.totalorder %s29, 0
      %p393 = por %p391, %p392
      %p394 = scmp.ne.s32.totalorder %s383, %s386
      %p395 = scmp.eq.s32.totalorder %s34, 1
      %p396 = por %p394, %p395
      %p397 = scmp.ne.s32.totalorder %s386, %s387
      %p398 = scmp.eq.s32.totalorder %s34, 0
      %p399 = por %p397, %p398
      %p400 = scmp.ne.s32.totalorder %s386, %s387
      %p401 = scmp.eq.s32.totalorder %s35, 1
      %p402 = por %p400, %p401
      %p404 = scmp.ne.s32.totalorder %s387, %s403
      %p405 = scmp.eq.s32.totalorder %s35, 0
      %p406 = por %p404, %p405
      %s407 = ssub.s32 %s29, %s36
      %p408 = scmp.eq.s32.totalorder %s407, 0
      %s410 = sadd.s32 %s409, 1
      %s411 = scalar_select %p408, %s409, %s410
      %p414 = pneg %p408
      %p415 = scmp.eq.s32.totalorder %s29, 1
      %p416 = por %p414, %p415
      %p417 = scmp.ne.s32.totalorder %s409, %s412
      %p418 = scmp.eq.s32.totalorder %s29, 0
      %p419 = por %p417, %p418
      %p420 = scmp.ne.s32.totalorder %s409, %s412
      %p421 = scmp.eq.s32.totalorder %s34, 1
      %p422 = por %p420, %p421
      %p423 = scmp.ne.s32.totalorder %s412, %s413
      %p424 = scmp.eq.s32.totalorder %s34, 0
      %p425 = por %p423, %p424
      %p426 = scmp.ne.s32.totalorder %s412, %s413
      %p427 = scmp.eq.s32.totalorder %s35, 1
      %p428 = por %p426, %p427
      %p430 = scmp.ne.s32.totalorder %s413, %s429
      %p431 = scmp.eq.s32.totalorder %s35, 0
      %p432 = por %p430, %p431
      %s434 = sadd.s32 %s433, 1
      %p437 = scmp.eq.s32.totalorder %s29, 1
      %p438 = scmp.ne.s32.totalorder %s433, %s435
      %p439 = scmp.eq.s32.totalorder %s29, 0
      %p440 = por %p438, %p439
      %p441 = scmp.ne.s32.totalorder %s433, %s435
      %p442 = scmp.eq.s32.totalorder %s34, 1
      %p443 = por %p441, %p442
      %p444 = scmp.ne.s32.totalorder %s435, %s436
      %p445 = scmp.eq.s32.totalorder %s34, 0
      %p446 = por %p444, %p445
      %p447 = scmp.ne.s32.totalorder %s435, %s436
      %p448 = scmp.eq.s32.totalorder %s35, 1
      %p449 = por %p447, %p448
      %p451 = scmp.ne.s32.totalorder %s436, %s450
      %p452 = scmp.eq.s32.totalorder %s35, 0
      %p453 = por %p451, %p452
      %s455 = sadd.s32 %s454, 1
      %p458 = scmp.eq.s32.totalorder %s29, 1
      %p459 = scmp.ne.s32.totalorder %s454, %s456
      %p460 = scmp.eq.s32.totalorder %s29, 0
      %p461 = por %p459, %p460
      %p462 = scmp.ne.s32.totalorder %s454, %s456
      %p463 = scmp.eq.s32.totalorder %s34, 1
      %p464 = por %p462, %p463
      %p465 = scmp.ne.s32.totalorder %s456, %s457
      %p466 = scmp.eq.s32.totalorder %s34, 0
      %p467 = por %p465, %p466
      %p468 = scmp.ne.s32.totalorder %s456, %s457
      %p469 = scmp.eq.s32.totalorder %s35, 1
      %p470 = por %p468, %p469
      %p472 = scmp.ne.s32.totalorder %s457, %s471
      %p473 = scmp.eq.s32.totalorder %s35, 0
      %p474 = por %p472, %p473
      %s476 = sadd.s32 %s475, 1
      %p479 = scmp.eq.s32.totalorder %s29, 1
      %p480 = scmp.ne.s32.totalorder %s475, %s477
      %p481 = scmp.eq.s32.totalorder %s29, 0
      %p482 = por %p480, %p481
      %p483 = scmp.ne.s32.totalorder %s475, %s477
      %p484 = scmp.eq.s32.totalorder %s34, 1
      %p485 = por %p483, %p484
      %p486 = scmp.ne.s32.totalorder %s477, %s478
      %p487 = scmp.eq.s32.totalorder %s34, 0
      %p488 = por %p486, %p487
      %p489 = scmp.ne.s32.totalorder %s477, %s478
      %p490 = scmp.eq.s32.totalorder %s35, 1
      %p491 = por %p489, %p490
      %p493 = scmp.ne.s32.totalorder %s478, %s492
      %p494 = scmp.eq.s32.totalorder %s35, 0
      %p495 = por %p493, %p494
      %s497 = sadd.s32 %s496, 1
      %p500 = scmp.eq.s32.totalorder %s29, 1
      %p501 = scmp.ne.s32.totalorder %s496, %s498
      %p502 = scmp.eq.s32.totalorder %s29, 0
      %p503 = por %p501, %p502
      %p504 = scmp.ne.s32.totalorder %s496, %s498
      %p505 = scmp.eq.s32.totalorder %s34, 1
      %p506 = por %p504, %p505
      %p507 = scmp.ne.s32.totalorder %s498, %s499
      %p508 = scmp.eq.s32.totalorder %s34, 0
      %p509 = por %p507, %p508
      %p510 = scmp.ne.s32.totalorder %s498, %s499
      %p511 = scmp.eq.s32.totalorder %s35, 1
      %p512 = por %p510, %p511
      %p514 = scmp.ne.s32.totalorder %s499, %s513
      %p515 = scmp.eq.s32.totalorder %s35, 0
      %p516 = por %p514, %p515
      %s518 = sadd.s32 %s517, 1
      %p521 = scmp.eq.s32.totalorder %s29, 1
      %p522 = scmp.ne.s32.totalorder %s517, %s519
      %p523 = scmp.eq.s32.totalorder %s29, 0
      %p524 = por %p522, %p523
      %p525 = scmp.ne.s32.totalorder %s517, %s519
      %p526 = scmp.eq.s32.totalorder %s34, 1
      %p527 = por %p525, %p526
      %p528 = scmp.ne.s32.totalorder %s519, %s520
      %p529 = scmp.eq.s32.totalorder %s34, 0
      %p530 = por %p528, %p529
      %p531 = scmp.ne.s32.totalorder %s519, %s520
      %p532 = scmp.eq.s32.totalorder %s35, 1
      %p533 = por %p531, %p532
      %p535 = scmp.ne.s32.totalorder %s520, %s534
      %p536 = scmp.eq.s32.totalorder %s35, 0
      %p537 = por %p535, %p536
      %p538 = scmp.le.s32.totalorder 1, %s29
      %p539 = scmp.lt.s32.totalorder %s29, 3
      %p540 = pnand %p538, %p539
      %p541 = pneg %p540
      // Predicated region
      $region9: #{bert_classifier_forward.1} parent=5 // pred_check
        _
      $region10: #{bert_classifier_forward.1} parent=5 // pred_check_branch
        %543 = sbr.rel (%p540) target = $region12
      $region11: #{bert_classifier_forward.1} parent=5 // pred_region
        %s544 = ssub.s32 %s29, 1
        // Predicated region
        $region13: #{bert_classifier_forward.1} parent=11 // pred_check
          %p545 = pneg %p50
        $region14: #{bert_classifier_forward.1} parent=11 // pred_check_branch
          %547 = sbr.rel (%p545) target = $region16
        $region15: #{bert_classifier_forward.1} parent=11 // pred_region
          _
        $region16: #{bert_classifier_forward.1} parent=11 // pred_fallthru
          _
        // Predicated region
        $region17: #{bert_classifier_forward.1} parent=11 // pred_check
          %p548 = pneg %p71
        $region18: #{bert_classifier_forward.1} parent=11 // pred_check_branch
          %550 = sbr.rel (%p548) target = $region20
        $region19: #{bert_classifier_forward.1} parent=11 // pred_region
          _
        $region20: #{bert_classifier_forward.1} parent=11 // pred_fallthru
          _
        // Predicated region
        $region21: #{bert_classifier_forward.1} parent=11 // pred_check
          %p551 = pneg %p92
        $region22: #{bert_classifier_forward.1} parent=11 // pred_check_branch
          %553 = sbr.rel (%p551) target = $region24
        $region23: #{bert_classifier_forward.1} parent=11 // pred_region
          %s555 = ssub.s32 16, 16
          %556 = vsyncadd [#allocation4], %s555
          %s558 = sshll.u32 [#allocation3], 4
          %s559 = int_to_ptr.vmem [resolvable:$true] %s558
          %561 = dma.hbm_to_vmem [thread:$0]  %s2, 16, %s559, [#allocation4]
        $region24: #{bert_classifier_forward.1} parent=11 // pred_fallthru
          _
        // Predicated region
        $region25: #{bert_classifier_forward.1} parent=11 // pred_check
          %p562 = pneg %p113
        $region26: #{bert_classifier_forward.1} parent=11 // pred_check_branch
          %564 = sbr.rel (%p562) target = $region28
        $region27: #{bert_classifier_forward.1} parent=11 // pred_region
          %s566 = ssub.s32 16, 16
          %567 = vsyncadd [#allocation6], %s566
          %s569 = sshll.u32 [#allocation5], 4
          %s570 = int_to_ptr.vmem [resolvable:$true] %s569
          %572 = dma.hbm_to_vmem [thread:$0]  %s3, 16, %s570, [#allocation6]
        $region28: #{bert_classifier_forward.1} parent=11 // pred_fallthru
          _
        // Predicated region
        $region29: #{bert_classifier_forward.1} parent=11 // pred_check
          %p573 = pneg %p446
        $region30: #{bert_classifier_forward.1} parent=11 // pred_check_branch
          %575 = sbr.rel (%p573) target = $region32
        $region31: #{bert_classifier_forward.1} parent=11 // pred_region
          _
        $region32: #{bert_classifier_forward.1} parent=11 // pred_fallthru
          _
        // Predicated region
        $region33: #{bert_classifier_forward.1} parent=11 // pred_check
          %p576 = pneg %p467
        $region34: #{bert_classifier_forward.1} parent=11 // pred_check_branch
          %578 = sbr.rel (%p576) target = $region36
        $region35: #{bert_classifier_forward.1} parent=11 // pred_region
          %s580 = ssub.s32 16, 16
          %581 = vsyncadd [#allocation6], %s580
          %s583 = sshll.u32 [#allocation14], 4
          %s584 = int_to_ptr.vmem [resolvable:$true] %s583
          %586 = dma.hbm_to_vmem [thread:$0]  %s17, 16, %s584, [#allocation6]
        $region36: #{bert_classifier_forward.1} parent=11 // pred_fallthru
          _
        // Predicated region
        $region37: #{bert_classifier_forward.1} parent=11 // pred_check
          %p587 = pneg %p488
        $region38: #{bert_classifier_forward.1} parent=11 // pred_check_branch
          %589 = sbr.rel (%p587) target = $region40
        $region39: #{bert_classifier_forward.1} parent=11 // pred_region
          _
        $region40: #{bert_classifier_forward.1} parent=11 // pred_fallthru
          _
        // Predicated region
        $region41: #{bert_classifier_forward.1} parent=11 // pred_check
          %p590 = pneg %p509
        $region42: #{bert_classifier_forward.1} parent=11 // pred_check_branch
          %592 = sbr.rel (%p590) target = $region44
        $region43: #{bert_classifier_forward.1} parent=11 // pred_region
          %s594 = ssub.s32 16, 16
          %595 = vsyncadd [#allocation16], %s594
          %s597 = sshll.u32 [#allocation15], 4
          %s598 = int_to_ptr.vmem [resolvable:$true] %s597
          %600 = dma.hbm_to_vmem [thread:$0]  %s19, 16, %s598, [#allocation16]
        $region44: #{bert_classifier_forward.1} parent=11 // pred_fallthru
          _
      $region12: #{bert_classifier_forward.1} parent=5 // pred_fallthru
        _
      %p601 = scmp.lt.s32.totalorder %s29, 2
      // Predicated region
      $region45: #{bert_classifier_forward.1} parent=5 // pred_check
        %p602 = pneg %p601
      $region46: #{bert_classifier_forward.1} parent=5 // pred_check_branch
        %604 = sbr.rel (%p602) target = $region48
      $region47: #{bert_classifier_forward.1} parent=5 // pred_region
        // Predicated region
        $region49: #{bert_classifier_forward.1} parent=47 // pred_check
          %p605 = pneg %p133
        $region50: #{bert_classifier_forward.1} parent=47 // pred_check_branch
          %607 = sbr.rel (%p605) target = $region52
        $region51: #{bert_classifier_forward.1} parent=47 // pred_region
          %s608 = sand.u32 %s29, 1
          %s609 = scalar_lea.sflag [#allocation4], %s608
          %s610 = sand.u32 %s123, 1
          %s611 = smul.addr %s610, 192
          %s612 = scalar_lea.vmem [#allocation7], %s611
          %s614 = ssub.s32 3072, 3072
          %615 = vsyncadd %s609, %s614
          %s616 = smul.addr %s29, 48
          %s617 = smul.addr %s616, 64
          %s618 = scalar_lea.hbm %s4, %s617
          %s619 = sshll.u32 %s612, 4
          %s620 = int_to_ptr.vmem [resolvable:$true] %s619
          %625 = dma.hbm_to_vmem [thread:$0]  %s618, 3072, %s620, %s609, 192, 192, 12
        $region52: #{bert_classifier_forward.1} parent=47 // pred_fallthru
          _
        // Predicated region
        $region53: #{bert_classifier_forward.1} parent=47 // pred_check
          %p626 = pneg %p159
        $region54: #{bert_classifier_forward.1} parent=47 // pred_check_branch
          %628 = sbr.rel (%p626) target = $region56
        $region55: #{bert_classifier_forward.1} parent=47 // pred_region
          %p629 = scmp.lt.s32.totalorder %s29, 1
          %s630 = scalar_select %p629, %s29, 1
          %s631 = smul.addr %s630, 3
          %s632 = scalar_lea.vmem %s5, %s631
        $region56: #{bert_classifier_forward.1} parent=47 // pred_fallthru
          _
        // Predicated region
        $region57: #{bert_classifier_forward.1} parent=47 // pred_check
          %p633 = pneg %p185
        $region58: #{bert_classifier_forward.1} parent=47 // pred_check_branch
          %635 = sbr.rel (%p633) target = $region60
        $region59: #{bert_classifier_forward.1} parent=47 // pred_region
          %p636 = scmp.lt.s32.totalorder %s29, 1
          %s637 = scalar_select %p636, %s29, 1
          %s638 = smul.addr %s637, 16
          %s639 = smul.addr %s638, 4
          %s640 = scalar_lea.vmem %s6, %s639
        $region60: #{bert_classifier_forward.1} parent=47 // pred_fallthru
          _
        // Predicated region
        $region61: #{bert_classifier_forward.1} parent=47 // pred_check
          %p641 = pneg %p211
        $region62: #{bert_classifier_forward.1} parent=47 // pred_check_branch
          %643 = sbr.rel (%p641) target = $region64
        $region63: #{bert_classifier_forward.1} parent=47 // pred_region
          %p644 = scmp.lt.s32.totalorder %s29, 1
          %s645 = scalar_select %p644, %s29, 1
          %s646 = scalar_lea.vmem %s7, %s645
        $region64: #{bert_classifier_forward.1} parent=47 // pred_fallthru
          _
        // Predicated region
        $region65: #{bert_classifier_forward.1} parent=47 // pred_check
          %p647 = pneg %p237
        $region66: #{bert_classifier_forward.1} parent=47 // pred_check_branch
          %649 = sbr.rel (%p647) target = $region68
        $region67: #{bert_classifier_forward.1} parent=47 // pred_region
          %s650 = sand.u32 %s29, 1
          %s651 = scalar_lea.sflag [#allocation4], %s650
          %s652 = sand.u32 %s227, 1
          %s653 = scalar_lea.vmem [#allocation8], %s652
          %s655 = ssub.s32 16, 16
          %656 = vsyncadd %s651, %s655
          %s657 = smul.addr %s29, 16
          %s658 = scalar_lea.hbm %s8, %s657
          %s660 = sshll.u32 %s653, 4
          %s661 = int_to_ptr.vmem [resolvable:$true] %s660
          %663 = dma.hbm_to_vmem [thread:$0]  %s658, 16, %s661, %s651
        $region68: #{bert_classifier_forward.1} parent=47 // pred_fallthru
          _
        // Predicated region
        $region69: #{bert_classifier_forward.1} parent=47 // pred_check
          %p664 = pneg %p263
        $region70: #{bert_classifier_forward.1} parent=47 // pred_check_branch
          %666 = sbr.rel (%p664) target = $region72
        $region71: #{bert_classifier_forward.1} parent=47 // pred_region
          %s667 = sand.u32 %s29, 1
          %s668 = scalar_lea.sflag [#allocation4], %s667
          %s669 = sand.u32 %s253, 1
          %s670 = scalar_lea.vmem [#allocation9], %s669
          %s672 = ssub.s32 16, 16
          %673 = vsyncadd %s668, %s672
          %s674 = smul.addr %s29, 16
          %s675 = scalar_lea.hbm %s9, %s674
          %s677 = sshll.u32 %s670, 4
          %s678 = int_to_ptr.vmem [resolvable:$true] %s677
          %680 = dma.hbm_to_vmem [thread:$0]  %s675, 16, %s678, %s668
        $region72: #{bert_classifier_forward.1} parent=47 // pred_fallthru
          _
        // Predicated region
        $region73: #{bert_classifier_forward.1} parent=47 // pred_check
          %p681 = pneg %p289
        $region74: #{bert_classifier_forward.1} parent=47 // pred_check_branch
          %683 = sbr.rel (%p681) target = $region76
        $region75: #{bert_classifier_forward.1} parent=47 // pred_region
          %s684 = sand.u32 %s29, 1
          %s685 = scalar_lea.sflag [#allocation4], %s684
          %s686 = sand.u32 %s279, 1
          %s687 = smul.addr %s686, 128
          %s688 = scalar_lea.vmem [#allocation10], %s687
          %s690 = ssub.s32 2048, 2048
          %691 = vsyncadd %s685, %s690
          %s692 = smul.addr %s29, 32
          %s693 = smul.addr %s692, 64
          %s694 = scalar_lea.hbm %s10, %s693
          %s695 = sshll.u32 %s688, 4
          %s696 = int_to_ptr.vmem [resolvable:$true] %s695
          %701 = dma.hbm_to_vmem [thread:$0]  %s694, 2048, %s696, %s685, 128, 128, 8
        $region76: #{bert_classifier_forward.1} parent=47 // pred_fallthru
          _
        // Predicated region
        $region77: #{bert_classifier_forward.1} parent=47 // pred_check
          %p702 = pneg %p315
        $region78: #{bert_classifier_forward.1} parent=47 // pred_check_branch
          %704 = sbr.rel (%p702) target = $region80
        $region79: #{bert_classifier_forward.1} parent=47 // pred_region
          %p705 = scmp.lt.s32.totalorder %s29, 1
          %s706 = scalar_select %p705, %s29, 1
          %s707 = smul.addr %s706, 2
          %s708 = scalar_lea.vmem %s11, %s707
        $region80: #{bert_classifier_forward.1} parent=47 // pred_fallthru
          _
        // Predicated region
        $region81: #{bert_classifier_forward.1} parent=47 // pred_check
          %p709 = pneg %p341
        $region82: #{bert_classifier_forward.1} parent=47 // pred_check_branch
          %711 = sbr.rel (%p709) target = $region84
        $region83: #{bert_classifier_forward.1} parent=47 // pred_region
          %s712 = sand.u32 %s29, 1
          %s713 = scalar_lea.sflag [#allocation4], %s712
          %s714 = sand.u32 %s331, 1
          %s715 = smul.addr %s714, 128
          %s716 = scalar_lea.vmem [#allocation11], %s715
          %s718 = ssub.s32 2048, 2048
          %719 = vsyncadd %s713, %s718
          %s720 = smul.addr %s29, 32
          %s721 = smul.addr %s720, 64
          %s722 = scalar_lea.hbm %s12, %s721
          %s723 = sshll.u32 %s716, 4
          %s724 = int_to_ptr.vmem [resolvable:$true] %s723
          %729 = dma.hbm_to_vmem [thread:$0]  %s722, 2048, %s724, %s713, 64, 64, 4
        $region84: #{bert_classifier_forward.1} parent=47 // pred_fallthru
          _
        // Predicated region
        $region85: #{bert_classifier_forward.1} parent=47 // pred_check
          %p730 = pneg %p367
        $region86: #{bert_classifier_forward.1} parent=47 // pred_check_branch
          %732 = sbr.rel (%p730) target = $region88
        $region87: #{bert_classifier_forward.1} parent=47 // pred_region
          %p733 = scmp.lt.s32.totalorder %s29, 1
          %s734 = scalar_select %p733, %s29, 1
          %s735 = scalar_lea.vmem %s13, %s734
        $region88: #{bert_classifier_forward.1} parent=47 // pred_fallthru
          _
        // Predicated region
        $region89: #{bert_classifier_forward.1} parent=47 // pred_check
          %p736 = pneg %p393
        $region90: #{bert_classifier_forward.1} parent=47 // pred_check_branch
          %738 = sbr.rel (%p736) target = $region92
        $region91: #{bert_classifier_forward.1} parent=47 // pred_region
          %s739 = sand.u32 %s29, 1
          %s740 = scalar_lea.sflag [#allocation4], %s739
          %s741 = sand.u32 %s383, 1
          %s742 = scalar_lea.vmem [#allocation12], %s741
          %s744 = ssub.s32 16, 16
          %745 = vsyncadd %s740, %s744
          %s746 = smul.addr %s29, 16
          %s747 = scalar_lea.hbm %s14, %s746
          %s749 = sshll.u32 %s742, 4
          %s750 = int_to_ptr.vmem [resolvable:$true] %s749
          %752 = dma.hbm_to_vmem [thread:$0]  %s747, 16, %s750, %s740
        $region92: #{bert_classifier_forward.1} parent=47 // pred_fallthru
          _
        // Predicated region
        $region93: #{bert_classifier_forward.1} parent=47 // pred_check
          %p753 = pneg %p419
        $region94: #{bert_classifier_forward.1} parent=47 // pred_check_branch
          %755 = sbr.rel (%p753) target = $region96
        $region95: #{bert_classifier_forward.1} parent=47 // pred_region
          %s756 = sand.u32 %s29, 1
          %s757 = scalar_lea.sflag [#allocation4], %s756
          %s758 = sand.u32 %s409, 1
          %s759 = scalar_lea.vmem [#allocation13], %s758
          %s761 = ssub.s32 16, 16
          %762 = vsyncadd %s757, %s761
          %s763 = smul.addr %s29, 16
          %s764 = scalar_lea.hbm %s15, %s763
          %s766 = sshll.u32 %s759, 4
          %s767 = int_to_ptr.vmem [resolvable:$true] %s766
          %769 = dma.hbm_to_vmem [thread:$0]  %s764, 16, %s767, %s757
        $region96: #{bert_classifier_forward.1} parent=47 // pred_fallthru
          _
      $region48: #{bert_classifier_forward.1} parent=5 // pred_fallthru
        _
      %p770 = scmp.le.s32.totalorder 1, %s29
      %p771 = scmp.lt.s32.totalorder %s29, 3
      %p772 = pnand %p770, %p771
      %p773 = pneg %p772
      // Predicated region
      $region97: #{bert_classifier_forward.1} parent=5 // pred_check
        _
      $region98: #{bert_classifier_forward.1} parent=5 // pred_check_branch
        %775 = sbr.rel (%p772) target = $region100
      $region99: #{bert_classifier_forward.1} parent=5 // pred_region
        %s776 = ssub.s32 %s29, 1
        // Predicated region
        $region101: #{bert_classifier_forward.1} parent=99 // pred_check
          %p777 = pneg %p92
        $region102: #{bert_classifier_forward.1} parent=99 // pred_check_branch
          %779 = sbr.rel (%p777) target = $region104
        $region103: #{bert_classifier_forward.1} parent=99 // pred_region
          %780 = dma.done [#allocation4], 16
        $region104: #{bert_classifier_forward.1} parent=99 // pred_fallthru
          _
        // Predicated region
        $region105: #{bert_classifier_forward.1} parent=99 // pred_check
          %p781 = pneg %p113
        $region106: #{bert_classifier_forward.1} parent=99 // pred_check_branch
          %783 = sbr.rel (%p781) target = $region108
        $region107: #{bert_classifier_forward.1} parent=99 // pred_region
          %784 = dma.done [#allocation6], 16
        $region108: #{bert_classifier_forward.1} parent=99 // pred_fallthru
          _
        %s785 = sand.u32 %s34, 1
        %s786 = scalar_lea.sflag [#allocation4], %s785
        %s787 = sand.u32 %s126, 1
        %s788 = smul.addr %s787, 192
        %s789 = scalar_lea.vmem [#allocation7], %s788
        // Predicated region
        $region109: #{bert_classifier_forward.1} parent=99 // pred_check
          %p790 = pneg %p139
        $region110: #{bert_classifier_forward.1} parent=99 // pred_check_branch
          %792 = sbr.rel (%p790) target = $region112
        $region111: #{bert_classifier_forward.1} parent=99 // pred_region
          %793 = dma.done %s786, 3072
        $region112: #{bert_classifier_forward.1} parent=99 // pred_fallthru
          _
        %s794 = sand.u32 %s34, 1
        %s795 = scalar_lea.sflag [#allocation4], %s794
        %s796 = sand.u32 %s230, 1
        %s797 = scalar_lea.vmem [#allocation8], %s796
        // Predicated region
        $region113: #{bert_classifier_forward.1} parent=99 // pred_check
          %p798 = pneg %p243
        $region114: #{bert_classifier_forward.1} parent=99 // pred_check_branch
          %800 = sbr.rel (%p798) target = $region116
        $region115: #{bert_classifier_forward.1} parent=99 // pred_region
          %801 = dma.done %s795, 16
        $region116: #{bert_classifier_forward.1} parent=99 // pred_fallthru
          _
        %s802 = sand.u32 %s34, 1
        %s803 = scalar_lea.sflag [#allocation4], %s802
        %s804 = sand.u32 %s256, 1
        %s805 = scalar_lea.vmem [#allocation9], %s804
        // Predicated region
        $region117: #{bert_classifier_forward.1} parent=99 // pred_check
          %p806 = pneg %p269
        $region118: #{bert_classifier_forward.1} parent=99 // pred_check_branch
          %808 = sbr.rel (%p806) target = $region120
        $region119: #{bert_classifier_forward.1} parent=99 // pred_region
          %809 = dma.done %s803, 16
        $region120: #{bert_classifier_forward.1} parent=99 // pred_fallthru
          _
        %s810 = sand.u32 %s34, 1
        %s811 = scalar_lea.sflag [#allocation4], %s810
        %s812 = sand.u32 %s282, 1
        %s813 = smul.addr %s812, 128
        %s814 = scalar_lea.vmem [#allocation10], %s813
        // Predicated region
        $region121: #{bert_classifier_forward.1} parent=99 // pred_check
          %p815 = pneg %p295
        $region122: #{bert_classifier_forward.1} parent=99 // pred_check_branch
          %817 = sbr.rel (%p815) target = $region124
        $region123: #{bert_classifier_forward.1} parent=99 // pred_region
          %818 = dma.done %s811, 2048
        $region124: #{bert_classifier_forward.1} parent=99 // pred_fallthru
          _
        %s819 = sand.u32 %s34, 1
        %s820 = scalar_lea.sflag [#allocation4], %s819
        %s821 = sand.u32 %s334, 1
        %s822 = smul.addr %s821, 128
        %s823 = scalar_lea.vmem [#allocation11], %s822
        // Predicated region
        $region125: #{bert_classifier_forward.1} parent=99 // pred_check
          %p824 = pneg %p347
        $region126: #{bert_classifier_forward.1} parent=99 // pred_check_branch
          %826 = sbr.rel (%p824) target = $region128
        $region127: #{bert_classifier_forward.1} parent=99 // pred_region
          %827 = dma.done %s820, 2048
        $region128: #{bert_classifier_forward.1} parent=99 // pred_fallthru
          _
        %s828 = sand.u32 %s34, 1
        %s829 = scalar_lea.sflag [#allocation4], %s828
        %s830 = sand.u32 %s386, 1
        %s831 = scalar_lea.vmem [#allocation12], %s830
        // Predicated region
        $region129: #{bert_classifier_forward.1} parent=99 // pred_check
          %p832 = pneg %p399
        $region130: #{bert_classifier_forward.1} parent=99 // pred_check_branch
          %834 = sbr.rel (%p832) target = $region132
        $region131: #{bert_classifier_forward.1} parent=99 // pred_region
          %835 = dma.done %s829, 16
        $region132: #{bert_classifier_forward.1} parent=99 // pred_fallthru
          _
        %s836 = sand.u32 %s34, 1
        %s837 = scalar_lea.sflag [#allocation4], %s836
        %s838 = sand.u32 %s412, 1
        %s839 = scalar_lea.vmem [#allocation13], %s838
        // Predicated region
        $region133: #{bert_classifier_forward.1} parent=99 // pred_check
          %p840 = pneg %p425
        $region134: #{bert_classifier_forward.1} parent=99 // pred_check_branch
          %842 = sbr.rel (%p840) target = $region136
        $region135: #{bert_classifier_forward.1} parent=99 // pred_region
          %843 = dma.done %s837, 16
        $region136: #{bert_classifier_forward.1} parent=99 // pred_fallthru
          _
        // Predicated region
        $region137: #{bert_classifier_forward.1} parent=99 // pred_check
          %p844 = pneg %p467
        $region138: #{bert_classifier_forward.1} parent=99 // pred_check_branch
          %846 = sbr.rel (%p844) target = $region140
        $region139: #{bert_classifier_forward.1} parent=99 // pred_region
          %847 = dma.done [#allocation6], 16
        $region140: #{bert_classifier_forward.1} parent=99 // pred_fallthru
          _
        // Predicated region
        $region141: #{bert_classifier_forward.1} parent=99 // pred_check
          %p848 = pneg %p509
        $region142: #{bert_classifier_forward.1} parent=99 // pred_check_branch
          %850 = sbr.rel (%p848) target = $region144
        $region143: #{bert_classifier_forward.1} parent=99 // pred_region
          %851 = dma.done [#allocation16], 16
        $region144: #{bert_classifier_forward.1} parent=99 // pred_fallthru
          _
        %p852 = pneg %p50
        %p853 = pneg %p47
        %p854 = pneg %p71
        %p855 = pneg %p68
        %p856 = pneg %p92
        %p857 = pneg %p89
        %p858 = pneg %p113
        %p859 = pneg %p110
        %s860 = sand.u32 %s34, 1
        %s861 = scalar_lea.sflag [#allocation4], %s860
        %s862 = sand.u32 %s126, 1
        %s863 = smul.addr %s862, 192
        %s864 = scalar_lea.vmem [#allocation7], %s863
        %p865 = pneg %p139
        %p866 = pneg %p136
        %p867 = scmp.lt.s32.totalorder %s34, 1
        %s868 = scalar_select %p867, %s34, 1
        %s869 = smul.addr %s868, 3
        %s870 = scalar_lea.vmem %s5, %s869
        %p871 = pneg %p165
        %p872 = pneg %p162
        %p873 = scmp.lt.s32.totalorder %s34, 1
        %s874 = scalar_select %p873, %s34, 1
        %s875 = smul.addr %s874, 16
        %s876 = smul.addr %s875, 4
        %s877 = scalar_lea.vmem %s6, %s876
        %p878 = pneg %p191
        %p879 = pneg %p188
        %p880 = scmp.lt.s32.totalorder %s34, 1
        %s881 = scalar_select %p880, %s34, 1
        %s882 = scalar_lea.vmem %s7, %s881
        %p883 = pneg %p217
        %p884 = pneg %p214
        %s885 = sand.u32 %s34, 1
        %s886 = scalar_lea.sflag [#allocation4], %s885
        %s887 = sand.u32 %s230, 1
        %s888 = scalar_lea.vmem [#allocation8], %s887
        %p889 = pneg %p243
        %p890 = pneg %p240
        %s891 = sand.u32 %s34, 1
        %s892 = scalar_lea.sflag [#allocation4], %s891
        %s893 = sand.u32 %s256, 1
        %s894 = scalar_lea.vmem [#allocation9], %s893
        %p895 = pneg %p269
        %p896 = pneg %p266
        %s897 = sand.u32 %s34, 1
        %s898 = scalar_lea.sflag [#allocation4], %s897
        %s899 = sand.u32 %s282, 1
        %s900 = smul.addr %s899, 128
        %s901 = scalar_lea.vmem [#allocation10], %s900
        %p902 = pneg %p295
        %p903 = pneg %p292
        %p904 = scmp.lt.s32.totalorder %s34, 1
        %s905 = scalar_select %p904, %s34, 1
        %s906 = smul.addr %s905, 2
        %s907 = scalar_lea.vmem %s11, %s906
        %p908 = pneg %p321
        %p909 = pneg %p318
        %s910 = sand.u32 %s34, 1
        %s911 = scalar_lea.sflag [#allocation4], %s910
        %s912 = sand.u32 %s334, 1
        %s913 = smul.addr %s912, 128
        %s914 = scalar_lea.vmem [#allocation11], %s913
        %p915 = pneg %p347
        %p916 = pneg %p344
        %p917 = scmp.lt.s32.totalorder %s34, 1
        %s918 = scalar_select %p917, %s34, 1
        %s919 = scalar_lea.vmem %s13, %s918
        %p920 = pneg %p373
        %p921 = pneg %p370
        %s922 = sand.u32 %s34, 1
        %s923 = scalar_lea.sflag [#allocation4], %s922
        %s924 = sand.u32 %s386, 1
        %s925 = scalar_lea.vmem [#allocation12], %s924
        %p926 = pneg %p399
        %p927 = pneg %p396
        %s928 = sand.u32 %s34, 1
        %s929 = scalar_lea.sflag [#allocation4], %s928
        %s930 = sand.u32 %s412, 1
        %s931 = scalar_lea.vmem [#allocation13], %s930
        %p932 = pneg %p425
        %p933 = pneg %p422
        %p934 = pneg %p446
        %p935 = pneg %p443
        %p936 = pneg %p467
        %p937 = pneg %p464
        %p938 = pneg %p488
        %p939 = pneg %p485
        %p940 = pneg %p509
        %p941 = pneg %p506
        %p942 = pneg %p530
        %p943 = pneg %p527
        %p944 = scmp.lt.s32.totalorder %s34, 1
        %s945 = scalar_select %p944, %s34, 1
        %s946 = smul.addr %s945, 3
        %s947 = scalar_lea.vmem %s5, %s946
        %p948 = scmp.lt.s32.totalorder %s34, 1
        %s949 = scalar_select %p948, %s34, 1
        %s950 = smul.addr %s949, 16
        %s951 = smul.addr %s950, 4
        %s952 = scalar_lea.vmem %s6, %s951
        %p953 = scmp.lt.s32.totalorder %s34, 1
        %s954 = scalar_select %p953, %s34, 1
        %s955 = scalar_lea.vmem %s7, %s954
        %p956 = scmp.lt.s32.totalorder %s34, 1
        %s957 = scalar_select %p956, %s34, 1
        %s958 = smul.addr %s957, 2
        %s959 = scalar_lea.vmem %s11, %s958
        %p960 = scmp.lt.s32.totalorder %s34, 1
        %s961 = scalar_select %p960, %s34, 1
        %s962 = scalar_lea.vmem %s13, %s961
        %p964 = scmp.eq.s32.totalorder %s34, 0
        // Predicated region
        $region145: #{bert_classifier_forward.1} parent=99 // pred_check
          %p965 = pneg %p964
        $region146: #{bert_classifier_forward.1} parent=99 // pred_check_branch
          %967 = sbr.rel (%p965) target = $region148
        $region147: #{bert_classifier_forward.1} parent=99 // pred_region
          %v968 = vld [vmem:[%s0] sm:$0xf]
          %v969 = vld [vmem:[%s0 + $0x4] sm:$0xf]
          %v970 = vunpack.c.l.bf16 %v968
          %v971 = vunpack.c.l.bf16 %v969
          %v972 = vld [vmem:[#allocation3] sm:$0x1]
          %v973 = vld [vmem:[#allocation5] sm:$0x1]
          %974 = vadd.xlane.f32.xlu0 %v970
          %v975 = vpop.xlane.xlu0 %974
          %976 = vadd.xlane.f32.xlu0 %v971
          %v977 = vpop.xlane.xlu0 %976
          %v978 = vrcp.pop 128.0
          %v979 = vmul.f32 %v975, %v978
          %v980 = vmul.f32 %v977, %v978
          %v981 = vsub.f32 %v970, %v979
          %v982 = vsub.f32 %v971, %v980
          %v983 = vmul.f32 %v981, %v981
          %v984 = vmul.f32 %v982, %v982
          %985 = vadd.xlane.f32.xlu0 %v983
          %v986 = vpop.xlane.xlu0 %985
          %987 = vadd.xlane.f32.xlu0 %v984
          %v988 = vpop.xlane.xlu0 %987
          %v989 = vmul.f32 %v986, %v978
          %v990 = vmul.f32 %v988, %v978
          %v991 = vadd.f32 %v989, 1e-12
          %v992 = vadd.f32 %v990, 1e-12
          %v993 = vrsqrt.pop %v991
          %v994 = vrsqrt.pop %v992
          %v995 = vmul.f32 %v981, %v993
          %v996 = vmul.f32 %v982, %v994
          %v998 = vlaneseq
          %v999 = vshrl.u32 %v998, 7
          %v1000 = vsub.s32 0, %v999
          %v1001 = vrot.slane %v972, %v1000
          %v1003 = vmul.f32 %v995, %v1001
          %v1004 = vmul.f32 %v996, %v1001
          %v1006 = vlaneseq
          %v1007 = vshrl.u32 %v1006, 7
          %v1008 = vsub.s32 0, %v1007
          %v1009 = vrot.slane %v973, %v1008
          %v1011 = vadd.f32 %v1003, %v1009
          %v1012 = vadd.f32 %v1004, %v1009
          %v1013 = vpack.c.bf16 %v1012, %v1011
          %1014 = vst [vmem:[#allocation2] sm:$0xff] %v1013
        $region148: #{bert_classifier_forward.1} parent=99 // pred_fallthru
          _
        %v1015 = vld [vmem:[#allocation2] sm:$0xff]
        %v1016 = vunpack.c.l.bf16 %v1015
        %v1017 = vunpack.c.h.bf16 %v1015
        %v1018 = vld [vmem:[%s789] sm:$0xff]
        %v1019 = vld [vmem:[%s789 + $0x8] sm:$0xf]
        %v1020 = vld [vmem:[%s789 + $0xc] sm:$0xff]
        %v1021 = vld [vmem:[%s789 + $0x14] sm:$0xf]
        %v1022 = vld [vmem:[%s789 + $0x18] sm:$0xff]
        %v1023 = vld [vmem:[%s789 + $0x20] sm:$0xf]
        %v1024 = vld [vmem:[%s789 + $0x24] sm:$0xff]
        %v1025 = vld [vmem:[%s789 + $0x2c] sm:$0xf]
        %v1026 = vld [vmem:[%s789 + $0x30] sm:$0xff]
        %v1027 = vld [vmem:[%s789 + $0x38] sm:$0xf]
        %v1028 = vld [vmem:[%s789 + $0x3c] sm:$0xff]
        %v1029 = vld [vmem:[%s789 + $0x44] sm:$0xf]
        %v1030 = vld [vmem:[%s789 + $0x48] sm:$0xff]
        %v1031 = vld [vmem:[%s789 + $0x50] sm:$0xf]
        %v1032 = vld [vmem:[%s789 + $0x54] sm:$0xff]
        %v1033 = vld [vmem:[%s789 + $0x5c] sm:$0xf]
        %v1034 = vld [vmem:[%s789 + $0x60] sm:$0xff]
        %v1035 = vld [vmem:[%s789 + $0x68] sm:$0xf]
        %v1036 = vld [vmem:[%s789 + $0x6c] sm:$0xff]
        %v1037 = vld [vmem:[%s789 + $0x74] sm:$0xf]
        %v1038 = vld [vmem:[%s789 + $0x78] sm:$0xff]
        %v1039 = vld [vmem:[%s789 + $0x80] sm:$0xf]
        %v1040 = vld [vmem:[%s789 + $0x84] sm:$0xff]
        %v1041 = vld [vmem:[%s789 + $0x8c] sm:$0xf]
        %v1042 = vld [vmem:[%s789 + $0x90] sm:$0xff]
        %v1043 = vld [vmem:[%s789 + $0x98] sm:$0xf]
        %v1044 = vld [vmem:[%s789 + $0x9c] sm:$0xff]
        %v1045 = vld [vmem:[%s789 + $0xa4] sm:$0xf]
        %v1046 = vld [vmem:[%s789 + $0xa8] sm:$0xff]
        %v1047 = vld [vmem:[%s789 + $0xb0] sm:$0xf]
        %v1048 = vld [vmem:[%s789 + $0xb4] sm:$0xff]
        %v1049 = vld [vmem:[%s789 + $0xbc] sm:$0xf]
        %v1050 = vld [vmem:[%s947] sm:$0x7]
        %v1052 = vlaneseq
        %v1053 = vshrl.u32 %v1052, 7
        %v1054 = vsub.s32 0, %v1053
        %v1055 = vrot.slane %v1050, %v1054
        %v1056 = vlaneseq
        %v1057 = vshrl.u32 %v1056, 7
        %v1058 = vsub.s32 1, %v1057
        %v1059 = vrot.slane %v1050, %v1058
        %v1060 = vlaneseq
        %v1061 = vshrl.u32 %v1060, 7
        %v1062 = vsub.s32 2, %v1061
        %v1063 = vrot.slane %v1050, %v1062
        %v1099 = vunpack.c.l.b16 %v1018
        %v1100 = vunpack.c.h.b16 %v1018
        %v1101 = vunpack.c.l.b16 %v1019
        %v1102 = vunpack.c.l.b16 %v1020
        %v1103 = vunpack.c.h.b16 %v1020
        %v1104 = vunpack.c.l.b16 %v1021
        %v1105 = vunpack.c.l.b16 %v1022
        %v1106 = vunpack.c.h.b16 %v1022
        %v1107 = vunpack.c.l.b16 %v1023
        %v1108 = vunpack.c.l.b16 %v1024
        %v1109 = vunpack.c.h.b16 %v1024
        %v1110 = vunpack.c.l.b16 %v1025
        %v1111 = vunpack.c.l.b16 %v1026
        %v1112 = vunpack.c.h.b16 %v1026
        %v1113 = vunpack.c.l.b16 %v1027
        %v1114 = vunpack.c.l.b16 %v1028
        %v1115 = vunpack.c.h.b16 %v1028
        %v1116 = vunpack.c.l.b16 %v1029
        %v1117 = vunpack.c.l.b16 %v1030
        %v1118 = vunpack.c.h.b16 %v1030
        %v1119 = vunpack.c.l.b16 %v1031
        %v1120 = vunpack.c.l.b16 %v1032
        %v1121 = vunpack.c.h.b16 %v1032
        %v1122 = vunpack.c.l.b16 %v1033
        %v1123 = vunpack.c.l.b16 %v1034
        %v1124 = vunpack.c.h.b16 %v1034
        %v1125 = vunpack.c.l.b16 %v1035
        %v1126 = vunpack.c.l.b16 %v1036
        %v1127 = vunpack.c.h.b16 %v1036
        %v1128 = vunpack.c.l.b16 %v1037
        %v1129 = vunpack.c.l.b16 %v1038
        %v1130 = vunpack.c.h.b16 %v1038
        %v1131 = vunpack.c.l.b16 %v1039
        %v1132 = vunpack.c.l.b16 %v1040
        %v1133 = vunpack.c.h.b16 %v1040
        %v1134 = vunpack.c.l.b16 %v1041
        %v1135 = vunpack.c.l.b16 %v1042
        %v1136 = vunpack.c.h.b16 %v1042
        %v1137 = vunpack.c.l.b16 %v1043
        %v1138 = vunpack.c.l.b16 %v1044
        %v1139 = vunpack.c.h.b16 %v1044
        %v1140 = vunpack.c.l.b16 %v1045
        %v1141 = vunpack.c.l.b16 %v1046
        %v1142 = vunpack.c.h.b16 %v1046
        %v1143 = vunpack.c.l.b16 %v1047
        %v1144 = vunpack.c.l.b16 %v1048
        %v1145 = vunpack.c.h.b16 %v1048
        %v1146 = vunpack.c.l.b16 %v1049
        %v1147 = vpack.c.b16 %v1102, %v1099
        %v1148 = vpack.c.b16 %v1103, %v1100
        %v1149 = vpack.c.b16 %v1104, %v1101
        %v1150 = vpack.c.b16 %v1108, %v1105
        %v1151 = vpack.c.b16 %v1109, %v1106
        %v1152 = vpack.c.b16 %v1110, %v1107
        %v1153 = vpack.c.b16 %v1114, %v1111
        %v1154 = vpack.c.b16 %v1115, %v1112
        %v1155 = vpack.c.b16 %v1116, %v1113
        %v1156 = vpack.c.b16 %v1120, %v1117
        %v1157 = vpack.c.b16 %v1121, %v1118
        %v1158 = vpack.c.b16 %v1122, %v1119
        %v1159 = vpack.c.b16 %v1126, %v1123
        %v1160 = vpack.c.b16 %v1127, %v1124
        %v1161 = vpack.c.b16 %v1128, %v1125
        %v1162 = vpack.c.b16 %v1132, %v1129
        %v1163 = vpack.c.b16 %v1133, %v1130
        %v1164 = vpack.c.b16 %v1134, %v1131
        %v1165 = vpack.c.b16 %v1138, %v1135
        %v1166 = vpack.c.b16 %v1139, %v1136
        %v1167 = vpack.c.b16 %v1140, %v1137
        %v1168 = vpack.c.b16 %v1144, %v1141
        %v1169 = vpack.c.b16 %v1145, %v1142
        %v1170 = vpack.c.b16 %v1146, %v1143
        %1195 = vmatprep.subr.bf16.mxu0 %v1148
        %1196 = vmatpush1.bf16.msra.mxu0 %v1147
        %1197 = vmatprep.subr.bf16.mxu0 %v1151
        %1198 = vmatpush1.bf16.msra.mxu0 %v1150
        %1199 = vmatprep.subr.bf16.mxu0 %v1154
        %1200 = vmatpush1.bf16.msra.mxu0 %v1153
        %1201 = vmatprep.subr.bf16.mxu0 %v1157
        %1202 = vmatpush1.bf16.msra.mxu0 %v1156
        %1203 = vmatprep.subr.bf16.mxu0 %v1160
        %1204 = vmatpush1.bf16.msra.mxu0 %v1159
        %1205 = vmatprep.subr.bf16.mxu0 %v1163
        %1206 = vmatpush1.bf16.msra.mxu0 %v1162
        %1207 = vmatprep.subr.bf16.mxu0 %v1166
        %1208 = vmatpush1.bf16.msra.mxu0 %v1165
        %1209 = vmatprep.subr.bf16.mxu0 %v1169
        %1210 = vmatpush1.bf16.msra.mxu0 %v1168
        %1211 = vmatprep.subr.bf16.mxu0 0
        %1212 = vmatpush1.bf16.msra.mxu0 0
        %1213 = vmatprep.subr.bf16.mxu0 0
        %1214 = vmatpush1.bf16.msra.mxu0 0
        %1215 = vmatprep.subr.bf16.mxu0 0
        %1216 = vmatpush1.bf16.msra.mxu0 0
        %1217 = vmatprep.subr.bf16.mxu0 0
        %1218 = vmatpush1.bf16.msra.mxu0 0
        %1219 = vmatprep.subr.bf16.mxu0 0
        %1220 = vmatpush1.bf16.msra.mxu0 0
        %1221 = vmatprep.subr.bf16.mxu0 0
        %1222 = vmatpush1.bf16.msra.mxu0 0
        %1223 = vmatprep.subr.bf16.mxu0 0
        %1224 = vmatpush1.bf16.msra.mxu0 0
        %1225 = vmatprep.subr.bf16.mxu0 0
        %1226 = vmatpush1.bf16.msra.mxu0 0
        %1227 = vmatprep.mubr.bf16.mxu0 0
        %1228 = vmatmul.mubr.bf16.gmra.mrb[0].mxu0 %v1015
        %v1229 = vpop.f32.mrb[0].mxu0
        %v1230 = vadd.f32 %v1055, %v1229
        %v1231 = vpop.f32.mrb[0].mxu0
        %v1232 = vadd.f32 %v1059, %v1231
        %v1233 = vpop.f32.mrb[0].mxu0
        %v1234 = vadd.f32 %v1055, %v1233
        %v1235 = vpop.f32.mrb[0].mxu0
        %v1236 = vadd.f32 %v1059, %v1235
        %1237 = vdwg.mxu0
        %1238 = vmatprep.subr.bf16.mxu0 0
        %1239 = vmatpush1.bf16.msra.mxu0 %v1149
        %1240 = vmatprep.subr.bf16.mxu0 0
        %1241 = vmatpush1.bf16.msra.mxu0 %v1152
        %1242 = vmatprep.subr.bf16.mxu0 0
        %1243 = vmatpush1.bf16.msra.mxu0 %v1155
        %1244 = vmatprep.subr.bf16.mxu0 0
        %1245 = vmatpush1.bf16.msra.mxu0 %v1158
        %1246 = vmatprep.subr.bf16.mxu0 0
        %1247 = vmatpush1.bf16.msra.mxu0 %v1161
        %1248 = vmatprep.subr.bf16.mxu0 0
        %1249 = vmatpush1.bf16.msra.mxu0 %v1164
        %1250 = vmatprep.subr.bf16.mxu0 0
        %1251 = vmatpush1.bf16.msra.mxu0 %v1167
        %1252 = vmatprep.subr.bf16.mxu0 0
        %1253 = vmatpush1.bf16.msra.mxu0 %v1170
        %1254 = vmatprep.subr.bf16.mxu0 0
        %1255 = vmatpush1.bf16.msra.mxu0 0
        %1256 = vmatprep.subr.bf16.mxu0 0
        %1257 = vmatpush1.bf16.msra.mxu0 0
        %1258 = vmatprep.subr.bf16.mxu0 0
        %1259 = vmatpush1.bf16.msra.mxu0 0
        %1260 = vmatprep.subr.bf16.mxu0 0
        %1261 = vmatpush1.bf16.msra.mxu0 0
        %1262 = vmatprep.subr.bf16.mxu0 0
        %1263 = vmatpush1.bf16.msra.mxu0 0
        %1264 = vmatprep.subr.bf16.mxu0 0
        %1265 = vmatpush1.bf16.msra.mxu0 0
        %1266 = vmatprep.subr.bf16.mxu0 0
        %1267 = vmatpush1.bf16.msra.mxu0 0
        %1268 = vmatprep.subr.bf16.mxu0 0
        %1269 = vmatpush1.bf16.msra.mxu0 0
        %1270 = vmatprep.mubr.bf16.mxu0 0
        %1271 = vmatmul.mubr.bf16.gmra.mrb[0].mxu0 %v1015
        %v1272 = vpop.f32.mrb[0].mxu0
        %v1273 = vadd.f32 %v1063, %v1272
        %v1274 = vpop.f32.mrb[0].mxu0
        %v1275 = vpop.f32.mrb[0].mxu0
        %v1276 = vadd.f32 %v1063, %v1275
        %v1277 = vpop.f32.mrb[0].mxu0
        %1278 = vdwg.mxu0
        %v1279 = vpack.c.bf16 %v1234, %v1230
        %v1280 = vpack.c.bf16 %v1236, %v1232
        %v1281 = vpack.c.bf16 %v1276, %v1273
        %v1282 = vld [vmem:[%s1] sm:$0x1]
        %v1283 = vlaneseq
        %v1284 = vshrl.u32 %v1283, 7
        %v1285 = vsub.s32 0, %v1284
        %v1286 = vrot.slane %v1282, %v1285
        %vm1287 = vcmask 261120
        %v1289 = vsel %vm1287, %v1279, 0
        %v1292 = vsel %vm1287, %v1280, 0
        %1294 = vmatprep.subr.bf16.mxu0 0
        %1295 = vmatpush1.bf16.xpose.msra.mxu0 %v1292
        %1296 = vmatprep.subr.bf16.mxu0 0
        %1297 = vmatpush1.bf16.xpose.msra.mxu0 0
        %1298 = vmatprep.subr.bf16.mxu0 0
        %1299 = vmatpush1.bf16.xpose.msra.mxu0 0
        %1300 = vmatprep.subr.bf16.mxu0 0
        %1301 = vmatpush1.bf16.xpose.msra.mxu0 0
        %1302 = vmatprep.subr.bf16.mxu0 0
        %1303 = vmatpush1.bf16.xpose.msra.mxu0 0
        %1304 = vmatprep.subr.bf16.mxu0 0
        %1305 = vmatpush1.bf16.xpose.msra.mxu0 0
        %1306 = vmatprep.subr.bf16.mxu0 0
        %1307 = vmatpush1.bf16.xpose.msra.mxu0 0
        %1308 = vmatprep.subr.bf16.mxu0 0
        %1309 = vmatpush1.bf16.xpose.msra.mxu0 0
        %1310 = vmatprep.subr.bf16.mxu0 0
        %1311 = vmatpush1.bf16.xpose.msra.mxu0 0
        %1312 = vmatprep.subr.bf16.mxu0 0
        %1313 = vmatpush1.bf16.xpose.msra.mxu0 0
        %1314 = vmatprep.subr.bf16.mxu0 0
        %1315 = vmatpush1.bf16.xpose.msra.mxu0 0
        %1316 = vmatprep.subr.bf16.mxu0 0
        %1317 = vmatpush1.bf16.xpose.msra.mxu0 0
        %1318 = vmatprep.subr.bf16.mxu0 0
        %1319 = vmatpush1.bf16.xpose.msra.mxu0 0
        %1320 = vmatprep.subr.bf16.mxu0 0
        %1321 = vmatpush1.bf16.xpose.msra.mxu0 0
        %1322 = vmatprep.subr.bf16.mxu0 0
        %1323 = vmatpush1.bf16.xpose.msra.mxu0 0
        %1324 = vmatprep.subr.bf16.mxu0 0
        %1325 = vmatpush1.bf16.xpose.msra.mxu0 0
        %1326 = vmatprep.mubr.bf16.mxu0 0
        %1327 = vmatmul.mubr.bf16.gmra.mrb[0].mxu0 %v1289
        %v1328 = vpop.f32.mrb[0].mxu0
        %v1329 = vadd.f32 %v1286, %v1328
        %v1330 = vpop.f32.mrb[0].mxu0
        %v1331 = vpop.f32.mrb[0].mxu0
        %v1332 = vpop.f32.mrb[0].mxu0
        %1333 = vdwg.mxu0
        %vm1334 = vcmask 64512
        %v1335 = vsel %vm1334, %v1329, -inf
        %1336 = vmax.xlane.f32.xlu0 %v1335
        %v1337 = vpop.xlane.xlu0 %1336
        %v1338 = vsub.f32 %v1329, %v1337
        %v1339 = vmul.f32 %v1338, 1.442695
        %v1340 = vpow.pop %v1339
        %v1341 = vsel %vm1334, %v1340, 0.0
        %1342 = vadd.xlane.f32.xlu0 %v1341
        %v1343 = vpop.xlane.xlu0 %1342
        %v1344 = vrcp.pop %v1343
        %v1345 = vmul.f32 %v1340, %v1344
        %v1346 = vpack.c.bf16 %v1345, %v1345
        %v1348 = vsel %vm1334, %v1346, 0
        %vm1350 = vcmask 1043456
        %v1352 = vsel %vm1350, %v1281, 0
        %1354 = vmatprep.subr.bf16.mxu0 0
        %1355 = vmatpush1.bf16.msra.mxu0 %v1352
        %1356 = vmatprep.subr.bf16.mxu0 0
        %1357 = vmatpush1.bf16.msra.mxu0 0
        %1358 = vmatprep.subr.bf16.mxu0 0
        %1359 = vmatpush1.bf16.msra.mxu0 0
        %1360 = vmatprep.subr.bf16.mxu0 0
        %1361 = vmatpush1.bf16.msra.mxu0 0
        %1362 = vmatprep.subr.bf16.mxu0 0
        %1363 = vmatpush1.bf16.msra.mxu0 0
        %1364 = vmatprep.subr.bf16.mxu0 0
        %1365 = vmatpush1.bf16.msra.mxu0 0
        %1366 = vmatprep.subr.bf16.mxu0 0
        %1367 = vmatpush1.bf16.msra.mxu0 0
        %1368 = vmatprep.subr.bf16.mxu0 0
        %1369 = vmatpush1.bf16.msra.mxu0 0
        %1370 = vmatprep.subr.bf16.mxu0 0
        %1371 = vmatpush1.bf16.msra.mxu0 0
        %1372 = vmatprep.subr.bf16.mxu0 0
        %1373 = vmatpush1.bf16.msra.mxu0 0
        %1374 = vmatprep.subr.bf16.mxu0 0
        %1375 = vmatpush1.bf16.msra.mxu0 0
        %1376 = vmatprep.subr.bf16.mxu0 0
        %1377 = vmatpush1.bf16.msra.mxu0 0
        %1378 = vmatprep.subr.bf16.mxu0 0
        %1379 = vmatpush1.bf16.msra.mxu0 0
        %1380 = vmatprep.subr.bf16.mxu0 0
        %1381 = vmatpush1.bf16.msra.mxu0 0
        %1382 = vmatprep.subr.bf16.mxu0 0
        %1383 = vmatpush1.bf16.msra.mxu0 0
        %1384 = vmatprep.subr.bf16.mxu0 0
        %1385 = vmatpush1.bf16.msra.mxu0 0
        %1386 = vmatprep.mubr.bf16.mxu0 0
        %1387 = vmatmul.mubr.bf16.gmra.mrb[0].mxu0 %v1348
        %v1388 = vpop.f32.mrb[0].mxu0
        %v1389 = vadd.f32 0.0, %v1388
        %v1390 = vpop.f32.mrb[0].mxu0
        %v1391 = vpop.f32.mrb[0].mxu0
        %v1392 = vpop.f32.mrb[0].mxu0
        %1393 = vdwg.mxu0
        %1395 = vrot.lane.b32.xlu0 %v1279, 96
        %v1396 = vpop.permute.xlu0 %1395
        %1398 = vrot.lane.b32.xlu0 %v1280, 96
        %v1399 = vpop.permute.xlu0 %1398
        %v1401 = vsel %vm1287, %v1396, 0
        %v1404 = vsel %vm1287, %v1399, 0
        %1406 = vmatprep.subr.bf16.mxu0 0
        %1407 = vmatpush1.bf16.xpose.msra.mxu0 %v1404
        %1408 = vmatprep.subr.bf16.mxu0 0
        %1409 = vmatpush1.bf16.xpose.msra.mxu0 0
        %1410 = vmatprep.subr.bf16.mxu0 0
        %1411 = vmatpush1.bf16.xpose.msra.mxu0 0
        %1412 = vmatprep.subr.bf16.mxu0 0
        %1413 = vmatpush1.bf16.xpose.msra.mxu0 0
        %1414 = vmatprep.subr.bf16.mxu0 0
        %1415 = vmatpush1.bf16.xpose.msra.mxu0 0
        %1416 = vmatprep.subr.bf16.mxu0 0
        %1417 = vmatpush1.bf16.xpose.msra.mxu0 0
        %1418 = vmatprep.subr.bf16.mxu0 0
        %1419 = vmatpush1.bf16.xpose.msra.mxu0 0
        %1420 = vmatprep.subr.bf16.mxu0 0
        %1421 = vmatpush1.bf16.xpose.msra.mxu0 0
        %1422 = vmatprep.subr.bf16.mxu0 0
        %1423 = vmatpush1.bf16.xpose.msra.mxu0 0
        %1424 = vmatprep.subr.bf16.mxu0 0
        %1425 = vmatpush1.bf16.xpose.msra.mxu0 0
        %1426 = vmatprep.subr.bf16.mxu0 0
        %1427 = vmatpush1.bf16.xpose.msra.mxu0 0
        %1428 = vmatprep.subr.bf16.mxu0 0
        %1429 = vmatpush1.bf16.xpose.msra.mxu0 0
        %1430 = vmatprep.subr.bf16.mxu0 0
        %1431 = vmatpush1.bf16.xpose.msra.mxu0 0
        %1432 = vmatprep.subr.bf16.mxu0 0
        %1433 = vmatpush1.bf16.xpose.msra.mxu0 0
        %1434 = vmatprep.subr.bf16.mxu0 0
        %1435 = vmatpush1.bf16.xpose.msra.mxu0 0
        %1436 = vmatprep.subr.bf16.mxu0 0
        %1437 = vmatpush1.bf16.xpose.msra.mxu0 0
        %1438 = vmatprep.mubr.bf16.mxu0 0
        %1439 = vmatmul.mubr.bf16.gmra.mrb[0].mxu0 %v1401
        %v1440 = vpop.f32.mrb[0].mxu0
        %v1441 = vadd.f32 %v1286, %v1440
        %v1442 = vpop.f32.mrb[0].mxu0
        %v1443 = vpop.f32.mrb[0].mxu0
        %v1444 = vpop.f32.mrb[0].mxu0
        %1445 = vdwg.mxu0
        %v1446 = vsel %vm1334, %v1441, -inf
        %1447 = vmax.xlane.f32.xlu0 %v1446
        %v1448 = vpop.xlane.xlu0 %1447
        %v1449 = vsub.f32 %v1441, %v1448
        %v1450 = vmul.f32 %v1449, 1.442695
        %v1451 = vpow.pop %v1450
        %v1452 = vsel %vm1334, %v1451, 0.0
        %1453 = vadd.xlane.f32.xlu0 %v1452
        %v1454 = vpop.xlane.xlu0 %1453
        %v1455 = vrcp.pop %v1454
        %v1456 = vmul.f32 %v1451, %v1455
        %v1457 = vpack.c.bf16 %v1456, %v1456
        %1459 = vrot.lane.b32.xlu0 %v1281, 96
        %v1460 = vpop.permute.xlu0 %1459
        %v1462 = vsel %vm1334, %v1457, 0
        %v1465 = vsel %vm1350, %v1460, 0
        %1467 = vmatprep.subr.bf16.mxu0 0
        %1468 = vmatpush1.bf16.msra.mxu0 %v1465
        %1469 = vmatprep.subr.bf16.mxu0 0
        %1470 = vmatpush1.bf16.msra.mxu0 0
        %1471 = vmatprep.subr.bf16.mxu0 0
        %1472 = vmatpush1.bf16.msra.mxu0 0
        %1473 = vmatprep.subr.bf16.mxu0 0
        %1474 = vmatpush1.bf16.msra.mxu0 0
        %1475 = vmatprep.subr.bf16.mxu0 0
        %1476 = vmatpush1.bf16.msra.mxu0 0
        %1477 = vmatprep.subr.bf16.mxu0 0
        %1478 = vmatpush1.bf16.msra.mxu0 0
        %1479 = vmatprep.subr.bf16.mxu0 0
        %1480 = vmatpush1.bf16.msra.mxu0 0
        %1481 = vmatprep.subr.bf16.mxu0 0
        %1482 = vmatpush1.bf16.msra.mxu0 0
        %1483 = vmatprep.subr.bf16.mxu0 0
        %1484 = vmatpush1.bf16.msra.mxu0 0
        %1485 = vmatprep.subr.bf16.mxu0 0
        %1486 = vmatpush1.bf16.msra.mxu0 0
        %1487 = vmatprep.subr.bf16.mxu0 0
        %1488 = vmatpush1.bf16.msra.mxu0 0
        %1489 = vmatprep.subr.bf16.mxu0 0
        %1490 = vmatpush1.bf16.msra.mxu0 0
        %1491 = vmatprep.subr.bf16.mxu0 0
        %1492 = vmatpush1.bf16.msra.mxu0 0
        %1493 = vmatprep.subr.bf16.mxu0 0
        %1494 = vmatpush1.bf16.msra.mxu0 0
        %1495 = vmatprep.subr.bf16.mxu0 0
        %1496 = vmatpush1.bf16.msra.mxu0 0
        %1497 = vmatprep.subr.bf16.mxu0 0
        %1498 = vmatpush1.bf16.msra.mxu0 0
        %1499 = vmatprep.mubr.bf16.mxu0 0
        %1500 = vmatmul.mubr.bf16.gmra.mrb[0].mxu0 %v1462
        %v1501 = vpop.f32.mrb[0].mxu0
        %v1502 = vadd.f32 0.0, %v1501
        %v1503 = vpop.f32.mrb[0].mxu0
        %v1504 = vpop.f32.mrb[0].mxu0
        %v1505 = vpop.f32.mrb[0].mxu0
        %1506 = vdwg.mxu0
        %1507 = vrot.lane.b32.xlu0 %v1279, 64
        %v1508 = vpop.permute.xlu0 %1507
        %1509 = vrot.lane.b32.xlu0 %v1280, 64
        %v1510 = vpop.permute.xlu0 %1509
        %v1512 = vsel %vm1287, %v1508, 0
        %v1515 = vsel %vm1287, %v1510, 0
        %1517 = vmatprep.subr.bf16.mxu0 0
        %1518 = vmatpush1.bf16.xpose.msra.mxu0 %v1515
        %1519 = vmatprep.subr.bf16.mxu0 0
        %1520 = vmatpush1.bf16.xpose.msra.mxu0 0
        %1521 = vmatprep.subr.bf16.mxu0 0
        %1522 = vmatpush1.bf16.xpose.msra.mxu0 0
        %1523 = vmatprep.subr.bf16.mxu0 0
        %1524 = vmatpush1.bf16.xpose.msra.mxu0 0
        %1525 = vmatprep.subr.bf16.mxu0 0
        %1526 = vmatpush1.bf16.xpose.msra.mxu0 0
        %1527 = vmatprep.subr.bf16.mxu0 0
        %1528 = vmatpush1.bf16.xpose.msra.mxu0 0
        %1529 = vmatprep.subr.bf16.mxu0 0
        %1530 = vmatpush1.bf16.xpose.msra.mxu0 0
        %1531 = vmatprep.subr.bf16.mxu0 0
        %1532 = vmatpush1.bf16.xpose.msra.mxu0 0
        %1533 = vmatprep.subr.bf16.mxu0 0
        %1534 = vmatpush1.bf16.xpose.msra.mxu0 0
        %1535 = vmatprep.subr.bf16.mxu0 0
        %1536 = vmatpush1.bf16.xpose.msra.mxu0 0
        %1537 = vmatprep.subr.bf16.mxu0 0
        %1538 = vmatpush1.bf16.xpose.msra.mxu0 0
        %1539 = vmatprep.subr.bf16.mxu0 0
        %1540 = vmatpush1.bf16.xpose.msra.mxu0 0
        %1541 = vmatprep.subr.bf16.mxu0 0
        %1542 = vmatpush1.bf16.xpose.msra.mxu0 0
        %1543 = vmatprep.subr.bf16.mxu0 0
        %1544 = vmatpush1.bf16.xpose.msra.mxu0 0
        %1545 = vmatprep.subr.bf16.mxu0 0
        %1546 = vmatpush1.bf16.xpose.msra.mxu0 0
        %1547 = vmatprep.subr.bf16.mxu0 0
        %1548 = vmatpush1.bf16.xpose.msra.mxu0 0
        %1549 = vmatprep.mubr.bf16.mxu0 0
        %1550 = vmatmul.mubr.bf16.gmra.mrb[0].mxu0 %v1512
        %v1551 = vpop.f32.mrb[0].mxu0
        %v1552 = vadd.f32 %v1286, %v1551
        %v1553 = vpop.f32.mrb[0].mxu0
        %v1554 = vpop.f32.mrb[0].mxu0
        %v1555 = vpop.f32.mrb[0].mxu0
        %1556 = vdwg.mxu0
        %v1557 = vsel %vm1334, %v1552, -inf
        %1558 = vmax.xlane.f32.xlu0 %v1557
        %v1559 = vpop.xlane.xlu0 %1558
        %v1560 = vsub.f32 %v1552, %v1559
        %v1561 = vmul.f32 %v1560, 1.442695
        %v1562 = vpow.pop %v1561
        %v1563 = vsel %vm1334, %v1562, 0.0
        %1564 = vadd.xlane.f32.xlu0 %v1563
        %v1565 = vpop.xlane.xlu0 %1564
        %v1566 = vrcp.pop %v1565
        %v1567 = vmul.f32 %v1562, %v1566
        %v1568 = vpack.c.bf16 %v1567, %v1567
        %1569 = vrot.lane.b32.xlu0 %v1281, 64
        %v1570 = vpop.permute.xlu0 %1569
        %v1572 = vsel %vm1334, %v1568, 0
        %v1575 = vsel %vm1350, %v1570, 0
        %1577 = vmatprep.subr.bf16.mxu0 0
        %1578 = vmatpush1.bf16.msra.mxu0 %v1575
        %1579 = vmatprep.subr.bf16.mxu0 0
        %1580 = vmatpush1.bf16.msra.mxu0 0
        %1581 = vmatprep.subr.bf16.mxu0 0
        %1582 = vmatpush1.bf16.msra.mxu0 0
        %1583 = vmatprep.subr.bf16.mxu0 0
        %1584 = vmatpush1.bf16.msra.mxu0 0
        %1585 = vmatprep.subr.bf16.mxu0 0
        %1586 = vmatpush1.bf16.msra.mxu0 0
        %1587 = vmatprep.subr.bf16.mxu0 0
        %1588 = vmatpush1.bf16.msra.mxu0 0
        %1589 = vmatprep.subr.bf16.mxu0 0
        %1590 = vmatpush1.bf16.msra.mxu0 0
        %1591 = vmatprep.subr.bf16.mxu0 0
        %1592 = vmatpush1.bf16.msra.mxu0 0
        %1593 = vmatprep.subr.bf16.mxu0 0
        %1594 = vmatpush1.bf16.msra.mxu0 0
        %1595 = vmatprep.subr.bf16.mxu0 0
        %1596 = vmatpush1.bf16.msra.mxu0 0
        %1597 = vmatprep.subr.bf16.mxu0 0
        %1598 = vmatpush1.bf16.msra.mxu0 0
        %1599 = vmatprep.subr.bf16.mxu0 0
        %1600 = vmatpush1.bf16.msra.mxu0 0
        %1601 = vmatprep.subr.bf16.mxu0 0
        %1602 = vmatpush1.bf16.msra.mxu0 0
        %1603 = vmatprep.subr.bf16.mxu0 0
        %1604 = vmatpush1.bf16.msra.mxu0 0
        %1605 = vmatprep.subr.bf16.mxu0 0
        %1606 = vmatpush1.bf16.msra.mxu0 0
        %1607 = vmatprep.subr.bf16.mxu0 0
        %1608 = vmatpush1.bf16.msra.mxu0 0
        %1609 = vmatprep.mubr.bf16.mxu0 0
        %1610 = vmatmul.mubr.bf16.gmra.mrb[0].mxu0 %v1572
        %v1611 = vpop.f32.mrb[0].mxu0
        %v1612 = vadd.f32 0.0, %v1611
        %v1613 = vpop.f32.mrb[0].mxu0
        %v1614 = vpop.f32.mrb[0].mxu0
        %v1615 = vpop.f32.mrb[0].mxu0
        %1616 = vdwg.mxu0
        %1617 = vrot.lane.b32.xlu0 %v1279, 32
        %v1618 = vpop.permute.xlu0 %1617
        %1619 = vrot.lane.b32.xlu0 %v1280, 32
        %v1620 = vpop.permute.xlu0 %1619
        %v1622 = vsel %vm1287, %v1618, 0
        %v1625 = vsel %vm1287, %v1620, 0
        %1627 = vmatprep.subr.bf16.mxu0 0
        %1628 = vmatpush1.bf16.xpose.msra.mxu0 %v1625
        %1629 = vmatprep.subr.bf16.mxu0 0
        %1630 = vmatpush1.bf16.xpose.msra.mxu0 0
        %1631 = vmatprep.subr.bf16.mxu0 0
        %1632 = vmatpush1.bf16.xpose.msra.mxu0 0
        %1633 = vmatprep.subr.bf16.mxu0 0
        %1634 = vmatpush1.bf16.xpose.msra.mxu0 0
        %1635 = vmatprep.subr.bf16.mxu0 0
        %1636 = vmatpush1.bf16.xpose.msra.mxu0 0
        %1637 = vmatprep.subr.bf16.mxu0 0
        %1638 = vmatpush1.bf16.xpose.msra.mxu0 0
        %1639 = vmatprep.subr.bf16.mxu0 0
        %1640 = vmatpush1.bf16.xpose.msra.mxu0 0
        %1641 = vmatprep.subr.bf16.mxu0 0
        %1642 = vmatpush1.bf16.xpose.msra.mxu0 0
        %1643 = vmatprep.subr.bf16.mxu0 0
        %1644 = vmatpush1.bf16.xpose.msra.mxu0 0
        %1645 = vmatprep.subr.bf16.mxu0 0
        %1646 = vmatpush1.bf16.xpose.msra.mxu0 0
        %1647 = vmatprep.subr.bf16.mxu0 0
        %1648 = vmatpush1.bf16.xpose.msra.mxu0 0
        %1649 = vmatprep.subr.bf16.mxu0 0
        %1650 = vmatpush1.bf16.xpose.msra.mxu0 0
        %1651 = vmatprep.subr.bf16.mxu0 0
        %1652 = vmatpush1.bf16.xpose.msra.mxu0 0
        %1653 = vmatprep.subr.bf16.mxu0 0
        %1654 = vmatpush1.bf16.xpose.msra.mxu0 0
        %1655 = vmatprep.subr.bf16.mxu0 0
        %1656 = vmatpush1.bf16.xpose.msra.mxu0 0
        %1657 = vmatprep.subr.bf16.mxu0 0
        %1658 = vmatpush1.bf16.xpose.msra.mxu0 0
        %1659 = vmatprep.mubr.bf16.mxu0 0
        %1660 = vmatmul.mubr.bf16.gmra.mrb[0].mxu0 %v1622
        %v1661 = vpop.f32.mrb[0].mxu0
        %v1662 = vadd.f32 %v1286, %v1661
        %v1663 = vpop.f32.mrb[0].mxu0
        %v1664 = vpop.f32.mrb[0].mxu0
        %v1665 = vpop.f32.mrb[0].mxu0
        %1666 = vdwg.mxu0
        %v1667 = vsel %vm1334, %v1662, -inf
        %1668 = vmax.xlane.f32.xlu0 %v1667
        %v1669 = vpop.xlane.xlu0 %1668
        %v1670 = vsub.f32 %v1662, %v1669
        %v1671 = vmul.f32 %v1670, 1.442695
        %v1672 = vpow.pop %v1671
        %v1673 = vsel %vm1334, %v1672, 0.0
        %1674 = vadd.xlane.f32.xlu0 %v1673
        %v1675 = vpop.xlane.xlu0 %1674
        %v1676 = vrcp.pop %v1675
        %v1677 = vmul.f32 %v1672, %v1676
        %v1678 = vpack.c.bf16 %v1677, %v1677
        %1679 = vrot.lane.b32.xlu0 %v1281, 32
        %v1680 = vpop.permute.xlu0 %1679
        %v1682 = vsel %vm1334, %v1678, 0
        %v1685 = vsel %vm1350, %v1680, 0
        %1687 = vmatprep.subr.bf16.mxu0 0
        %1688 = vmatpush1.bf16.msra.mxu0 %v1685
        %1689 = vmatprep.subr.bf16.mxu0 0
        %1690 = vmatpush1.bf16.msra.mxu0 0
        %1691 = vmatprep.subr.bf16.mxu0 0
        %1692 = vmatpush1.bf16.msra.mxu0 0
        %1693 = vmatprep.subr.bf16.mxu0 0
        %1694 = vmatpush1.bf16.msra.mxu0 0
        %1695 = vmatprep.subr.bf16.mxu0 0
        %1696 = vmatpush1.bf16.msra.mxu0 0
        %1697 = vmatprep.subr.bf16.mxu0 0
        %1698 = vmatpush1.bf16.msra.mxu0 0
        %1699 = vmatprep.subr.bf16.mxu0 0
        %1700 = vmatpush1.bf16.msra.mxu0 0
        %1701 = vmatprep.subr.bf16.mxu0 0
        %1702 = vmatpush1.bf16.msra.mxu0 0
        %1703 = vmatprep.subr.bf16.mxu0 0
        %1704 = vmatpush1.bf16.msra.mxu0 0
        %1705 = vmatprep.subr.bf16.mxu0 0
        %1706 = vmatpush1.bf16.msra.mxu0 0
        %1707 = vmatprep.subr.bf16.mxu0 0
        %1708 = vmatpush1.bf16.msra.mxu0 0
        %1709 = vmatprep.subr.bf16.mxu0 0
        %1710 = vmatpush1.bf16.msra.mxu0 0
        %1711 = vmatprep.subr.bf16.mxu0 0
        %1712 = vmatpush1.bf16.msra.mxu0 0
        %1713 = vmatprep.subr.bf16.mxu0 0
        %1714 = vmatpush1.bf16.msra.mxu0 0
        %1715 = vmatprep.subr.bf16.mxu0 0
        %1716 = vmatpush1.bf16.msra.mxu0 0
        %1717 = vmatprep.subr.bf16.mxu0 0
        %1718 = vmatpush1.bf16.msra.mxu0 0
        %1719 = vmatprep.mubr.bf16.mxu0 0
        %1720 = vmatmul.mubr.bf16.gmra.mrb[0].mxu0 %v1682
        %v1721 = vpop.f32.mrb[0].mxu0
        %v1722 = vadd.f32 0.0, %v1721
        %v1723 = vpop.f32.mrb[0].mxu0
        %v1724 = vpop.f32.mrb[0].mxu0
        %v1725 = vpop.f32.mrb[0].mxu0
        %1726 = vdwg.mxu0
        %1728 = vrot.lane.b32.xlu0 %v1502, 32
        %v1729 = vpop.permute.xlu0 %1728
        %1732 = vrot.lane.b32.xlu0 %v1612, 64
        %v1733 = vpop.permute.xlu0 %1732
        %1736 = vrot.lane.b32.xlu0 %v1722, 96
        %v1737 = vpop.permute.xlu0 %1736
        %v1739 = vsel %vm1287, %v1389, %v1729
        %vm1740 = vcmask 523264
        %v1741 = vsel %vm1740, %v1739, %v1733
        %vm1742 = vcmask 785408
        %v1743 = vsel %vm1742, %v1741, %v1737
        %v1744 = vld [vmem:[%s1 + $0x1] sm:$0x1]
        %v1745 = vlaneseq
        %v1746 = vshrl.u32 %v1745, 7
        %v1747 = vsub.s32 0, %v1746
        %v1748 = vrot.slane %v1744, %v1747
        %v1749 = vrot.slane %v1279, 4
        %v1750 = vrot.slane %v1280, 4
        %v1752 = vsel %vm1287, %v1749, 0
        %v1755 = vsel %vm1287, %v1750, 0
        %1757 = vmatprep.subr.bf16.mxu0 0
        %1758 = vmatpush1.bf16.xpose.msra.mxu0 %v1755
        %1759 = vmatprep.subr.bf16.mxu0 0
        %1760 = vmatpush1.bf16.xpose.msra.mxu0 0
        %1761 = vmatprep.subr.bf16.mxu0 0
        %1762 = vmatpush1.bf16.xpose.msra.mxu0 0
        %1763 = vmatprep.subr.bf16.mxu0 0
        %1764 = vmatpush1.bf16.xpose.msra.mxu0 0
        %1765 = vmatprep.subr.bf16.mxu0 0
        %1766 = vmatpush1.bf16.xpose.msra.mxu0 0
        %1767 = vmatprep.subr.bf16.mxu0 0
        %1768 = vmatpush1.bf16.xpose.msra.mxu0 0
        %1769 = vmatprep.subr.bf16.mxu0 0
        %1770 = vmatpush1.bf16.xpose.msra.mxu0 0
        %1771 = vmatprep.subr.bf16.mxu0 0
        %1772 = vmatpush1.bf16.xpose.msra.mxu0 0
        %1773 = vmatprep.subr.bf16.mxu0 0
        %1774 = vmatpush1.bf16.xpose.msra.mxu0 0
        %1775 = vmatprep.subr.bf16.mxu0 0
        %1776 = vmatpush1.bf16.xpose.msra.mxu0 0
        %1777 = vmatprep.subr.bf16.mxu0 0
        %1778 = vmatpush1.bf16.xpose.msra.mxu0 0
        %1779 = vmatprep.subr.bf16.mxu0 0
        %1780 = vmatpush1.bf16.xpose.msra.mxu0 0
        %1781 = vmatprep.subr.bf16.mxu0 0
        %1782 = vmatpush1.bf16.xpose.msra.mxu0 0
        %1783 = vmatprep.subr.bf16.mxu0 0
        %1784 = vmatpush1.bf16.xpose.msra.mxu0 0
        %1785 = vmatprep.subr.bf16.mxu0 0
        %1786 = vmatpush1.bf16.xpose.msra.mxu0 0
        %1787 = vmatprep.subr.bf16.mxu0 0
        %1788 = vmatpush1.bf16.xpose.msra.mxu0 0
        %1789 = vmatprep.mubr.bf16.mxu0 0
        %1790 = vmatmul.mubr.bf16.gmra.mrb[0].mxu0 %v1752
        %v1791 = vpop.f32.mrb[0].mxu0
        %v1792 = vadd.f32 %v1748, %v1791
        %v1793 = vpop.f32.mrb[0].mxu0
        %v1794 = vpop.f32.mrb[0].mxu0
        %v1795 = vpop.f32.mrb[0].mxu0
        %1796 = vdwg.mxu0
        %v1797 = vsel %vm1334, %v1792, -inf
        %1798 = vmax.xlane.f32.xlu0 %v1797
        %v1799 = vpop.xlane.xlu0 %1798
        %v1800 = vsub.f32 %v1792, %v1799
        %v1801 = vmul.f32 %v1800, 1.442695
        %v1802 = vpow.pop %v1801
        %v1803 = vsel %vm1334, %v1802, 0.0
        %1804 = vadd.xlane.f32.xlu0 %v1803
        %v1805 = vpop.xlane.xlu0 %1804
        %v1806 = vrcp.pop %v1805
        %v1807 = vmul.f32 %v1802, %v1806
        %v1808 = vpack.c.bf16 %v1807, %v1807
        %v1809 = vrot.slane %v1281, 4
        %v1811 = vsel %vm1334, %v1808, 0
        %v1814 = vsel %vm1350, %v1809, 0
        %1816 = vmatprep.subr.bf16.mxu0 0
        %1817 = vmatpush1.bf16.msra.mxu0 %v1814
        %1818 = vmatprep.subr.bf16.mxu0 0
        %1819 = vmatpush1.bf16.msra.mxu0 0
        %1820 = vmatprep.subr.bf16.mxu0 0
        %1821 = vmatpush1.bf16.msra.mxu0 0
        %1822 = vmatprep.subr.bf16.mxu0 0
        %1823 = vmatpush1.bf16.msra.mxu0 0
        %1824 = vmatprep.subr.bf16.mxu0 0
        %1825 = vmatpush1.bf16.msra.mxu0 0
        %1826 = vmatprep.subr.bf16.mxu0 0
        %1827 = vmatpush1.bf16.msra.mxu0 0
        %1828 = vmatprep.subr.bf16.mxu0 0
        %1829 = vmatpush1.bf16.msra.mxu0 0
        %1830 = vmatprep.subr.bf16.mxu0 0
        %1831 = vmatpush1.bf16.msra.mxu0 0
        %1832 = vmatprep.subr.bf16.mxu0 0
        %1833 = vmatpush1.bf16.msra.mxu0 0
        %1834 = vmatprep.subr.bf16.mxu0 0
        %1835 = vmatpush1.bf16.msra.mxu0 0
        %1836 = vmatprep.subr.bf16.mxu0 0
        %1837 = vmatpush1.bf16.msra.mxu0 0
        %1838 = vmatprep.subr.bf16.mxu0 0
        %1839 = vmatpush1.bf16.msra.mxu0 0
        %1840 = vmatprep.subr.bf16.mxu0 0
        %1841 = vmatpush1.bf16.msra.mxu0 0
        %1842 = vmatprep.subr.bf16.mxu0 0
        %1843 = vmatpush1.bf16.msra.mxu0 0
        %1844 = vmatprep.subr.bf16.mxu0 0
        %1845 = vmatpush1.bf16.msra.mxu0 0
        %1846 = vmatprep.subr.bf16.mxu0 0
        %1847 = vmatpush1.bf16.msra.mxu0 0
        %1848 = vmatprep.mubr.bf16.mxu0 0
        %1849 = vmatmul.mubr.bf16.gmra.mrb[0].mxu0 %v1811
        %v1850 = vpop.f32.mrb[0].mxu0
        %v1851 = vadd.f32 0.0, %v1850
        %v1852 = vpop.f32.mrb[0].mxu0
        %v1853 = vpop.f32.mrb[0].mxu0
        %v1854 = vpop.f32.mrb[0].mxu0
        %1855 = vdwg.mxu0
        %1856 = vrot.lane.b32.xlu0 %v1749, 96
        %v1857 = vpop.permute.xlu0 %1856
        %1858 = vrot.lane.b32.xlu0 %v1750, 96
        %v1859 = vpop.permute.xlu0 %1858
        %v1861 = vsel %vm1287, %v1857, 0
        %v1864 = vsel %vm1287, %v1859, 0
        %1866 = vmatprep.subr.bf16.mxu0 0
        %1867 = vmatpush1.bf16.xpose.msra.mxu0 %v1864
        %1868 = vmatprep.subr.bf16.mxu0 0
        %1869 = vmatpush1.bf16.xpose.msra.mxu0 0
        %1870 = vmatprep.subr.bf16.mxu0 0
        %1871 = vmatpush1.bf16.xpose.msra.mxu0 0
        %1872 = vmatprep.subr.bf16.mxu0 0
        %1873 = vmatpush1.bf16.xpose.msra.mxu0 0
        %1874 = vmatprep.subr.bf16.mxu0 0
        %1875 = vmatpush1.bf16.xpose.msra.mxu0 0
        %1876 = vmatprep.subr.bf16.mxu0 0
        %1877 = vmatpush1.bf16.xpose.msra.mxu0 0
        %1878 = vmatprep.subr.bf16.mxu0 0
        %1879 = vmatpush1.bf16.xpose.msra.mxu0 0
        %1880 = vmatprep.subr.bf16.mxu0 0
        %1881 = vmatpush1.bf16.xpose.msra.mxu0 0
        %1882 = vmatprep.subr.bf16.mxu0 0
        %1883 = vmatpush1.bf16.xpose.msra.mxu0 0
        %1884 = vmatprep.subr.bf16.mxu0 0
        %1885 = vmatpush1.bf16.xpose.msra.mxu0 0
        %1886 = vmatprep.subr.bf16.mxu0 0
        %1887 = vmatpush1.bf16.xpose.msra.mxu0 0
        %1888 = vmatprep.subr.bf16.mxu0 0
        %1889 = vmatpush1.bf16.xpose.msra.mxu0 0
        %1890 = vmatprep.subr.bf16.mxu0 0
        %1891 = vmatpush1.bf16.xpose.msra.mxu0 0
        %1892 = vmatprep.subr.bf16.mxu0 0
        %1893 = vmatpush1.bf16.xpose.msra.mxu0 0
        %1894 = vmatprep.subr.bf16.mxu0 0
        %1895 = vmatpush1.bf16.xpose.msra.mxu0 0
        %1896 = vmatprep.subr.bf16.mxu0 0
        %1897 = vmatpush1.bf16.xpose.msra.mxu0 0
        %1898 = vmatprep.mubr.bf16.mxu0 0
        %1899 = vmatmul.mubr.bf16.gmra.mrb[0].mxu0 %v1861
        %v1900 = vpop.f32.mrb[0].mxu0
        %v1901 = vadd.f32 %v1748, %v1900
        %v1902 = vpop.f32.mrb[0].mxu0
        %v1903 = vpop.f32.mrb[0].mxu0
        %v1904 = vpop.f32.mrb[0].mxu0
        %1905 = vdwg.mxu0
        %v1906 = vsel %vm1334, %v1901, -inf
        %1907 = vmax.xlane.f32.xlu0 %v1906
        %v1908 = vpop.xlane.xlu0 %1907
        %v1909 = vsub.f32 %v1901, %v1908
        %v1910 = vmul.f32 %v1909, 1.442695
        %v1911 = vpow.pop %v1910
        %v1912 = vsel %vm1334, %v1911, 0.0
        %1913 = vadd.xlane.f32.xlu0 %v1912
        %v1914 = vpop.xlane.xlu0 %1913
        %v1915 = vrcp.pop %v1914
        %v1916 = vmul.f32 %v1911, %v1915
        %v1917 = vpack.c.bf16 %v1916, %v1916
        %1918 = vrot.lane.b32.xlu0 %v1809, 96
        %v1919 = vpop.permute.xlu0 %1918
        %v1921 = vsel %vm1334, %v1917, 0
        %v1924 = vsel %vm1350, %v1919, 0
        %1926 = vmatprep.subr.bf16.mxu0 0
        %1927 = vmatpush1.bf16.msra.mxu0 %v1924
        %1928 = vmatprep.subr.bf16.mxu0 0
        %1929 = vmatpush1.bf16.msra.mxu0 0
        %1930 = vmatprep.subr.bf16.mxu0 0
        %1931 = vmatpush1.bf16.msra.mxu0 0
        %1932 = vmatprep.subr.bf16.mxu0 0
        %1933 = vmatpush1.bf16.msra.mxu0 0
        %1934 = vmatprep.subr.bf16.mxu0 0
        %1935 = vmatpush1.bf16.msra.mxu0 0
        %1936 = vmatprep.subr.bf16.mxu0 0
        %1937 = vmatpush1.bf16.msra.mxu0 0
        %1938 = vmatprep.subr.bf16.mxu0 0
        %1939 = vmatpush1.bf16.msra.mxu0 0
        %1940 = vmatprep.subr.bf16.mxu0 0
        %1941 = vmatpush1.bf16.msra.mxu0 0
        %1942 = vmatprep.subr.bf16.mxu0 0
        %1943 = vmatpush1.bf16.msra.mxu0 0
        %1944 = vmatprep.subr.bf16.mxu0 0
        %1945 = vmatpush1.bf16.msra.mxu0 0
        %1946 = vmatprep.subr.bf16.mxu0 0
        %1947 = vmatpush1.bf16.msra.mxu0 0
        %1948 = vmatprep.subr.bf16.mxu0 0
        %1949 = vmatpush1.bf16.msra.mxu0 0
        %1950 = vmatprep.subr.bf16.mxu0 0
        %1951 = vmatpush1.bf16.msra.mxu0 0
        %1952 = vmatprep.subr.bf16.mxu0 0
        %1953 = vmatpush1.bf16.msra.mxu0 0
        %1954 = vmatprep.subr.bf16.mxu0 0
        %1955 = vmatpush1.bf16.msra.mxu0 0
        %1956 = vmatprep.subr.bf16.mxu0 0
        %1957 = vmatpush1.bf16.msra.mxu0 0
        %1958 = vmatprep.mubr.bf16.mxu0 0
        %1959 = vmatmul.mubr.bf16.gmra.mrb[0].mxu0 %v1921
        %v1960 = vpop.f32.mrb[0].mxu0
        %v1961 = vadd.f32 0.0, %v1960
        %v1962 = vpop.f32.mrb[0].mxu0
        %v1963 = vpop.f32.mrb[0].mxu0
        %v1964 = vpop.f32.mrb[0].mxu0
        %1965 = vdwg.mxu0
        %1966 = vrot.lane.b32.xlu0 %v1749, 64
        %v1967 = vpop.permute.xlu0 %1966
        %1968 = vrot.lane.b32.xlu0 %v1750, 64
        %v1969 = vpop.permute.xlu0 %1968
        %v1971 = vsel %vm1287, %v1967, 0
        %v1974 = vsel %vm1287, %v1969, 0
        %1976 = vmatprep.subr.bf16.mxu0 0
        %1977 = vmatpush1.bf16.xpose.msra.mxu0 %v1974
        %1978 = vmatprep.subr.bf16.mxu0 0
        %1979 = vmatpush1.bf16.xpose.msra.mxu0 0
        %1980 = vmatprep.subr.bf16.mxu0 0
        %1981 = vmatpush1.bf16.xpose.msra.mxu0 0
        %1982 = vmatprep.subr.bf16.mxu0 0
        %1983 = vmatpush1.bf16.xpose.msra.mxu0 0
        %1984 = vmatprep.subr.bf16.mxu0 0
        %1985 = vmatpush1.bf16.xpose.msra.mxu0 0
        %1986 = vmatprep.subr.bf16.mxu0 0
        %1987 = vmatpush1.bf16.xpose.msra.mxu0 0
        %1988 = vmatprep.subr.bf16.mxu0 0
        %1989 = vmatpush1.bf16.xpose.msra.mxu0 0
        %1990 = vmatprep.subr.bf16.mxu0 0
        %1991 = vmatpush1.bf16.xpose.msra.mxu0 0
        %1992 = vmatprep.subr.bf16.mxu0 0
        %1993 = vmatpush1.bf16.xpose.msra.mxu0 0
        %1994 = vmatprep.subr.bf16.mxu0 0
        %1995 = vmatpush1.bf16.xpose.msra.mxu0 0
        %1996 = vmatprep.subr.bf16.mxu0 0
        %1997 = vmatpush1.bf16.xpose.msra.mxu0 0
        %1998 = vmatprep.subr.bf16.mxu0 0
        %1999 = vmatpush1.bf16.xpose.msra.mxu0 0
        %2000 = vmatprep.subr.bf16.mxu0 0
        %2001 = vmatpush1.bf16.xpose.msra.mxu0 0
        %2002 = vmatprep.subr.bf16.mxu0 0
        %2003 = vmatpush1.bf16.xpose.msra.mxu0 0
        %2004 = vmatprep.subr.bf16.mxu0 0
        %2005 = vmatpush1.bf16.xpose.msra.mxu0 0
        %2006 = vmatprep.subr.bf16.mxu0 0
        %2007 = vmatpush1.bf16.xpose.msra.mxu0 0
        %2008 = vmatprep.mubr.bf16.mxu0 0
        %2009 = vmatmul.mubr.bf16.gmra.mrb[0].mxu0 %v1971
        %v2010 = vpop.f32.mrb[0].mxu0
        %v2011 = vadd.f32 %v1748, %v2010
        %v2012 = vpop.f32.mrb[0].mxu0
        %v2013 = vpop.f32.mrb[0].mxu0
        %v2014 = vpop.f32.mrb[0].mxu0
        %2015 = vdwg.mxu0
        %v2016 = vsel %vm1334, %v2011, -inf
        %2017 = vmax.xlane.f32.xlu0 %v2016
        %v2018 = vpop.xlane.xlu0 %2017
        %v2019 = vsub.f32 %v2011, %v2018
        %v2020 = vmul.f32 %v2019, 1.442695
        %v2021 = vpow.pop %v2020
        %v2022 = vsel %vm1334, %v2021, 0.0
        %2023 = vadd.xlane.f32.xlu0 %v2022
        %v2024 = vpop.xlane.xlu0 %2023
        %v2025 = vrcp.pop %v2024
        %v2026 = vmul.f32 %v2021, %v2025
        %v2027 = vpack.c.bf16 %v2026, %v2026
        %2028 = vrot.lane.b32.xlu0 %v1809, 64
        %v2029 = vpop.permute.xlu0 %2028
        %v2031 = vsel %vm1334, %v2027, 0
        %v2034 = vsel %vm1350, %v2029, 0
        %2036 = vmatprep.subr.bf16.mxu0 0
        %2037 = vmatpush1.bf16.msra.mxu0 %v2034
        %2038 = vmatprep.subr.bf16.mxu0 0
        %2039 = vmatpush1.bf16.msra.mxu0 0
        %2040 = vmatprep.subr.bf16.mxu0 0
        %2041 = vmatpush1.bf16.msra.mxu0 0
        %2042 = vmatprep.subr.bf16.mxu0 0
        %2043 = vmatpush1.bf16.msra.mxu0 0
        %2044 = vmatprep.subr.bf16.mxu0 0
        %2045 = vmatpush1.bf16.msra.mxu0 0
        %2046 = vmatprep.subr.bf16.mxu0 0
        %2047 = vmatpush1.bf16.msra.mxu0 0
        %2048 = vmatprep.subr.bf16.mxu0 0
        %2049 = vmatpush1.bf16.msra.mxu0 0
        %2050 = vmatprep.subr.bf16.mxu0 0
        %2051 = vmatpush1.bf16.msra.mxu0 0
        %2052 = vmatprep.subr.bf16.mxu0 0
        %2053 = vmatpush1.bf16.msra.mxu0 0
        %2054 = vmatprep.subr.bf16.mxu0 0
        %2055 = vmatpush1.bf16.msra.mxu0 0
        %2056 = vmatprep.subr.bf16.mxu0 0
        %2057 = vmatpush1.bf16.msra.mxu0 0
        %2058 = vmatprep.subr.bf16.mxu0 0
        %2059 = vmatpush1.bf16.msra.mxu0 0
        %2060 = vmatprep.subr.bf16.mxu0 0
        %2061 = vmatpush1.bf16.msra.mxu0 0
        %2062 = vmatprep.subr.bf16.mxu0 0
        %2063 = vmatpush1.bf16.msra.mxu0 0
        %2064 = vmatprep.subr.bf16.mxu0 0
        %2065 = vmatpush1.bf16.msra.mxu0 0
        %2066 = vmatprep.subr.bf16.mxu0 0
        %2067 = vmatpush1.bf16.msra.mxu0 0
        %2068 = vmatprep.mubr.bf16.mxu0 0
        %2069 = vmatmul.mubr.bf16.gmra.mrb[0].mxu0 %v2031
        %v2070 = vpop.f32.mrb[0].mxu0
        %v2071 = vadd.f32 0.0, %v2070
        %v2072 = vpop.f32.mrb[0].mxu0
        %v2073 = vpop.f32.mrb[0].mxu0
        %v2074 = vpop.f32.mrb[0].mxu0
        %2075 = vdwg.mxu0
        %2076 = vrot.lane.b32.xlu0 %v1749, 32
        %v2077 = vpop.permute.xlu0 %2076
        %2078 = vrot.lane.b32.xlu0 %v1750, 32
        %v2079 = vpop.permute.xlu0 %2078
        %v2081 = vsel %vm1287, %v2077, 0
        %v2084 = vsel %vm1287, %v2079, 0
        %2086 = vmatprep.subr.bf16.mxu0 0
        %2087 = vmatpush1.bf16.xpose.msra.mxu0 %v2084
        %2088 = vmatprep.subr.bf16.mxu0 0
        %2089 = vmatpush1.bf16.xpose.msra.mxu0 0
        %2090 = vmatprep.subr.bf16.mxu0 0
        %2091 = vmatpush1.bf16.xpose.msra.mxu0 0
        %2092 = vmatprep.subr.bf16.mxu0 0
        %2093 = vmatpush1.bf16.xpose.msra.mxu0 0
        %2094 = vmatprep.subr.bf16.mxu0 0
        %2095 = vmatpush1.bf16.xpose.msra.mxu0 0
        %2096 = vmatprep.subr.bf16.mxu0 0
        %2097 = vmatpush1.bf16.xpose.msra.mxu0 0
        %2098 = vmatprep.subr.bf16.mxu0 0
        %2099 = vmatpush1.bf16.xpose.msra.mxu0 0
        %2100 = vmatprep.subr.bf16.mxu0 0
        %2101 = vmatpush1.bf16.xpose.msra.mxu0 0
        %2102 = vmatprep.subr.bf16.mxu0 0
        %2103 = vmatpush1.bf16.xpose.msra.mxu0 0
        %2104 = vmatprep.subr.bf16.mxu0 0
        %2105 = vmatpush1.bf16.xpose.msra.mxu0 0
        %2106 = vmatprep.subr.bf16.mxu0 0
        %2107 = vmatpush1.bf16.xpose.msra.mxu0 0
        %2108 = vmatprep.subr.bf16.mxu0 0
        %2109 = vmatpush1.bf16.xpose.msra.mxu0 0
        %2110 = vmatprep.subr.bf16.mxu0 0
        %2111 = vmatpush1.bf16.xpose.msra.mxu0 0
        %2112 = vmatprep.subr.bf16.mxu0 0
        %2113 = vmatpush1.bf16.xpose.msra.mxu0 0
        %2114 = vmatprep.subr.bf16.mxu0 0
        %2115 = vmatpush1.bf16.xpose.msra.mxu0 0
        %2116 = vmatprep.subr.bf16.mxu0 0
        %2117 = vmatpush1.bf16.xpose.msra.mxu0 0
        %2118 = vmatprep.mubr.bf16.mxu0 0
        %2119 = vmatmul.mubr.bf16.gmra.mrb[0].mxu0 %v2081
        %v2120 = vpop.f32.mrb[0].mxu0
        %v2121 = vadd.f32 %v1748, %v2120
        %v2122 = vpop.f32.mrb[0].mxu0
        %v2123 = vpop.f32.mrb[0].mxu0
        %v2124 = vpop.f32.mrb[0].mxu0
        %2125 = vdwg.mxu0
        %v2126 = vsel %vm1334, %v2121, -inf
        %2127 = vmax.xlane.f32.xlu0 %v2126
        %v2128 = vpop.xlane.xlu0 %2127
        %v2129 = vsub.f32 %v2121, %v2128
        %v2130 = vmul.f32 %v2129, 1.442695
        %v2131 = vpow.pop %v2130
        %v2132 = vsel %vm1334, %v2131, 0.0
        %2133 = vadd.xlane.f32.xlu0 %v2132
        %v2134 = vpop.xlane.xlu0 %2133
        %v2135 = vrcp.pop %v2134
        %v2136 = vmul.f32 %v2131, %v2135
        %v2137 = vpack.c.bf16 %v2136, %v2136
        %2138 = vrot.lane.b32.xlu0 %v1809, 32
        %v2139 = vpop.permute.xlu0 %2138
        %v2141 = vsel %vm1334, %v2137, 0
        %v2144 = vsel %vm1350, %v2139, 0
        %2146 = vmatprep.subr.bf16.mxu0 0
        %2147 = vmatpush1.bf16.msra.mxu0 %v2144
        %2148 = vmatprep.subr.bf16.mxu0 0
        %2149 = vmatpush1.bf16.msra.mxu0 0
        %2150 = vmatprep.subr.bf16.mxu0 0
        %2151 = vmatpush1.bf16.msra.mxu0 0
        %2152 = vmatprep.subr.bf16.mxu0 0
        %2153 = vmatpush1.bf16.msra.mxu0 0
        %2154 = vmatprep.subr.bf16.mxu0 0
        %2155 = vmatpush1.bf16.msra.mxu0 0
        %2156 = vmatprep.subr.bf16.mxu0 0
        %2157 = vmatpush1.bf16.msra.mxu0 0
        %2158 = vmatprep.subr.bf16.mxu0 0
        %2159 = vmatpush1.bf16.msra.mxu0 0
        %2160 = vmatprep.subr.bf16.mxu0 0
        %2161 = vmatpush1.bf16.msra.mxu0 0
        %2162 = vmatprep.subr.bf16.mxu0 0
        %2163 = vmatpush1.bf16.msra.mxu0 0
        %2164 = vmatprep.subr.bf16.mxu0 0
        %2165 = vmatpush1.bf16.msra.mxu0 0
        %2166 = vmatprep.subr.bf16.mxu0 0
        %2167 = vmatpush1.bf16.msra.mxu0 0
        %2168 = vmatprep.subr.bf16.mxu0 0
        %2169 = vmatpush1.bf16.msra.mxu0 0
        %2170 = vmatprep.subr.bf16.mxu0 0
        %2171 = vmatpush1.bf16.msra.mxu0 0
        %2172 = vmatprep.subr.bf16.mxu0 0
        %2173 = vmatpush1.bf16.msra.mxu0 0
        %2174 = vmatprep.subr.bf16.mxu0 0
        %2175 = vmatpush1.bf16.msra.mxu0 0
        %2176 = vmatprep.subr.bf16.mxu0 0
        %2177 = vmatpush1.bf16.msra.mxu0 0
        %2178 = vmatprep.mubr.bf16.mxu0 0
        %2179 = vmatmul.mubr.bf16.gmra.mrb[0].mxu0 %v2141
        %v2180 = vpop.f32.mrb[0].mxu0
        %v2181 = vadd.f32 0.0, %v2180
        %v2182 = vpop.f32.mrb[0].mxu0
        %v2183 = vpop.f32.mrb[0].mxu0
        %v2184 = vpop.f32.mrb[0].mxu0
        %2185 = vdwg.mxu0
        %2187 = vrot.lane.b32.xlu0 %v1961, 32
        %v2188 = vpop.permute.xlu0 %2187
        %2191 = vrot.lane.b32.xlu0 %v2071, 64
        %v2192 = vpop.permute.xlu0 %2191
        %2195 = vrot.lane.b32.xlu0 %v2181, 96
        %v2196 = vpop.permute.xlu0 %2195
        %v2198 = vsel %vm1287, %v1851, %v2188
        %v2199 = vsel %vm1740, %v2198, %v2192
        %v2200 = vsel %vm1742, %v2199, %v2196
        %v2201 = vpack.c.bf16 %v2200, %v1743
        %v2202 = vld [vmem:[%s952] sm:$0xf]
        %v2203 = vld [vmem:[%s952 + $0x4] sm:$0xf]
        %v2204 = vld [vmem:[%s952 + $0x8] sm:$0xf]
        %v2205 = vld [vmem:[%s952 + $0xc] sm:$0xf]
        %v2206 = vld [vmem:[%s952 + $0x10] sm:$0xf]
        %v2207 = vld [vmem:[%s952 + $0x14] sm:$0xf]
        %v2208 = vld [vmem:[%s952 + $0x18] sm:$0xf]
        %v2209 = vld [vmem:[%s952 + $0x1c] sm:$0xf]
        %v2210 = vld [vmem:[%s952 + $0x20] sm:$0xf]
        %v2211 = vld [vmem:[%s952 + $0x24] sm:$0xf]
        %v2212 = vld [vmem:[%s952 + $0x28] sm:$0xf]
        %v2213 = vld [vmem:[%s952 + $0x2c] sm:$0xf]
        %v2214 = vld [vmem:[%s952 + $0x30] sm:$0xf]
        %v2215 = vld [vmem:[%s952 + $0x34] sm:$0xf]
        %v2216 = vld [vmem:[%s952 + $0x38] sm:$0xf]
        %v2217 = vld [vmem:[%s952 + $0x3c] sm:$0xf]
        %v2218 = vld [vmem:[%s955] sm:$0x1]
        %v2220 = vlaneseq
        %v2221 = vshrl.u32 %v2220, 7
        %v2222 = vsub.s32 0, %v2221
        %v2223 = vrot.slane %v2218, %v2222
        %v2241 = vunpack.c.l.b16 %v2202
        %v2242 = vunpack.c.l.b16 %v2203
        %v2243 = vunpack.c.l.b16 %v2204
        %v2244 = vunpack.c.l.b16 %v2205
        %v2245 = vunpack.c.l.b16 %v2206
        %v2246 = vunpack.c.l.b16 %v2207
        %v2247 = vunpack.c.l.b16 %v2208
        %v2248 = vunpack.c.l.b16 %v2209
        %v2249 = vunpack.c.l.b16 %v2210
        %v2250 = vunpack.c.l.b16 %v2211
        %v2251 = vunpack.c.l.b16 %v2212
        %v2252 = vunpack.c.l.b16 %v2213
        %v2253 = vunpack.c.l.b16 %v2214
        %v2254 = vunpack.c.l.b16 %v2215
        %v2255 = vunpack.c.l.b16 %v2216
        %v2256 = vunpack.c.l.b16 %v2217
        %v2257 = vpack.c.b16 %v2242, %v2241
        %v2258 = vpack.c.b16 %v2244, %v2243
        %v2259 = vpack.c.b16 %v2246, %v2245
        %v2260 = vpack.c.b16 %v2248, %v2247
        %v2261 = vpack.c.b16 %v2250, %v2249
        %v2262 = vpack.c.b16 %v2252, %v2251
        %v2263 = vpack.c.b16 %v2254, %v2253
        %v2264 = vpack.c.b16 %v2256, %v2255
        %2273 = vmatprep.subr.bf16.mxu0 0
        %2274 = vmatpush1.bf16.msra.mxu0 %v2257
        %2275 = vmatprep.subr.bf16.mxu0 0
        %2276 = vmatpush1.bf16.msra.mxu0 %v2258
        %2277 = vmatprep.subr.bf16.mxu0 0
        %2278 = vmatpush1.bf16.msra.mxu0 %v2259
        %2279 = vmatprep.subr.bf16.mxu0 0
        %2280 = vmatpush1.bf16.msra.mxu0 %v2260
        %2281 = vmatprep.subr.bf16.mxu0 0
        %2282 = vmatpush1.bf16.msra.mxu0 %v2261
        %2283 = vmatprep.subr.bf16.mxu0 0
        %2284 = vmatpush1.bf16.msra.mxu0 %v2262
        %2285 = vmatprep.subr.bf16.mxu0 0
        %2286 = vmatpush1.bf16.msra.mxu0 %v2263
        %2287 = vmatprep.subr.bf16.mxu0 0
        %2288 = vmatpush1.bf16.msra.mxu0 %v2264
        %2289 = vmatprep.subr.bf16.mxu0 0
        %2290 = vmatpush1.bf16.msra.mxu0 0
        %2291 = vmatprep.subr.bf16.mxu0 0
        %2292 = vmatpush1.bf16.msra.mxu0 0
        %2293 = vmatprep.subr.bf16.mxu0 0
        %2294 = vmatpush1.bf16.msra.mxu0 0
        %2295 = vmatprep.subr.bf16.mxu0 0
        %2296 = vmatpush1.bf16.msra.mxu0 0
        %2297 = vmatprep.subr.bf16.mxu0 0
        %2298 = vmatpush1.bf16.msra.mxu0 0
        %2299 = vmatprep.subr.bf16.mxu0 0
        %2300 = vmatpush1.bf16.msra.mxu0 0
        %2301 = vmatprep.subr.bf16.mxu0 0
        %2302 = vmatpush1.bf16.msra.mxu0 0
        %2303 = vmatprep.subr.bf16.mxu0 0
        %2304 = vmatpush1.bf16.msra.mxu0 0
        %2305 = vmatprep.mubr.bf16.mxu0 0
        %2306 = vmatmul.mubr.bf16.gmra.mrb[0].mxu0 %v2201
        %v2307 = vpop.f32.mrb[0].mxu0
        %v2308 = vadd.f32 %v2223, %v2307
        %v2309 = vpop.f32.mrb[0].mxu0
        %v2310 = vpop.f32.mrb[0].mxu0
        %v2311 = vadd.f32 %v2223, %v2310
        %v2312 = vpop.f32.mrb[0].mxu0
        %2313 = vdwg.mxu0
        %v2314 = vadd.f32 %v2308, %v1016
        %v2315 = vadd.f32 %v2311, %v1017
        %v2316 = vld [vmem:[%s797] sm:$0x1]
        %v2317 = vld [vmem:[%s805] sm:$0x1]
        %2318 = vadd.xlane.f32.xlu0 %v2314
        %v2319 = vpop.xlane.xlu0 %2318
        %2320 = vadd.xlane.f32.xlu0 %v2315
        %v2321 = vpop.xlane.xlu0 %2320
        %v2322 = vrcp.pop 128.0
        %v2323 = vmul.f32 %v2319, %v2322
        %v2324 = vmul.f32 %v2321, %v2322
        %v2325 = vsub.f32 %v2314, %v2323
        %v2326 = vsub.f32 %v2315, %v2324
        %v2327 = vmul.f32 %v2325, %v2325
        %v2328 = vmul.f32 %v2326, %v2326
        %2329 = vadd.xlane.f32.xlu0 %v2327
        %v2330 = vpop.xlane.xlu0 %2329
        %2331 = vadd.xlane.f32.xlu0 %v2328
        %v2332 = vpop.xlane.xlu0 %2331
        %v2333 = vmul.f32 %v2330, %v2322
        %v2334 = vmul.f32 %v2332, %v2322
        %v2335 = vadd.f32 %v2333, 1e-12
        %v2336 = vadd.f32 %v2334, 1e-12
        %v2337 = vrsqrt.pop %v2335
        %v2338 = vrsqrt.pop %v2336
        %v2339 = vmul.f32 %v2325, %v2337
        %v2340 = vmul.f32 %v2326, %v2338
        %v2342 = vlaneseq
        %v2343 = vshrl.u32 %v2342, 7
        %v2344 = vsub.s32 0, %v2343
        %v2345 = vrot.slane %v2316, %v2344
        %v2347 = vmul.f32 %v2339, %v2345
        %v2348 = vmul.f32 %v2340, %v2345
        %v2350 = vlaneseq
        %v2351 = vshrl.u32 %v2350, 7
        %v2352 = vsub.s32 0, %v2351
        %v2353 = vrot.slane %v2317, %v2352
        %v2355 = vadd.f32 %v2347, %v2353
        %v2356 = vadd.f32 %v2348, %v2353
        %v2357 = vpack.c.bf16 %v2356, %v2355
        %v2358 = vld [vmem:[%s814] sm:$0xff]
        %v2359 = vld [vmem:[%s814 + $0x8] sm:$0xff]
        %v2360 = vld [vmem:[%s814 + $0x10] sm:$0xff]
        %v2361 = vld [vmem:[%s814 + $0x18] sm:$0xff]
        %v2362 = vld [vmem:[%s814 + $0x20] sm:$0xff]
        %v2363 = vld [vmem:[%s814 + $0x28] sm:$0xff]
        %v2364 = vld [vmem:[%s814 + $0x30] sm:$0xff]
        %v2365 = vld [vmem:[%s814 + $0x38] sm:$0xff]
        %v2366 = vld [vmem:[%s814 + $0x40] sm:$0xff]
        %v2367 = vld [vmem:[%s814 + $0x48] sm:$0xff]
        %v2368 = vld [vmem:[%s814 + $0x50] sm:$0xff]
        %v2369 = vld [vmem:[%s814 + $0x58] sm:$0xff]
        %v2370 = vld [vmem:[%s814 + $0x60] sm:$0xff]
        %v2371 = vld [vmem:[%s814 + $0x68] sm:$0xff]
        %v2372 = vld [vmem:[%s814 + $0x70] sm:$0xff]
        %v2373 = vld [vmem:[%s814 + $0x78] sm:$0xff]
        %v2374 = vld [vmem:[%s959] sm:$0x3]
        %v2376 = vlaneseq
        %v2377 = vshrl.u32 %v2376, 7
        %v2378 = vsub.s32 0, %v2377
        %v2379 = vrot.slane %v2374, %v2378
        %v2380 = vlaneseq
        %v2381 = vshrl.u32 %v2380, 7
        %v2382 = vsub.s32 1, %v2381
        %v2383 = vrot.slane %v2374, %v2382
        %v2402 = vunpack.c.l.b16 %v2358
        %v2403 = vunpack.c.h.b16 %v2358
        %v2404 = vunpack.c.l.b16 %v2359
        %v2405 = vunpack.c.h.b16 %v2359
        %v2406 = vunpack.c.l.b16 %v2360
        %v2407 = vunpack.c.h.b16 %v2360
        %v2408 = vunpack.c.l.b16 %v2361
        %v2409 = vunpack.c.h.b16 %v2361
        %v2410 = vunpack.c.l.b16 %v2362
        %v2411 = vunpack.c.h.b16 %v2362
        %v2412 = vunpack.c.l.b16 %v2363
        %v2413 = vunpack.c.h.b16 %v2363
        %v2414 = vunpack.c.l.b16 %v2364
        %v2415 = vunpack.c.h.b16 %v2364
        %v2416 = vunpack.c.l.b16 %v2365
        %v2417 = vunpack.c.h.b16 %v2365
        %v2418 = vunpack.c.l.b16 %v2366
        %v2419 = vunpack.c.h.b16 %v2366
        %v2420 = vunpack.c.l.b16 %v2367
        %v2421 = vunpack.c.h.b16 %v2367
        %v2422 = vunpack.c.l.b16 %v2368
        %v2423 = vunpack.c.h.b16 %v2368
        %v2424 = vunpack.c.l.b16 %v2369
        %v2425 = vunpack.c.h.b16 %v2369
        %v2426 = vunpack.c.l.b16 %v2370
        %v2427 = vunpack.c.h.b16 %v2370
        %v2428 = vunpack.c.l.b16 %v2371
        %v2429 = vunpack.c.h.b16 %v2371
        %v2430 = vunpack.c.l.b16 %v2372
        %v2431 = vunpack.c.h.b16 %v2372
        %v2432 = vunpack.c.l.b16 %v2373
        %v2433 = vunpack.c.h.b16 %v2373
        %v2434 = vpack.c.b16 %v2404, %v2402
        %v2435 = vpack.c.b16 %v2405, %v2403
        %v2436 = vpack.c.b16 %v2408, %v2406
        %v2437 = vpack.c.b16 %v2409, %v2407
        %v2438 = vpack.c.b16 %v2412, %v2410
        %v2439 = vpack.c.b16 %v2413, %v2411
        %v2440 = vpack.c.b16 %v2416, %v2414
        %v2441 = vpack.c.b16 %v2417, %v2415
        %v2442 = vpack.c.b16 %v2420, %v2418
        %v2443 = vpack.c.b16 %v2421, %v2419
        %v2444 = vpack.c.b16 %v2424, %v2422
        %v2445 = vpack.c.b16 %v2425, %v2423
        %v2446 = vpack.c.b16 %v2428, %v2426
        %v2447 = vpack.c.b16 %v2429, %v2427
        %v2448 = vpack.c.b16 %v2432, %v2430
        %v2449 = vpack.c.b16 %v2433, %v2431
        %2466 = vmatprep.subr.bf16.mxu0 %v2435
        %2467 = vmatpush1.bf16.msra.mxu0 %v2434
        %2468 = vmatprep.subr.bf16.mxu0 %v2437
        %2469 = vmatpush1.bf16.msra.mxu0 %v2436
        %2470 = vmatprep.subr.bf16.mxu0 %v2439
        %2471 = vmatpush1.bf16.msra.mxu0 %v2438
        %2472 = vmatprep.subr.bf16.mxu0 %v2441
        %2473 = vmatpush1.bf16.msra.mxu0 %v2440
        %2474 = vmatprep.subr.bf16.mxu0 %v2443
        %2475 = vmatpush1.bf16.msra.mxu0 %v2442
        %2476 = vmatprep.subr.bf16.mxu0 %v2445
        %2477 = vmatpush1.bf16.msra.mxu0 %v2444
        %2478 = vmatprep.subr.bf16.mxu0 %v2447
        %2479 = vmatpush1.bf16.msra.mxu0 %v2446
        %2480 = vmatprep.subr.bf16.mxu0 %v2449
        %2481 = vmatpush1.bf16.msra.mxu0 %v2448
        %2482 = vmatprep.subr.bf16.mxu0 0
        %2483 = vmatpush1.bf16.msra.mxu0 0
        %2484 = vmatprep.subr.bf16.mxu0 0
        %2485 = vmatpush1.bf16.msra.mxu0 0
        %2486 = vmatprep.subr.bf16.mxu0 0
        %2487 = vmatpush1.bf16.msra.mxu0 0
        %2488 = vmatprep.subr.bf16.mxu0 0
        %2489 = vmatpush1.bf16.msra.mxu0 0
        %2490 = vmatprep.subr.bf16.mxu0 0
        %2491 = vmatpush1.bf16.msra.mxu0 0
        %2492 = vmatprep.subr.bf16.mxu0 0
        %2493 = vmatpush1.bf16.msra.mxu0 0
        %2494 = vmatprep.subr.bf16.mxu0 0
        %2495 = vmatpush1.bf16.msra.mxu0 0
        %2496 = vmatprep.subr.bf16.mxu0 0
        %2497 = vmatpush1.bf16.msra.mxu0 0
        %2498 = vmatprep.mubr.bf16.mxu0 0
        %2499 = vmatmul.mubr.bf16.gmra.mrb[0].mxu0 %v2357
        %v2500 = vpop.f32.mrb[0].mxu0
        %v2501 = vadd.f32 %v2379, %v2500
        %v2502 = vpop.f32.mrb[0].mxu0
        %v2503 = vadd.f32 %v2383, %v2502
        %v2504 = vpop.f32.mrb[0].mxu0
        %v2505 = vadd.f32 %v2379, %v2504
        %v2506 = vpop.f32.mrb[0].mxu0
        %v2507 = vadd.f32 %v2383, %v2506
        %2508 = vdwg.mxu0
        %v2509 = vmul.f32 %v2501, %v2501
        %v2510 = vmul.f32 %v2503, %v2503
        %v2511 = vmul.f32 %v2505, %v2505
        %v2512 = vmul.f32 %v2507, %v2507
        %v2513 = vmul.f32 %v2501, %v2509
        %v2514 = vmul.f32 %v2503, %v2510
        %v2515 = vmul.f32 %v2505, %v2511
        %v2516 = vmul.f32 %v2507, %v2512
        %v2517 = vmul.f32 %v2513, 0.044715
        %v2518 = vmul.f32 %v2514, 0.044715
        %v2519 = vmul.f32 %v2515, 0.044715
        %v2520 = vmul.f32 %v2516, 0.044715
        %v2521 = vadd.f32 %v2501, %v2517
        %v2522 = vadd.f32 %v2503, %v2518
        %v2523 = vadd.f32 %v2505, %v2519
        %v2524 = vadd.f32 %v2507, %v2520
        %v2525 = vmul.f32 %v2521, 0.7978846
        %v2526 = vmul.f32 %v2522, 0.7978846
        %v2527 = vmul.f32 %v2523, 0.7978846
        %v2528 = vmul.f32 %v2524, 0.7978846
        %v2529 = vtanh.pop %v2525
        %v2530 = vtanh.pop %v2526
        %v2531 = vtanh.pop %v2527
        %v2532 = vtanh.pop %v2528
        %v2533 = vadd.f32 %v2529, 1.0
        %v2534 = vadd.f32 %v2530, 1.0
        %v2535 = vadd.f32 %v2531, 1.0
        %v2536 = vadd.f32 %v2532, 1.0
        %v2537 = vmul.f32 %v2533, 0.5
        %v2538 = vmul.f32 %v2534, 0.5
        %v2539 = vmul.f32 %v2535, 0.5
        %v2540 = vmul.f32 %v2536, 0.5
        %v2541 = vmul.f32 %v2501, %v2537
        %v2542 = vmul.f32 %v2503, %v2538
        %v2543 = vmul.f32 %v2505, %v2539
        %v2544 = vmul.f32 %v2507, %v2540
        %v2545 = vpack.c.bf16 %v2543, %v2541
        %v2546 = vpack.c.bf16 %v2544, %v2542
        %v2547 = vld [vmem:[%s823] sm:$0xf]
        %v2548 = vld [vmem:[%s823 + $0x4] sm:$0xf]
        %v2549 = vld [vmem:[%s823 + $0x8] sm:$0xf]
        %v2550 = vld [vmem:[%s823 + $0xc] sm:$0xf]
        %v2551 = vld [vmem:[%s823 + $0x10] sm:$0xf]
        %v2552 = vld [vmem:[%s823 + $0x14] sm:$0xf]
        %v2553 = vld [vmem:[%s823 + $0x18] sm:$0xf]
        %v2554 = vld [vmem:[%s823 + $0x1c] sm:$0xf]
        %v2555 = vld [vmem:[%s823 + $0x20] sm:$0xf]
        %v2556 = vld [vmem:[%s823 + $0x24] sm:$0xf]
        %v2557 = vld [vmem:[%s823 + $0x28] sm:$0xf]
        %v2558 = vld [vmem:[%s823 + $0x2c] sm:$0xf]
        %v2559 = vld [vmem:[%s823 + $0x30] sm:$0xf]
        %v2560 = vld [vmem:[%s823 + $0x34] sm:$0xf]
        %v2561 = vld [vmem:[%s823 + $0x38] sm:$0xf]
        %v2562 = vld [vmem:[%s823 + $0x3c] sm:$0xf]
        %v2563 = vld [vmem:[%s823 + $0x40] sm:$0xf]
        %v2564 = vld [vmem:[%s823 + $0x44] sm:$0xf]
        %v2565 = vld [vmem:[%s823 + $0x48] sm:$0xf]
        %v2566 = vld [vmem:[%s823 + $0x4c] sm:$0xf]
        %v2567 = vld [vmem:[%s823 + $0x50] sm:$0xf]
        %v2568 = vld [vmem:[%s823 + $0x54] sm:$0xf]
        %v2569 = vld [vmem:[%s823 + $0x58] sm:$0xf]
        %v2570 = vld [vmem:[%s823 + $0x5c] sm:$0xf]
        %v2571 = vld [vmem:[%s823 + $0x60] sm:$0xf]
        %v2572 = vld [vmem:[%s823 + $0x64] sm:$0xf]
        %v2573 = vld [vmem:[%s823 + $0x68] sm:$0xf]
        %v2574 = vld [vmem:[%s823 + $0x6c] sm:$0xf]
        %v2575 = vld [vmem:[%s823 + $0x70] sm:$0xf]
        %v2576 = vld [vmem:[%s823 + $0x74] sm:$0xf]
        %v2577 = vld [vmem:[%s823 + $0x78] sm:$0xf]
        %v2578 = vld [vmem:[%s823 + $0x7c] sm:$0xf]
        %v2579 = vld [vmem:[%s962] sm:$0x1]
        %v2581 = vlaneseq
        %v2582 = vshrl.u32 %v2581, 7
        %v2583 = vsub.s32 0, %v2582
        %v2584 = vrot.slane %v2579, %v2583
        %v2618 = vunpack.c.l.b16 %v2547
        %v2619 = vunpack.c.l.b16 %v2548
        %v2620 = vunpack.c.l.b16 %v2549
        %v2621 = vunpack.c.l.b16 %v2550
        %v2622 = vunpack.c.l.b16 %v2551
        %v2623 = vunpack.c.l.b16 %v2552
        %v2624 = vunpack.c.l.b16 %v2553
        %v2625 = vunpack.c.l.b16 %v2554
        %v2626 = vunpack.c.l.b16 %v2555
        %v2627 = vunpack.c.l.b16 %v2556
        %v2628 = vunpack.c.l.b16 %v2557
        %v2629 = vunpack.c.l.b16 %v2558
        %v2630 = vunpack.c.l.b16 %v2559
        %v2631 = vunpack.c.l.b16 %v2560
        %v2632 = vunpack.c.l.b16 %v2561
        %v2633 = vunpack.c.l.b16 %v2562
        %v2634 = vunpack.c.l.b16 %v2563
        %v2635 = vunpack.c.l.b16 %v2564
        %v2636 = vunpack.c.l.b16 %v2565
        %v2637 = vunpack.c.l.b16 %v2566
        %v2638 = vunpack.c.l.b16 %v2567
        %v2639 = vunpack.c.l.b16 %v2568
        %v2640 = vunpack.c.l.b16 %v2569
        %v2641 = vunpack.c.l.b16 %v2570
        %v2642 = vunpack.c.l.b16 %v2571
        %v2643 = vunpack.c.l.b16 %v2572
        %v2644 = vunpack.c.l.b16 %v2573
        %v2645 = vunpack.c.l.b16 %v2574
        %v2646 = vunpack.c.l.b16 %v2575
        %v2647 = vunpack.c.l.b16 %v2576
        %v2648 = vunpack.c.l.b16 %v2577
        %v2649 = vunpack.c.l.b16 %v2578
        %v2650 = vpack.c.b16 %v2619, %v2618
        %v2651 = vpack.c.b16 %v2621, %v2620
        %v2652 = vpack.c.b16 %v2623, %v2622
        %v2653 = vpack.c.b16 %v2625, %v2624
        %v2654 = vpack.c.b16 %v2627, %v2626
        %v2655 = vpack.c.b16 %v2629, %v2628
        %v2656 = vpack.c.b16 %v2631, %v2630
        %v2657 = vpack.c.b16 %v2633, %v2632
        %v2658 = vpack.c.b16 %v2635, %v2634
        %v2659 = vpack.c.b16 %v2637, %v2636
        %v2660 = vpack.c.b16 %v2639, %v2638
        %v2661 = vpack.c.b16 %v2641, %v2640
        %v2662 = vpack.c.b16 %v2643, %v2642
        %v2663 = vpack.c.b16 %v2645, %v2644
        %v2664 = vpack.c.b16 %v2647, %v2646
        %v2665 = vpack.c.b16 %v2649, %v2648
        %2682 = vmatprep.subr.bf16.mxu0 0
        %2683 = vmatpush1.bf16.msra.mxu0 %v2650
        %2684 = vmatprep.subr.bf16.mxu0 0
        %2685 = vmatpush1.bf16.msra.mxu0 %v2651
        %2686 = vmatprep.subr.bf16.mxu0 0
        %2687 = vmatpush1.bf16.msra.mxu0 %v2652
        %2688 = vmatprep.subr.bf16.mxu0 0
        %2689 = vmatpush1.bf16.msra.mxu0 %v2653
        %2690 = vmatprep.subr.bf16.mxu0 0
        %2691 = vmatpush1.bf16.msra.mxu0 %v2654
        %2692 = vmatprep.subr.bf16.mxu0 0
        %2693 = vmatpush1.bf16.msra.mxu0 %v2655
        %2694 = vmatprep.subr.bf16.mxu0 0
        %2695 = vmatpush1.bf16.msra.mxu0 %v2656
        %2696 = vmatprep.subr.bf16.mxu0 0
        %2697 = vmatpush1.bf16.msra.mxu0 %v2657
        %2698 = vmatprep.subr.bf16.mxu0 0
        %2699 = vmatpush1.bf16.msra.mxu0 %v2658
        %2700 = vmatprep.subr.bf16.mxu0 0
        %2701 = vmatpush1.bf16.msra.mxu0 %v2659
        %2702 = vmatprep.subr.bf16.mxu0 0
        %2703 = vmatpush1.bf16.msra.mxu0 %v2660
        %2704 = vmatprep.subr.bf16.mxu0 0
        %2705 = vmatpush1.bf16.msra.mxu0 %v2661
        %2706 = vmatprep.subr.bf16.mxu0 0
        %2707 = vmatpush1.bf16.msra.mxu0 %v2662
        %2708 = vmatprep.subr.bf16.mxu0 0
        %2709 = vmatpush1.bf16.msra.mxu0 %v2663
        %2710 = vmatprep.subr.bf16.mxu0 0
        %2711 = vmatpush1.bf16.msra.mxu0 %v2664
        %2712 = vmatprep.subr.bf16.mxu0 0
        %2713 = vmatpush1.bf16.msra.mxu0 %v2665
        %2714 = vmatprep.mubr.bf16.mxu0 %v2546
        %2715 = vmatmul.mubr.bf16.gmra.mrb[0].mxu0 %v2545
        %v2716 = vpop.f32.mrb[0].mxu0
        %v2717 = vadd.f32 %v2584, %v2716
        %v2718 = vpop.f32.mrb[0].mxu0
        %v2719 = vpop.f32.mrb[0].mxu0
        %v2720 = vadd.f32 %v2584, %v2719
        %v2721 = vpop.f32.mrb[0].mxu0
        %2722 = vdwg.mxu0
        %v2723 = vadd.f32 %v2717, %v2355
        %v2724 = vadd.f32 %v2720, %v2356
        %v2725 = vld [vmem:[%s831] sm:$0x1]
        %v2726 = vld [vmem:[%s839] sm:$0x1]
        %2727 = vadd.xlane.f32.xlu0 %v2723
        %v2728 = vpop.xlane.xlu0 %2727
        %2729 = vadd.xlane.f32.xlu0 %v2724
        %v2730 = vpop.xlane.xlu0 %2729
        %v2731 = vmul.f32 %v2728, %v2322
        %v2732 = vmul.f32 %v2730, %v2322
        %v2733 = vsub.f32 %v2723, %v2731
        %v2734 = vsub.f32 %v2724, %v2732
        %v2735 = vmul.f32 %v2733, %v2733
        %v2736 = vmul.f32 %v2734, %v2734
        %2737 = vadd.xlane.f32.xlu0 %v2735
        %v2738 = vpop.xlane.xlu0 %2737
        %2739 = vadd.xlane.f32.xlu0 %v2736
        %v2740 = vpop.xlane.xlu0 %2739
        %v2741 = vmul.f32 %v2738, %v2322
        %v2742 = vmul.f32 %v2740, %v2322
        %v2743 = vadd.f32 %v2741, 1e-12
        %v2744 = vadd.f32 %v2742, 1e-12
        %v2745 = vrsqrt.pop %v2743
        %v2746 = vrsqrt.pop %v2744
        %v2747 = vmul.f32 %v2733, %v2745
        %v2748 = vmul.f32 %v2734, %v2746
        %v2750 = vlaneseq
        %v2751 = vshrl.u32 %v2750, 7
        %v2752 = vsub.s32 0, %v2751
        %v2753 = vrot.slane %v2725, %v2752
        %v2755 = vmul.f32 %v2747, %v2753
        %v2756 = vmul.f32 %v2748, %v2753
        %v2758 = vlaneseq
        %v2759 = vshrl.u32 %v2758, 7
        %v2760 = vsub.s32 0, %v2759
        %v2761 = vrot.slane %v2726, %v2760
        %v2763 = vadd.f32 %v2755, %v2761
        %v2764 = vadd.f32 %v2756, %v2761
        %v2765 = vpack.c.bf16 %v2764, %v2763
        %2766 = vst [vmem:[#allocation2] sm:$0xff] %v2765
        %p2767 = scmp.eq.s32.totalorder %s34, 1
        // Predicated region
        $region149: #{bert_classifier_forward.1} parent=99 // pred_check
          %p2768 = pneg %p2767
        $region150: #{bert_classifier_forward.1} parent=99 // pred_check_branch
          %2770 = sbr.rel (%p2768) target = $region152
        $region151: #{bert_classifier_forward.1} parent=99 // pred_region
          %v2772 = vrot.slane %v2764, 7
          %vm2774 = vcmask 1040384
          %v2775 = vsel %vm2774, %v2763, %v2772
          %v2776 = vpack.c.bf16 %v2775, %v2775
          %v2777 = vld [vmem:[%s16] sm:$0xf]
          %v2778 = vld [vmem:[%s16 + $0x4] sm:$0xf]
          %v2779 = vld [vmem:[%s16 + $0x8] sm:$0xf]
          %v2780 = vld [vmem:[%s16 + $0xc] sm:$0xf]
          %v2781 = vld [vmem:[%s16 + $0x10] sm:$0xf]
          %v2782 = vld [vmem:[%s16 + $0x14] sm:$0xf]
          %v2783 = vld [vmem:[%s16 + $0x18] sm:$0xf]
          %v2784 = vld [vmem:[%s16 + $0x1c] sm:$0xf]
          %v2785 = vld [vmem:[%s16 + $0x20] sm:$0xf]
          %v2786 = vld [vmem:[%s16 + $0x24] sm:$0xf]
          %v2787 = vld [vmem:[%s16 + $0x28] sm:$0xf]
          %v2788 = vld [vmem:[%s16 + $0x2c] sm:$0xf]
          %v2789 = vld [vmem:[%s16 + $0x30] sm:$0xf]
          %v2790 = vld [vmem:[%s16 + $0x34] sm:$0xf]
          %v2791 = vld [vmem:[%s16 + $0x38] sm:$0xf]
          %v2792 = vld [vmem:[%s16 + $0x3c] sm:$0xf]
          %v2793 = vld [vmem:[#allocation14] sm:$0x1]
          %v2795 = vlaneseq
          %v2796 = vshrl.u32 %v2795, 7
          %v2797 = vsub.s32 0, %v2796
          %v2798 = vrot.slane %v2793, %v2797
          %v2816 = vunpack.c.l.b16 %v2777
          %v2817 = vunpack.c.l.b16 %v2778
          %v2818 = vunpack.c.l.b16 %v2779
          %v2819 = vunpack.c.l.b16 %v2780
          %v2820 = vunpack.c.l.b16 %v2781
          %v2821 = vunpack.c.l.b16 %v2782
          %v2822 = vunpack.c.l.b16 %v2783
          %v2823 = vunpack.c.l.b16 %v2784
          %v2824 = vunpack.c.l.b16 %v2785
          %v2825 = vunpack.c.l.b16 %v2786
          %v2826 = vunpack.c.l.b16 %v2787
          %v2827 = vunpack.c.l.b16 %v2788
          %v2828 = vunpack.c.l.b16 %v2789
          %v2829 = vunpack.c.l.b16 %v2790
          %v2830 = vunpack.c.l.b16 %v2791
          %v2831 = vunpack.c.l.b16 %v2792
          %v2832 = vpack.c.b16 %v2817, %v2816
          %v2833 = vpack.c.b16 %v2819, %v2818
          %v2834 = vpack.c.b16 %v2821, %v2820
          %v2835 = vpack.c.b16 %v2823, %v2822
          %v2836 = vpack.c.b16 %v2825, %v2824
          %v2837 = vpack.c.b16 %v2827, %v2826
          %v2838 = vpack.c.b16 %v2829, %v2828
          %v2839 = vpack.c.b16 %v2831, %v2830
          %2848 = vmatprep.subr.bf16.mxu0 0
          %2849 = vmatpush1.bf16.msra.mxu0 %v2832
          %2850 = vmatprep.subr.bf16.mxu0 0
          %2851 = vmatpush1.bf16.msra.mxu0 %v2833
          %2852 = vmatprep.subr.bf16.mxu0 0
          %2853 = vmatpush1.bf16.msra.mxu0 %v2834
          %2854 = vmatprep.subr.bf16.mxu0 0
          %2855 = vmatpush1.bf16.msra.mxu0 %v2835
          %2856 = vmatprep.subr.bf16.mxu0 0
          %2857 = vmatpush1.bf16.msra.mxu0 %v2836
          %2858 = vmatprep.subr.bf16.mxu0 0
          %2859 = vmatpush1.bf16.msra.mxu0 %v2837
          %2860 = vmatprep.subr.bf16.mxu0 0
          %2861 = vmatpush1.bf16.msra.mxu0 %v2838
          %2862 = vmatprep.subr.bf16.mxu0 0
          %2863 = vmatpush1.bf16.msra.mxu0 %v2839
          %2864 = vmatprep.subr.bf16.mxu0 0
          %2865 = vmatpush1.bf16.msra.mxu0 0
          %2866 = vmatprep.subr.bf16.mxu0 0
          %2867 = vmatpush1.bf16.msra.mxu0 0
          %2868 = vmatprep.subr.bf16.mxu0 0
          %2869 = vmatpush1.bf16.msra.mxu0 0
          %2870 = vmatprep.subr.bf16.mxu0 0
          %2871 = vmatpush1.bf16.msra.mxu0 0
          %2872 = vmatprep.subr.bf16.mxu0 0
          %2873 = vmatpush1.bf16.msra.mxu0 0
          %2874 = vmatprep.subr.bf16.mxu0 0
          %2875 = vmatpush1.bf16.msra.mxu0 0
          %2876 = vmatprep.subr.bf16.mxu0 0
          %2877 = vmatpush1.bf16.msra.mxu0 0
          %2878 = vmatprep.subr.bf16.mxu0 0
          %2879 = vmatpush1.bf16.msra.mxu0 0
          %2880 = vmatprep.mubr.bf16.mxu0 0
          %2881 = vmatmul.mubr.bf16.gmra.mrb[0].mxu0 %v2776
          %v2882 = vpop.f32.mrb[0].mxu0
          %v2883 = vadd.f32 %v2798, %v2882
          %v2884 = vpop.f32.mrb[0].mxu0
          %v2885 = vpop.f32.mrb[0].mxu0
          %v2886 = vpop.f32.mrb[0].mxu0
          %2887 = vdwg.mxu0
          %v2888 = vtanh.pop %v2883
          %v2889 = vpack.c.bf16 %v2888, %v2888
          %v2890 = vld [vmem:[%s18] sm:$0xf]
          %v2891 = vld [vmem:[%s18 + $0x4] sm:$0xf]
          %v2892 = vld [vmem:[%s18 + $0x8] sm:$0xf]
          %v2893 = vld [vmem:[%s18 + $0xc] sm:$0xf]
          %v2894 = vld [vmem:[%s18 + $0x10] sm:$0xf]
          %v2895 = vld [vmem:[%s18 + $0x14] sm:$0xf]
          %v2896 = vld [vmem:[%s18 + $0x18] sm:$0xf]
          %v2897 = vld [vmem:[%s18 + $0x1c] sm:$0xf]
          %v2898 = vld [vmem:[%s18 + $0x20] sm:$0xf]
          %v2899 = vld [vmem:[%s18 + $0x24] sm:$0xf]
          %v2900 = vld [vmem:[%s18 + $0x28] sm:$0xf]
          %v2901 = vld [vmem:[%s18 + $0x2c] sm:$0xf]
          %v2902 = vld [vmem:[%s18 + $0x30] sm:$0xf]
          %v2903 = vld [vmem:[%s18 + $0x34] sm:$0xf]
          %v2904 = vld [vmem:[%s18 + $0x38] sm:$0xf]
          %v2905 = vld [vmem:[%s18 + $0x3c] sm:$0xf]
          %v2906 = vld [vmem:[#allocation15] sm:$0x1]
          %v2908 = vlaneseq
          %v2909 = vshrl.u32 %v2908, 7
          %v2910 = vsub.s32 0, %v2909
          %v2911 = vrot.slane %v2906, %v2910
          %v2929 = vunpack.c.l.b16 %v2890
          %v2930 = vunpack.c.l.b16 %v2891
          %v2931 = vunpack.c.l.b16 %v2892
          %v2932 = vunpack.c.l.b16 %v2893
          %v2933 = vunpack.c.l.b16 %v2894
          %v2934 = vunpack.c.l.b16 %v2895
          %v2935 = vunpack.c.l.b16 %v2896
          %v2936 = vunpack.c.l.b16 %v2897
          %v2937 = vunpack.c.l.b16 %v2898
          %v2938 = vunpack.c.l.b16 %v2899
          %v2939 = vunpack.c.l.b16 %v2900
          %v2940 = vunpack.c.l.b16 %v2901
          %v2941 = vunpack.c.l.b16 %v2902
          %v2942 = vunpack.c.l.b16 %v2903
          %v2943 = vunpack.c.l.b16 %v2904
          %v2944 = vunpack.c.l.b16 %v2905
          %v2945 = vpack.c.b16 %v2930, %v2929
          %v2946 = vpack.c.b16 %v2932, %v2931
          %v2947 = vpack.c.b16 %v2934, %v2933
          %v2948 = vpack.c.b16 %v2936, %v2935
          %v2949 = vpack.c.b16 %v2938, %v2937
          %v2950 = vpack.c.b16 %v2940, %v2939
          %v2951 = vpack.c.b16 %v2942, %v2941
          %v2952 = vpack.c.b16 %v2944, %v2943
          %2961 = vmatprep.subr.bf16.mxu0 0
          %2962 = vmatpush1.bf16.msra.mxu0 %v2945
          %2963 = vmatprep.subr.bf16.mxu0 0
          %2964 = vmatpush1.bf16.msra.mxu0 %v2946
          %2965 = vmatprep.subr.bf16.mxu0 0
          %2966 = vmatpush1.bf16.msra.mxu0 %v2947
          %2967 = vmatprep.subr.bf16.mxu0 0
          %2968 = vmatpush1.bf16.msra.mxu0 %v2948
          %2969 = vmatprep.subr.bf16.mxu0 0
          %2970 = vmatpush1.bf16.msra.mxu0 %v2949
          %2971 = vmatprep.subr.bf16.mxu0 0
          %2972 = vmatpush1.bf16.msra.mxu0 %v2950
          %2973 = vmatprep.subr.bf16.mxu0 0
          %2974 = vmatpush1.bf16.msra.mxu0 %v2951
          %2975 = vmatprep.subr.bf16.mxu0 0
          %2976 = vmatpush1.bf16.msra.mxu0 %v2952
          %2977 = vmatprep.subr.bf16.mxu0 0
          %2978 = vmatpush1.bf16.msra.mxu0 0
          %2979 = vmatprep.subr.bf16.mxu0 0
          %2980 = vmatpush1.bf16.msra.mxu0 0
          %2981 = vmatprep.subr.bf16.mxu0 0
          %2982 = vmatpush1.bf16.msra.mxu0 0
          %2983 = vmatprep.subr.bf16.mxu0 0
          %2984 = vmatpush1.bf16.msra.mxu0 0
          %2985 = vmatprep.subr.bf16.mxu0 0
          %2986 = vmatpush1.bf16.msra.mxu0 0
          %2987 = vmatprep.subr.bf16.mxu0 0
          %2988 = vmatpush1.bf16.msra.mxu0 0
          %2989 = vmatprep.subr.bf16.mxu0 0
          %2990 = vmatpush1.bf16.msra.mxu0 0
          %2991 = vmatprep.subr.bf16.mxu0 0
          %2992 = vmatpush1.bf16.msra.mxu0 0
          %2993 = vmatprep.mubr.bf16.mxu0 0
          %2994 = vmatmul.mubr.bf16.gmra.mrb[0].mxu0 %v2889
          %v2995 = vpop.f32.mrb[0].mxu0
          %v2996 = vadd.f32 %v2911, %v2995
          %v2997 = vpop.f32.mrb[0].mxu0
          %v2998 = vpop.f32.mrb[0].mxu0
          %v2999 = vpop.f32.mrb[0].mxu0
          %3000 = vdwg.mxu0
          %3001 = vst [vmem:[%s20] sm:$0x3] %v2996
        $region152: #{bert_classifier_forward.1} parent=99 // pred_fallthru
          _
        // Predicated region
        $region153: #{bert_classifier_forward.1} parent=99 // pred_check
          %p3002 = pneg %p527
        $region154: #{bert_classifier_forward.1} parent=99 // pred_check_branch
          %3004 = sbr.rel (%p3002) target = $region156
        $region155: #{bert_classifier_forward.1} parent=99 // pred_region
          _
        $region156: #{bert_classifier_forward.1} parent=99 // pred_fallthru
          _
        // Predicated region
        $region157: #{bert_classifier_forward.1} parent=99 // pred_check
          %p3005 = pneg %p527
        $region158: #{bert_classifier_forward.1} parent=99 // pred_check_branch
          %3007 = sbr.rel (%p3005) target = $region160
        $region159: #{bert_classifier_forward.1} parent=99 // pred_region
          _
        $region160: #{bert_classifier_forward.1} parent=99 // pred_fallthru
          _
      $region100: #{bert_classifier_forward.1} parent=5 // pred_fallthru
        _
      %p3008 = scmp.le.s32.totalorder 2, %s29
      // Predicated region
      $region161: #{bert_classifier_forward.1} parent=5 // pred_check
        %p3009 = pneg %p3008
      $region162: #{bert_classifier_forward.1} parent=5 // pred_check_branch
        %3011 = sbr.rel (%p3009) target = $region164
      $region163: #{bert_classifier_forward.1} parent=5 // pred_region
        %s3012 = ssub.s32 %s29, 2
      $region164: #{bert_classifier_forward.1} parent=5 // pred_fallthru
        _
    $region6: #{bert_classifier_forward.1} parent=1 // loop_footer
      %s33 = sadd.s32 1, %s29
    $region7: #{bert_classifier_forward.1} parent=1 // loop_footer_branch
      %28 = sbr.rel target = $region3
    $region8: #{bert_classifier_forward.1} parent=1 // loop_exit
      _
    %3013 = vsyncpa [#allocation4], 1
    %s3014 = scalar_lea.sflag [#allocation4], 1
    %3015 = vsyncpa %s3014, 1
    %3016 = vsyncpa [#allocation6], 1
    %3017 = vsyncpa [#allocation16], 1

</llo_original>
